<compile_context>
chip_gen: v7x
topology: tpu7x:2x2x1
jax: 0.10.0
libtpu: 0.0.40
codegen_flags: <defaults>
</compile_context>

<pallas_src>
import functools
import math

import jax
import jax.numpy as jnp
from jax import lax
from jax.experimental import pallas as pl
from jax.experimental.pallas import tpu as pltpu

# ----------------------------- configuration --------------------------------
D_MODEL = 128            # layer.size (reduced from 512, structure preserved)
N_HEADS = 4
D_K = D_MODEL // N_HEADS
D_FF = 256
N_LAYERS = 2             # AttentionSubmodel(layer, N)
LN_EPS = 1e-6

BATCH = 2
T_Q = 8                  # decoder-side sequence length
T_KV = 16                # memory (encoder) sequence length

_WEIGHT_ORDER = (
    "ln_a", "ln_b",
    "w_qkv_self", "b_qkv_self", "w_o_self", "b_o_self",
    "w_q_src", "b_q_src", "w_kv_src", "b_kv_src", "w_o_src", "b_o_src",
    "w_ff1", "b_ff1", "w_ff2", "b_ff2",
    "fn_a", "fn_b",
)


# ------------------------------ in-kernel math --------------------------------
def _layer_norm(x, a, b, eps=LN_EPS):
    # Matches the custom PyTorch LayerNorm: torch.std is unbiased (divide by
    # D-1) and eps is added to the std (NOT the variance).  Do not "fix".
    d = x.shape[-1]
    mean = jnp.mean(x, axis=-1, keepdims=True)
    var = jnp.sum((x - mean) ** 2, axis=-1, keepdims=True) / (d - 1)
    std = jnp.sqrt(var)
    return a * (x - mean) / (std + eps) + b


def _mm(x, w, b):
    # x: f32 (M, K) activation; w: bf16 (K, N) pre-transposed weight;
    # b: f32 (1, N).  bf16 MXU matmul with f32 accumulation.
    y = jnp.dot(x.astype(jnp.bfloat16), w, preferred_element_type=jnp.float32)
    return y + b


def _attend(q, k, v):
    # Multi-head scaled-dot-product attention, heads packed along the lane
    # axis.  q: (Tq, D), k/v: (Tk, D) f32 -> (Tq, D) f32.
    scale = 1.0 / math.sqrt(D_K)
    qb = q.astype(jnp.bfloat16)
    kb = k.astype(jnp.bfloat16)
    vb = v.astype(jnp.bfloat16)
    outs = []
    for h in range(N_HEADS):
        sl = slice(h * D_K, (h + 1) * D_K)
        qh, kh, vh = qb[:, sl], kb[:, sl], vb[:, sl]
        scores = lax.dot_general(qh, kh, (((1,), (1,)), ((), ())),
                                 preferred_element_type=jnp.float32) * scale
        m = jnp.max(scores, axis=-1, keepdims=True)
        p = jnp.exp(scores - m)
        denom = jnp.sum(p, axis=-1, keepdims=True)
        p = p * pl.reciprocal(denom, approx=True)
        outs.append(jnp.dot(p.astype(jnp.bfloat16), vh,
                            preferred_element_type=jnp.float32))
    return jnp.concatenate(outs, axis=-1)


# ------------------------------ fused kernel ----------------------------------
def _submodel_kernel(x_ref, mem_ref,
                     ln_a_ref, ln_b_ref,
                     w_qkv_s_ref, b_qkv_s_ref, w_o_s_ref, b_o_s_ref,
                     w_q_x_ref, b_q_x_ref, w_kv_x_ref, b_kv_x_ref,
                     w_o_x_ref, b_o_x_ref,
                     w_ff1_ref, b_ff1_ref, w_ff2_ref, b_ff2_ref,
                     fn_a_ref, fn_b_ref,
                     o_ref):
    x = x_ref[...].astype(jnp.float32)       # (Tq, D)
    mem = mem_ref[...].astype(jnp.float32)   # (Tk, D)

    for l in range(N_LAYERS):
        # --- sublayer 0: self-attention (pre-norm residual) ------------------
        xn = _layer_norm(x, ln_a_ref[l, 0], ln_b_ref[l, 0])
        qkv = _mm(xn, w_qkv_s_ref[l], b_qkv_s_ref[l])            # (Tq, 3D)
        attn = _attend(qkv[:, :D_MODEL],
                       qkv[:, D_MODEL:2 * D_MODEL],
                       qkv[:, 2 * D_MODEL:])
        x = x + _mm(attn, w_o_s_ref[l], b_o_s_ref[l])

        # --- sublayer 1: source attention over memory ------------------------
        xn = _layer_norm(x, ln_a_ref[l, 1], ln_b_ref[l, 1])
        q = _mm(xn, w_q_x_ref[l], b_q_x_ref[l])                  # (Tq, D)
        kv = _mm(mem, w_kv_x_ref[l], b_kv_x_ref[l])              # (Tk, 2D)
        attn = _attend(q, kv[:, :D_MODEL], kv[:, D_MODEL:])
        x = x + _mm(attn, w_o_x_ref[l], b_o_x_ref[l])

        # --- sublayer 2: position-wise feed-forward ---------------------------
        xn = _layer_norm(x, ln_a_ref[l, 2], ln_b_ref[l, 2])
        h = jnp.maximum(_mm(xn, w_ff1_ref[l], b_ff1_ref[l]), 0.0)
        x = x + _mm(h, w_ff2_ref[l], b_ff2_ref[l])

    # --- final LayerNorm of AttentionSubmodel ---------------------------------
    o_ref[...] = _layer_norm(x, fn_a_ref[...], fn_b_ref[...]).astype(o_ref.dtype)


def attention_submodel_forward(params, x, memory):
    """AttentionSubmodel.forward(x, memory): N decoder layers + LayerNorm."""
    B, Tq, D = x.shape
    Tk = memory.shape[1]
    weight_args = [params[k] for k in _WEIGHT_ORDER]

    def full_spec(a):
        # Whole array resident in VMEM, same block every grid step.
        return pl.BlockSpec(a.shape, lambda b, _nd=a.ndim: (0,) * _nd)

    in_specs = (
        [pl.BlockSpec((None, Tq, D), lambda b: (b, 0, 0)),
         pl.BlockSpec((None, Tk, D), lambda b: (b, 0, 0))]
        + [full_spec(a) for a in weight_args]
    )

    return pl.pallas_call(
        _submodel_kernel,
        out_shape=jax.ShapeDtypeStruct((B, Tq, D), jnp.float32),
        grid=(B,),
        in_specs=in_specs,
        out_specs=pl.BlockSpec((None, Tq, D), lambda b: (b, 0, 0)),
        compiler_params=pltpu.CompilerParams(
            dimension_semantics=("parallel",)),
    )(x, memory, *weight_args)


# --------------------------- pure-JAX reference -------------------------------
def _reference_single(p, x, mem):
    def ln(v, a, b):
        d = v.shape[-1]
        mean = jnp.mean(v, -1, keepdims=True)
        var = jnp.sum((v - mean) ** 2, -1, keepdims=True) / (d - 1)
        return a * (v - mean) / (jnp.sqrt(var) + LN_EPS) + b

    def mm(v, w, b):
        return jnp.dot(v.astype(jnp.bfloat16), w,
                       preferred_element_type=jnp.float32) + b

    def attend(q, k, v):
        scale = 1.0 / math.sqrt(D_K)
        qb, kb, vb = (t.astype(jnp.bfloat16) for t in (q, k, v))
        outs = []
        for h in range(N_HEADS):
            sl = slice(h * D_K, (h + 1) * D_K)
            sc = jnp.dot(qb[:, sl], kb[:, sl].T,
                         preferred_element_type=jnp.float32) * scale
            prob = jax.nn.softmax(sc, axis=-1)
            outs.append(jnp.dot(prob.astype(jnp.bfloat16), vb[:, sl],
                                preferred_element_type=jnp.float32))
        return jnp.concatenate(outs, axis=-1)

    for l in range(N_LAYERS):
        xn = ln(x, p["ln_a"][l, 0], p["ln_b"][l, 0])
        qkv = mm(xn, p["w_qkv_self"][l], p["b_qkv_self"][l])
        a_ = attend(qkv[:, :D_MODEL], qkv[:, D_MODEL:2 * D_MODEL],
                    qkv[:, 2 * D_MODEL:])
        x = x + mm(a_, p["w_o_self"][l], p["b_o_self"][l])

        xn = ln(x, p["ln_a"][l, 1], p["ln_b"][l, 1])
        q = mm(xn, p["w_q_src"][l], p["b_q_src"][l])
        kv = mm(mem, p["w_kv_src"][l], p["b_kv_src"][l])
        a_ = attend(q, kv[:, :D_MODEL], kv[:, D_MODEL:])
        x = x + mm(a_, p["w_o_src"][l], p["b_o_src"][l])

        xn = ln(x, p["ln_a"][l, 2], p["ln_b"][l, 2])
        h = jnp.maximum(mm(xn, p["w_ff1"][l], p["b_ff1"][l]), 0.0)
        x = x + mm(h, p["w_ff2"][l], p["b_ff2"][l])

    return ln(x, p["fn_a"], p["fn_b"])


def reference_forward(p, x, mem):
    return jax.vmap(lambda xi, mi: _reference_single(p, xi, mi))(x, mem)


# ------------------------------ parameter init --------------------------------
def init_params(key):
    keys = iter(jax.random.split(key, 64))

    def unif(shape, fan_in, dtype=jnp.float32):
        bound = 1.0 / math.sqrt(fan_in)
        w = jax.random.uniform(next(keys), shape, jnp.float32, -bound, bound)
        return w.astype(dtype)

    D, F, N = D_MODEL, D_FF, N_LAYERS
    return {
        # LayerNorm a_2 / b_2 per sub-layer (3 per decoder layer).
        "ln_a": jnp.ones((N, 3, 1, D), jnp.float32),
        "ln_b": jnp.zeros((N, 3, 1, D), jnp.float32),
        # Weights are pre-transposed to (in, out) and stored in bf16.
        "w_qkv_self": unif((N, D, 3 * D), D, jnp.bfloat16),
        "b_qkv_self": unif((N, 1, 3 * D), D),
        "w_o_self":   unif((N, D, D), D, jnp.bfloat16),
        "b_o_self":   unif((N, 1, D), D),
        "w_q_src":    unif((N, D, D), D, jnp.bfloat16),
        "b_q_src":    unif((N, 1, D), D),
        "w_kv_src":   unif((N, D, 2 * D), D, jnp.bfloat16),
        "b_kv_src":   unif((N, 1, 2 * D), D),
        "w_o_src":    unif((N, D, D), D, jnp.bfloat16),
        "b_o_src":    unif((N, 1, D), D),
        "w_ff1":      unif((N, D, F), D, jnp.bfloat16),
        "b_ff1":      unif((N, 1, F), D),
        "w_ff2":      unif((N, F, D), F, jnp.bfloat16),
        "b_ff2":      unif((N, 1, D), F),
        # Final AttentionSubmodel LayerNorm.
        "fn_a": jnp.ones((1, D), jnp.float32),
        "fn_b": jnp.zeros((1, D), jnp.float32),
    }


# ------------------------------------ main ------------------------------------
if __name__ == "__main__":
    key = jax.random.PRNGKey(0)
    pkey, xkey, mkey = jax.random.split(key, 3)
    params = init_params(pkey)

    x = jax.random.normal(xkey, (BATCH, T_Q, D_MODEL), jnp.float32)
    memory = jax.random.normal(mkey, (BATCH, T_KV, D_MODEL), jnp.float32)

    fwd = jax.jit(attention_submodel_forward)
    out = jax.block_until_ready(fwd(params, x, memory))

    assert out.shape == (BATCH, T_Q, D_MODEL)
    assert bool(jnp.all(jnp.isfinite(out)))

    # Sanity check against a pure-JAX reference (same bf16 matmul precision;
    # only difference is the approximate softmax reciprocal in the kernel).
    ref = jax.block_until_ready(reference_forward(params, x, memory))
    err = float(jnp.max(jnp.abs(out - ref)))
    assert err < 5e-2, f"mismatch vs reference: {err}"

    print("KERNEL_OK")
</pallas_src>

<mosaic_0001>
module attributes {stable_mosaic.version = 11 : i64} {
  func.func @_submodel_kernel(%arg0: i32, %arg1: memref<1x8x128xf32, #tpu.memory_space<vmem>>, %arg2: memref<1x16x128xf32, #tpu.memory_space<vmem>>, %arg3: memref<2x3x1x128xf32, #tpu.memory_space<vmem>>, %arg4: memref<2x3x1x128xf32, #tpu.memory_space<vmem>>, %arg5: memref<2x128x384xbf16, #tpu.memory_space<vmem>>, %arg6: memref<2x1x384xf32, #tpu.memory_space<vmem>>, %arg7: memref<2x128x128xbf16, #tpu.memory_space<vmem>>, %arg8: memref<2x1x128xf32, #tpu.memory_space<vmem>>, %arg9: memref<2x128x128xbf16, #tpu.memory_space<vmem>>, %arg10: memref<2x1x128xf32, #tpu.memory_space<vmem>>, %arg11: memref<2x128x256xbf16, #tpu.memory_space<vmem>>, %arg12: memref<2x1x256xf32, #tpu.memory_space<vmem>>, %arg13: memref<2x128x128xbf16, #tpu.memory_space<vmem>>, %arg14: memref<2x1x128xf32, #tpu.memory_space<vmem>>, %arg15: memref<2x128x256xbf16, #tpu.memory_space<vmem>>, %arg16: memref<2x1x256xf32, #tpu.memory_space<vmem>>, %arg17: memref<2x256x128xbf16, #tpu.memory_space<vmem>>, %arg18: memref<2x1x128xf32, #tpu.memory_space<vmem>>, %arg19: memref<1x128xf32, #tpu.memory_space<vmem>>, %arg20: memref<1x128xf32, #tpu.memory_space<vmem>>, %arg21: memref<1x8x128xf32, #tpu.memory_space<vmem>>) attributes {dimension_semantics = [#tpu.dimension_semantics<parallel>], iteration_bounds = array<i64: 2>, scalar_prefetch = 0 : i64, scratch_operands = 0 : i64, tpu.core_type = #tpu.core_type<tc>, window_params = [{transform_indices = @transform_0, window_bounds = array<i64: 1, 8, 128>}, {transform_indices = @transform_1, window_bounds = array<i64: 1, 16, 128>}, {pipeline_mode = #tpu.pipeline_mode<synchronous>, transform_indices = @transform_2, window_bounds = array<i64: 2, 3, 1, 128>}, {pipeline_mode = #tpu.pipeline_mode<synchronous>, transform_indices = @transform_3, window_bounds = array<i64: 2, 3, 1, 128>}, {pipeline_mode = #tpu.pipeline_mode<synchronous>, transform_indices = @transform_4, window_bounds = array<i64: 2, 128, 384>}, {pipeline_mode = #tpu.pipeline_mode<synchronous>, transform_indices = @transform_5, window_bounds = array<i64: 2, 1, 384>}, {pipeline_mode = #tpu.pipeline_mode<synchronous>, transform_indices = @transform_6, window_bounds = array<i64: 2, 128, 128>}, {pipeline_mode = #tpu.pipeline_mode<synchronous>, transform_indices = @transform_7, window_bounds = array<i64: 2, 1, 128>}, {pipeline_mode = #tpu.pipeline_mode<synchronous>, transform_indices = @transform_8, window_bounds = array<i64: 2, 128, 128>}, {pipeline_mode = #tpu.pipeline_mode<synchronous>, transform_indices = @transform_9, window_bounds = array<i64: 2, 1, 128>}, {pipeline_mode = #tpu.pipeline_mode<synchronous>, transform_indices = @transform_10, window_bounds = array<i64: 2, 128, 256>}, {pipeline_mode = #tpu.pipeline_mode<synchronous>, transform_indices = @transform_11, window_bounds = array<i64: 2, 1, 256>}, {pipeline_mode = #tpu.pipeline_mode<synchronous>, transform_indices = @transform_12, window_bounds = array<i64: 2, 128, 128>}, {pipeline_mode = #tpu.pipeline_mode<synchronous>, transform_indices = @transform_13, window_bounds = array<i64: 2, 1, 128>}, {pipeline_mode = #tpu.pipeline_mode<synchronous>, transform_indices = @transform_14, window_bounds = array<i64: 2, 128, 256>}, {pipeline_mode = #tpu.pipeline_mode<synchronous>, transform_indices = @transform_15, window_bounds = array<i64: 2, 1, 256>}, {pipeline_mode = #tpu.pipeline_mode<synchronous>, transform_indices = @transform_16, window_bounds = array<i64: 2, 256, 128>}, {pipeline_mode = #tpu.pipeline_mode<synchronous>, transform_indices = @transform_17, window_bounds = array<i64: 2, 1, 128>}, {pipeline_mode = #tpu.pipeline_mode<synchronous>, transform_indices = @transform_18, window_bounds = array<i64: 1, 128>}, {pipeline_mode = #tpu.pipeline_mode<synchronous>, transform_indices = @transform_19, window_bounds = array<i64: 1, 128>}, {transform_indices = @transform_20, window_bounds = array<i64: 1, 8, 128>}]} {
    %c0 = arith.constant 0 : index
    %c0_0 = arith.constant 0 : index
    %c0_1 = arith.constant 0 : index
    %0 = vector.load %arg1[%c0, %c0_0, %c0_1] : memref<1x8x128xf32, #tpu.memory_space<vmem>>, vector<1x8x128xf32>
    %1 = vector.shape_cast %0 : vector<1x8x128xf32> to vector<8x128xf32>
    %c0_2 = arith.constant 0 : index
    %c0_3 = arith.constant 0 : index
    %c0_4 = arith.constant 0 : index
    %2 = vector.load %arg2[%c0_2, %c0_3, %c0_4] : memref<1x16x128xf32, #tpu.memory_space<vmem>>, vector<1x16x128xf32>
    %3 = vector.shape_cast %2 : vector<1x16x128xf32> to vector<16x128xf32>
    %c0_5 = arith.constant 0 : index
    %c0_6 = arith.constant 0 : index
    %c0_7 = arith.constant 0 : index
    %c0_8 = arith.constant 0 : index
    %4 = vector.load %arg3[%c0_5, %c0_6, %c0_7, %c0_8] : memref<2x3x1x128xf32, #tpu.memory_space<vmem>>, vector<1x1x1x128xf32>
    %5 = vector.shape_cast %4 : vector<1x1x1x128xf32> to vector<1x128xf32>
    %c0_9 = arith.constant 0 : index
    %c0_10 = arith.constant 0 : index
    %c0_11 = arith.constant 0 : index
    %c0_12 = arith.constant 0 : index
    %6 = vector.load %arg4[%c0_9, %c0_10, %c0_11, %c0_12] : memref<2x3x1x128xf32, #tpu.memory_space<vmem>>, vector<1x1x1x128xf32>
    %7 = vector.shape_cast %6 : vector<1x1x1x128xf32> to vector<1x128xf32>
    %cst = arith.constant dense<0.000000e+00> : vector<8xf32>
    %8 = vector.multi_reduction <add>, %1, %cst [1] : vector<8x128xf32> to vector<8xf32>
    %9 = vector.shape_cast %8 : vector<8xf32> to vector<8x1xf32>
    %cst_13 = arith.constant 1.280000e+02 : f32
    %10 = vector.broadcast %cst_13 : f32 to vector<8x1xf32>
    %11 = arith.divf %9, %10 : vector<8x1xf32>
    %12 = vector.broadcast %11 : vector<8x1xf32> to vector<8x128xf32>
    %13 = arith.subf %1, %12 : vector<8x128xf32>
    %14 = arith.mulf %13, %13 : vector<8x128xf32>
    %cst_14 = arith.constant dense<0.000000e+00> : vector<8xf32>
    %15 = vector.multi_reduction <add>, %14, %cst_14 [1] : vector<8x128xf32> to vector<8xf32>
    %16 = vector.shape_cast %15 : vector<8xf32> to vector<8x1xf32>
    %cst_15 = arith.constant 1.270000e+02 : f32
    %17 = vector.broadcast %cst_15 : f32 to vector<8x1xf32>
    %18 = arith.divf %16, %17 : vector<8x1xf32>
    %19 = math.sqrt %18 : vector<8x1xf32>
    %20 = vector.broadcast %11 : vector<8x1xf32> to vector<8x128xf32>
    %21 = arith.subf %1, %20 : vector<8x128xf32>
    %22 = vector.broadcast %5 : vector<1x128xf32> to vector<8x128xf32>
    %23 = arith.mulf %22, %21 : vector<8x128xf32>
    %cst_16 = arith.constant 9.99999997E-7 : f32
    %24 = vector.broadcast %cst_16 : f32 to vector<8x1xf32>
    %25 = arith.addf %19, %24 : vector<8x1xf32>
    %26 = vector.broadcast %25 : vector<8x1xf32> to vector<8x128xf32>
    %27 = arith.divf %23, %26 : vector<8x128xf32>
    %28 = vector.broadcast %7 : vector<1x128xf32> to vector<8x128xf32>
    %29 = arith.addf %27, %28 : vector<8x128xf32>
    %c0_17 = arith.constant 0 : index
    %c0_18 = arith.constant 0 : index
    %c0_19 = arith.constant 0 : index
    %30 = vector.load %arg5[%c0_17, %c0_18, %c0_19] : memref<2x128x384xbf16, #tpu.memory_space<vmem>>, vector<1x128x384xbf16>
    %31 = vector.shape_cast %30 : vector<1x128x384xbf16> to vector<128x384xbf16>
    %c0_20 = arith.constant 0 : index
    %c0_21 = arith.constant 0 : index
    %c0_22 = arith.constant 0 : index
    %32 = vector.load %arg6[%c0_20, %c0_21, %c0_22] : memref<2x1x384xf32, #tpu.memory_space<vmem>>, vector<1x1x384xf32>
    %33 = vector.shape_cast %32 : vector<1x1x384xf32> to vector<1x384xf32>
    %34 = arith.truncf %29 : vector<8x128xf32> to vector<8x128xbf16>
    %cst_23 = arith.constant dense<0.000000e+00> : vector<8x384xf32>
    %35 = tpu.matmul %34, %31, %cst_23 {dimension_numbers = #tpu.dot_dimension_numbers<[1], [0], [0], [1], [0, 0, 1, 1], [], []>} : vector<8x128xbf16>, vector<128x384xbf16>, vector<8x384xf32> -> vector<8x384xf32>
    %36 = vector.broadcast %33 : vector<1x384xf32> to vector<8x384xf32>
    %37 = arith.addf %35, %36 : vector<8x384xf32>
    %38 = vector.extract_strided_slice %37 {offsets = [0, 0], sizes = [8, 128], strides = [1, 1]} : vector<8x384xf32> to vector<8x128xf32>
    %39 = vector.extract_strided_slice %37 {offsets = [0, 128], sizes = [8, 128], strides = [1, 1]} : vector<8x384xf32> to vector<8x128xf32>
    %40 = vector.extract_strided_slice %37 {offsets = [0, 256], sizes = [8, 128], strides = [1, 1]} : vector<8x384xf32> to vector<8x128xf32>
    %41 = arith.truncf %38 : vector<8x128xf32> to vector<8x128xbf16>
    %42 = arith.truncf %39 : vector<8x128xf32> to vector<8x128xbf16>
    %43 = arith.truncf %40 : vector<8x128xf32> to vector<8x128xbf16>
    %44 = vector.extract_strided_slice %41 {offsets = [0, 0], sizes = [8, 32], strides = [1, 1]} : vector<8x128xbf16> to vector<8x32xbf16>
    %45 = vector.extract_strided_slice %42 {offsets = [0, 0], sizes = [8, 32], strides = [1, 1]} : vector<8x128xbf16> to vector<8x32xbf16>
    %46 = vector.extract_strided_slice %43 {offsets = [0, 0], sizes = [8, 32], strides = [1, 1]} : vector<8x128xbf16> to vector<8x32xbf16>
    %cst_24 = arith.constant dense<0.000000e+00> : vector<8x8xf32>
    %47 = tpu.matmul %44, %45, %cst_24 {dimension_numbers = #tpu.dot_dimension_numbers<[1], [1], [0], [0], [0, 0, 1, 0], [], []>} : vector<8x32xbf16>, vector<8x32xbf16>, vector<8x8xf32> -> vector<8x8xf32>
    %cst_25 = arith.constant 0.176776692 : f32
    %48 = vector.broadcast %cst_25 : f32 to vector<8x8xf32>
    %49 = arith.mulf %47, %48 : vector<8x8xf32>
    %cst_26 = arith.constant dense<0xFF800000> : vector<8xf32>
    %50 = vector.multi_reduction <maximumf>, %49, %cst_26 [1] : vector<8x8xf32> to vector<8xf32>
    %51 = vector.shape_cast %50 : vector<8xf32> to vector<8x1xf32>
    %52 = vector.broadcast %51 : vector<8x1xf32> to vector<8x8xf32>
    %53 = arith.subf %49, %52 : vector<8x8xf32>
    %54 = math.exp %53 : vector<8x8xf32>
    %cst_27 = arith.constant dense<0.000000e+00> : vector<8xf32>
    %55 = vector.multi_reduction <add>, %54, %cst_27 [1] : vector<8x8xf32> to vector<8xf32>
    %56 = vector.shape_cast %55 : vector<8xf32> to vector<8x1xf32>
    %57 = tpu.reciprocal %56 {approx = true} : vector<8x1xf32> -> vector<8x1xf32>
    %58 = vector.broadcast %57 : vector<8x1xf32> to vector<8x8xf32>
    %59 = arith.mulf %54, %58 : vector<8x8xf32>
    %60 = arith.truncf %59 : vector<8x8xf32> to vector<8x8xbf16>
    %cst_28 = arith.constant dense<0.000000e+00> : vector<8x32xf32>
    %61 = tpu.matmul %60, %46, %cst_28 {dimension_numbers = #tpu.dot_dimension_numbers<[1], [0], [0], [1], [0, 0, 1, 1], [], []>} : vector<8x8xbf16>, vector<8x32xbf16>, vector<8x32xf32> -> vector<8x32xf32>
    %62 = vector.extract_strided_slice %41 {offsets = [0, 32], sizes = [8, 32], strides = [1, 1]} : vector<8x128xbf16> to vector<8x32xbf16>
    %63 = vector.extract_strided_slice %42 {offsets = [0, 32], sizes = [8, 32], strides = [1, 1]} : vector<8x128xbf16> to vector<8x32xbf16>
    %64 = vector.extract_strided_slice %43 {offsets = [0, 32], sizes = [8, 32], strides = [1, 1]} : vector<8x128xbf16> to vector<8x32xbf16>
    %cst_29 = arith.constant dense<0.000000e+00> : vector<8x8xf32>
    %65 = tpu.matmul %62, %63, %cst_29 {dimension_numbers = #tpu.dot_dimension_numbers<[1], [1], [0], [0], [0, 0, 1, 0], [], []>} : vector<8x32xbf16>, vector<8x32xbf16>, vector<8x8xf32> -> vector<8x8xf32>
    %cst_30 = arith.constant 0.176776692 : f32
    %66 = vector.broadcast %cst_30 : f32 to vector<8x8xf32>
    %67 = arith.mulf %65, %66 : vector<8x8xf32>
    %cst_31 = arith.constant dense<0xFF800000> : vector<8xf32>
    %68 = vector.multi_reduction <maximumf>, %67, %cst_31 [1] : vector<8x8xf32> to vector<8xf32>
    %69 = vector.shape_cast %68 : vector<8xf32> to vector<8x1xf32>
    %70 = vector.broadcast %69 : vector<8x1xf32> to vector<8x8xf32>
    %71 = arith.subf %67, %70 : vector<8x8xf32>
    %72 = math.exp %71 : vector<8x8xf32>
    %cst_32 = arith.constant dense<0.000000e+00> : vector<8xf32>
    %73 = vector.multi_reduction <add>, %72, %cst_32 [1] : vector<8x8xf32> to vector<8xf32>
    %74 = vector.shape_cast %73 : vector<8xf32> to vector<8x1xf32>
    %75 = tpu.reciprocal %74 {approx = true} : vector<8x1xf32> -> vector<8x1xf32>
    %76 = vector.broadcast %75 : vector<8x1xf32> to vector<8x8xf32>
    %77 = arith.mulf %72, %76 : vector<8x8xf32>
    %78 = arith.truncf %77 : vector<8x8xf32> to vector<8x8xbf16>
    %cst_33 = arith.constant dense<0.000000e+00> : vector<8x32xf32>
    %79 = tpu.matmul %78, %64, %cst_33 {dimension_numbers = #tpu.dot_dimension_numbers<[1], [0], [0], [1], [0, 0, 1, 1], [], []>} : vector<8x8xbf16>, vector<8x32xbf16>, vector<8x32xf32> -> vector<8x32xf32>
    %80 = vector.extract_strided_slice %41 {offsets = [0, 64], sizes = [8, 32], strides = [1, 1]} : vector<8x128xbf16> to vector<8x32xbf16>
    %81 = vector.extract_strided_slice %42 {offsets = [0, 64], sizes = [8, 32], strides = [1, 1]} : vector<8x128xbf16> to vector<8x32xbf16>
    %82 = vector.extract_strided_slice %43 {offsets = [0, 64], sizes = [8, 32], strides = [1, 1]} : vector<8x128xbf16> to vector<8x32xbf16>
    %cst_34 = arith.constant dense<0.000000e+00> : vector<8x8xf32>
    %83 = tpu.matmul %80, %81, %cst_34 {dimension_numbers = #tpu.dot_dimension_numbers<[1], [1], [0], [0], [0, 0, 1, 0], [], []>} : vector<8x32xbf16>, vector<8x32xbf16>, vector<8x8xf32> -> vector<8x8xf32>
    %cst_35 = arith.constant 0.176776692 : f32
    %84 = vector.broadcast %cst_35 : f32 to vector<8x8xf32>
    %85 = arith.mulf %83, %84 : vector<8x8xf32>
    %cst_36 = arith.constant dense<0xFF800000> : vector<8xf32>
    %86 = vector.multi_reduction <maximumf>, %85, %cst_36 [1] : vector<8x8xf32> to vector<8xf32>
    %87 = vector.shape_cast %86 : vector<8xf32> to vector<8x1xf32>
    %88 = vector.broadcast %87 : vector<8x1xf32> to vector<8x8xf32>
    %89 = arith.subf %85, %88 : vector<8x8xf32>
    %90 = math.exp %89 : vector<8x8xf32>
    %cst_37 = arith.constant dense<0.000000e+00> : vector<8xf32>
    %91 = vector.multi_reduction <add>, %90, %cst_37 [1] : vector<8x8xf32> to vector<8xf32>
    %92 = vector.shape_cast %91 : vector<8xf32> to vector<8x1xf32>
    %93 = tpu.reciprocal %92 {approx = true} : vector<8x1xf32> -> vector<8x1xf32>
    %94 = vector.broadcast %93 : vector<8x1xf32> to vector<8x8xf32>
    %95 = arith.mulf %90, %94 : vector<8x8xf32>
    %96 = arith.truncf %95 : vector<8x8xf32> to vector<8x8xbf16>
    %cst_38 = arith.constant dense<0.000000e+00> : vector<8x32xf32>
    %97 = tpu.matmul %96, %82, %cst_38 {dimension_numbers = #tpu.dot_dimension_numbers<[1], [0], [0], [1], [0, 0, 1, 1], [], []>} : vector<8x8xbf16>, vector<8x32xbf16>, vector<8x32xf32> -> vector<8x32xf32>
    %98 = vector.extract_strided_slice %41 {offsets = [0, 96], sizes = [8, 32], strides = [1, 1]} : vector<8x128xbf16> to vector<8x32xbf16>
    %99 = vector.extract_strided_slice %42 {offsets = [0, 96], sizes = [8, 32], strides = [1, 1]} : vector<8x128xbf16> to vector<8x32xbf16>
    %100 = vector.extract_strided_slice %43 {offsets = [0, 96], sizes = [8, 32], strides = [1, 1]} : vector<8x128xbf16> to vector<8x32xbf16>
    %cst_39 = arith.constant dense<0.000000e+00> : vector<8x8xf32>
    %101 = tpu.matmul %98, %99, %cst_39 {dimension_numbers = #tpu.dot_dimension_numbers<[1], [1], [0], [0], [0, 0, 1, 0], [], []>} : vector<8x32xbf16>, vector<8x32xbf16>, vector<8x8xf32> -> vector<8x8xf32>
    %cst_40 = arith.constant 0.176776692 : f32
    %102 = vector.broadcast %cst_40 : f32 to vector<8x8xf32>
    %103 = arith.mulf %101, %102 : vector<8x8xf32>
    %cst_41 = arith.constant dense<0xFF800000> : vector<8xf32>
    %104 = vector.multi_reduction <maximumf>, %103, %cst_41 [1] : vector<8x8xf32> to vector<8xf32>
    %105 = vector.shape_cast %104 : vector<8xf32> to vector<8x1xf32>
    %106 = vector.broadcast %105 : vector<8x1xf32> to vector<8x8xf32>
    %107 = arith.subf %103, %106 : vector<8x8xf32>
    %108 = math.exp %107 : vector<8x8xf32>
    %cst_42 = arith.constant dense<0.000000e+00> : vector<8xf32>
    %109 = vector.multi_reduction <add>, %108, %cst_42 [1] : vector<8x8xf32> to vector<8xf32>
    %110 = vector.shape_cast %109 : vector<8xf32> to vector<8x1xf32>
    %111 = tpu.reciprocal %110 {approx = true} : vector<8x1xf32> -> vector<8x1xf32>
    %112 = vector.broadcast %111 : vector<8x1xf32> to vector<8x8xf32>
    %113 = arith.mulf %108, %112 : vector<8x8xf32>
    %114 = arith.truncf %113 : vector<8x8xf32> to vector<8x8xbf16>
    %cst_43 = arith.constant dense<0.000000e+00> : vector<8x32xf32>
    %115 = tpu.matmul %114, %100, %cst_43 {dimension_numbers = #tpu.dot_dimension_numbers<[1], [0], [0], [1], [0, 0, 1, 1], [], []>} : vector<8x8xbf16>, vector<8x32xbf16>, vector<8x32xf32> -> vector<8x32xf32>
    %116 = tpu.concatenate %61, %79, %97, %115 in 1 : vector<8x32xf32>, vector<8x32xf32>, vector<8x32xf32>, vector<8x32xf32> -> vector<8x128xf32>
    %c0_44 = arith.constant 0 : index
    %c0_45 = arith.constant 0 : index
    %c0_46 = arith.constant 0 : index
    %117 = vector.load %arg7[%c0_44, %c0_45, %c0_46] : memref<2x128x128xbf16, #tpu.memory_space<vmem>>, vector<1x128x128xbf16>
    %118 = vector.shape_cast %117 : vector<1x128x128xbf16> to vector<128x128xbf16>
    %c0_47 = arith.constant 0 : index
    %c0_48 = arith.constant 0 : index
    %c0_49 = arith.constant 0 : index
    %119 = vector.load %arg8[%c0_47, %c0_48, %c0_49] : memref<2x1x128xf32, #tpu.memory_space<vmem>>, vector<1x1x128xf32>
    %120 = vector.shape_cast %119 : vector<1x1x128xf32> to vector<1x128xf32>
    %121 = arith.truncf %116 : vector<8x128xf32> to vector<8x128xbf16>
    %cst_50 = arith.constant dense<0.000000e+00> : vector<8x128xf32>
    %122 = tpu.matmul %121, %118, %cst_50 {dimension_numbers = #tpu.dot_dimension_numbers<[1], [0], [0], [1], [0, 0, 1, 1], [], []>} : vector<8x128xbf16>, vector<128x128xbf16>, vector<8x128xf32> -> vector<8x128xf32>
    %123 = vector.broadcast %120 : vector<1x128xf32> to vector<8x128xf32>
    %124 = arith.addf %122, %123 : vector<8x128xf32>
    %125 = arith.addf %1, %124 : vector<8x128xf32>
    %c0_51 = arith.constant 0 : index
    %c1 = arith.constant 1 : index
    %c0_52 = arith.constant 0 : index
    %c0_53 = arith.constant 0 : index
    %126 = vector.load %arg3[%c0_51, %c1, %c0_52, %c0_53] : memref<2x3x1x128xf32, #tpu.memory_space<vmem>>, vector<1x1x1x128xf32>
    %127 = vector.shape_cast %126 : vector<1x1x1x128xf32> to vector<1x128xf32>
    %c0_54 = arith.constant 0 : index
    %c1_55 = arith.constant 1 : index
    %c0_56 = arith.constant 0 : index
    %c0_57 = arith.constant 0 : index
    %128 = vector.load %arg4[%c0_54, %c1_55, %c0_56, %c0_57] : memref<2x3x1x128xf32, #tpu.memory_space<vmem>>, vector<1x1x1x128xf32>
    %129 = vector.shape_cast %128 : vector<1x1x1x128xf32> to vector<1x128xf32>
    %cst_58 = arith.constant dense<0.000000e+00> : vector<8xf32>
    %130 = vector.multi_reduction <add>, %125, %cst_58 [1] : vector<8x128xf32> to vector<8xf32>
    %131 = vector.shape_cast %130 : vector<8xf32> to vector<8x1xf32>
    %cst_59 = arith.constant 1.280000e+02 : f32
    %132 = vector.broadcast %cst_59 : f32 to vector<8x1xf32>
    %133 = arith.divf %131, %132 : vector<8x1xf32>
    %134 = vector.broadcast %133 : vector<8x1xf32> to vector<8x128xf32>
    %135 = arith.subf %125, %134 : vector<8x128xf32>
    %136 = arith.mulf %135, %135 : vector<8x128xf32>
    %cst_60 = arith.constant dense<0.000000e+00> : vector<8xf32>
    %137 = vector.multi_reduction <add>, %136, %cst_60 [1] : vector<8x128xf32> to vector<8xf32>
    %138 = vector.shape_cast %137 : vector<8xf32> to vector<8x1xf32>
    %cst_61 = arith.constant 1.270000e+02 : f32
    %139 = vector.broadcast %cst_61 : f32 to vector<8x1xf32>
    %140 = arith.divf %138, %139 : vector<8x1xf32>
    %141 = math.sqrt %140 : vector<8x1xf32>
    %142 = vector.broadcast %133 : vector<8x1xf32> to vector<8x128xf32>
    %143 = arith.subf %125, %142 : vector<8x128xf32>
    %144 = vector.broadcast %127 : vector<1x128xf32> to vector<8x128xf32>
    %145 = arith.mulf %144, %143 : vector<8x128xf32>
    %cst_62 = arith.constant 9.99999997E-7 : f32
    %146 = vector.broadcast %cst_62 : f32 to vector<8x1xf32>
    %147 = arith.addf %141, %146 : vector<8x1xf32>
    %148 = vector.broadcast %147 : vector<8x1xf32> to vector<8x128xf32>
    %149 = arith.divf %145, %148 : vector<8x128xf32>
    %150 = vector.broadcast %129 : vector<1x128xf32> to vector<8x128xf32>
    %151 = arith.addf %149, %150 : vector<8x128xf32>
    %c0_63 = arith.constant 0 : index
    %c0_64 = arith.constant 0 : index
    %c0_65 = arith.constant 0 : index
    %152 = vector.load %arg9[%c0_63, %c0_64, %c0_65] : memref<2x128x128xbf16, #tpu.memory_space<vmem>>, vector<1x128x128xbf16>
    %153 = vector.shape_cast %152 : vector<1x128x128xbf16> to vector<128x128xbf16>
    %c0_66 = arith.constant 0 : index
    %c0_67 = arith.constant 0 : index
    %c0_68 = arith.constant 0 : index
    %154 = vector.load %arg10[%c0_66, %c0_67, %c0_68] : memref<2x1x128xf32, #tpu.memory_space<vmem>>, vector<1x1x128xf32>
    %155 = vector.shape_cast %154 : vector<1x1x128xf32> to vector<1x128xf32>
    %156 = arith.truncf %151 : vector<8x128xf32> to vector<8x128xbf16>
    %cst_69 = arith.constant dense<0.000000e+00> : vector<8x128xf32>
    %157 = tpu.matmul %156, %153, %cst_69 {dimension_numbers = #tpu.dot_dimension_numbers<[1], [0], [0], [1], [0, 0, 1, 1], [], []>} : vector<8x128xbf16>, vector<128x128xbf16>, vector<8x128xf32> -> vector<8x128xf32>
    %158 = vector.broadcast %155 : vector<1x128xf32> to vector<8x128xf32>
    %159 = arith.addf %157, %158 : vector<8x128xf32>
    %c0_70 = arith.constant 0 : index
    %c0_71 = arith.constant 0 : index
    %c0_72 = arith.constant 0 : index
    %160 = vector.load %arg11[%c0_70, %c0_71, %c0_72] : memref<2x128x256xbf16, #tpu.memory_space<vmem>>, vector<1x128x256xbf16>
    %161 = vector.shape_cast %160 : vector<1x128x256xbf16> to vector<128x256xbf16>
    %c0_73 = arith.constant 0 : index
    %c0_74 = arith.constant 0 : index
    %c0_75 = arith.constant 0 : index
    %162 = vector.load %arg12[%c0_73, %c0_74, %c0_75] : memref<2x1x256xf32, #tpu.memory_space<vmem>>, vector<1x1x256xf32>
    %163 = vector.shape_cast %162 : vector<1x1x256xf32> to vector<1x256xf32>
    %164 = arith.truncf %3 : vector<16x128xf32> to vector<16x128xbf16>
    %cst_76 = arith.constant dense<0.000000e+00> : vector<16x256xf32>
    %165 = tpu.matmul %164, %161, %cst_76 {dimension_numbers = #tpu.dot_dimension_numbers<[1], [0], [0], [1], [0, 0, 1, 1], [], []>} : vector<16x128xbf16>, vector<128x256xbf16>, vector<16x256xf32> -> vector<16x256xf32>
    %166 = vector.broadcast %163 : vector<1x256xf32> to vector<16x256xf32>
    %167 = arith.addf %165, %166 : vector<16x256xf32>
    %168 = vector.extract_strided_slice %167 {offsets = [0, 0], sizes = [16, 128], strides = [1, 1]} : vector<16x256xf32> to vector<16x128xf32>
    %169 = vector.extract_strided_slice %167 {offsets = [0, 128], sizes = [16, 128], strides = [1, 1]} : vector<16x256xf32> to vector<16x128xf32>
    %170 = arith.truncf %159 : vector<8x128xf32> to vector<8x128xbf16>
    %171 = arith.truncf %168 : vector<16x128xf32> to vector<16x128xbf16>
    %172 = arith.truncf %169 : vector<16x128xf32> to vector<16x128xbf16>
    %173 = vector.extract_strided_slice %170 {offsets = [0, 0], sizes = [8, 32], strides = [1, 1]} : vector<8x128xbf16> to vector<8x32xbf16>
    %174 = vector.extract_strided_slice %171 {offsets = [0, 0], sizes = [16, 32], strides = [1, 1]} : vector<16x128xbf16> to vector<16x32xbf16>
    %175 = vector.extract_strided_slice %172 {offsets = [0, 0], sizes = [16, 32], strides = [1, 1]} : vector<16x128xbf16> to vector<16x32xbf16>
    %cst_77 = arith.constant dense<0.000000e+00> : vector<8x16xf32>
    %176 = tpu.matmul %173, %174, %cst_77 {dimension_numbers = #tpu.dot_dimension_numbers<[1], [1], [0], [0], [0, 0, 1, 0], [], []>} : vector<8x32xbf16>, vector<16x32xbf16>, vector<8x16xf32> -> vector<8x16xf32>
    %cst_78 = arith.constant 0.176776692 : f32
    %177 = vector.broadcast %cst_78 : f32 to vector<8x16xf32>
    %178 = arith.mulf %176, %177 : vector<8x16xf32>
    %cst_79 = arith.constant dense<0xFF800000> : vector<8xf32>
    %179 = vector.multi_reduction <maximumf>, %178, %cst_79 [1] : vector<8x16xf32> to vector<8xf32>
    %180 = vector.shape_cast %179 : vector<8xf32> to vector<8x1xf32>
    %181 = vector.broadcast %180 : vector<8x1xf32> to vector<8x16xf32>
    %182 = arith.subf %178, %181 : vector<8x16xf32>
    %183 = math.exp %182 : vector<8x16xf32>
    %cst_80 = arith.constant dense<0.000000e+00> : vector<8xf32>
    %184 = vector.multi_reduction <add>, %183, %cst_80 [1] : vector<8x16xf32> to vector<8xf32>
    %185 = vector.shape_cast %184 : vector<8xf32> to vector<8x1xf32>
    %186 = tpu.reciprocal %185 {approx = true} : vector<8x1xf32> -> vector<8x1xf32>
    %187 = vector.broadcast %186 : vector<8x1xf32> to vector<8x16xf32>
    %188 = arith.mulf %183, %187 : vector<8x16xf32>
    %189 = arith.truncf %188 : vector<8x16xf32> to vector<8x16xbf16>
    %cst_81 = arith.constant dense<0.000000e+00> : vector<8x32xf32>
    %190 = tpu.matmul %189, %175, %cst_81 {dimension_numbers = #tpu.dot_dimension_numbers<[1], [0], [0], [1], [0, 0, 1, 1], [], []>} : vector<8x16xbf16>, vector<16x32xbf16>, vector<8x32xf32> -> vector<8x32xf32>
    %191 = vector.extract_strided_slice %170 {offsets = [0, 32], sizes = [8, 32], strides = [1, 1]} : vector<8x128xbf16> to vector<8x32xbf16>
    %192 = vector.extract_strided_slice %171 {offsets = [0, 32], sizes = [16, 32], strides = [1, 1]} : vector<16x128xbf16> to vector<16x32xbf16>
    %193 = vector.extract_strided_slice %172 {offsets = [0, 32], sizes = [16, 32], strides = [1, 1]} : vector<16x128xbf16> to vector<16x32xbf16>
    %cst_82 = arith.constant dense<0.000000e+00> : vector<8x16xf32>
    %194 = tpu.matmul %191, %192, %cst_82 {dimension_numbers = #tpu.dot_dimension_numbers<[1], [1], [0], [0], [0, 0, 1, 0], [], []>} : vector<8x32xbf16>, vector<16x32xbf16>, vector<8x16xf32> -> vector<8x16xf32>
    %cst_83 = arith.constant 0.176776692 : f32
    %195 = vector.broadcast %cst_83 : f32 to vector<8x16xf32>
    %196 = arith.mulf %194, %195 : vector<8x16xf32>
    %cst_84 = arith.constant dense<0xFF800000> : vector<8xf32>
    %197 = vector.multi_reduction <maximumf>, %196, %cst_84 [1] : vector<8x16xf32> to vector<8xf32>
    %198 = vector.shape_cast %197 : vector<8xf32> to vector<8x1xf32>
    %199 = vector.broadcast %198 : vector<8x1xf32> to vector<8x16xf32>
    %200 = arith.subf %196, %199 : vector<8x16xf32>
    %201 = math.exp %200 : vector<8x16xf32>
    %cst_85 = arith.constant dense<0.000000e+00> : vector<8xf32>
    %202 = vector.multi_reduction <add>, %201, %cst_85 [1] : vector<8x16xf32> to vector<8xf32>
    %203 = vector.shape_cast %202 : vector<8xf32> to vector<8x1xf32>
    %204 = tpu.reciprocal %203 {approx = true} : vector<8x1xf32> -> vector<8x1xf32>
    %205 = vector.broadcast %204 : vector<8x1xf32> to vector<8x16xf32>
    %206 = arith.mulf %201, %205 : vector<8x16xf32>
    %207 = arith.truncf %206 : vector<8x16xf32> to vector<8x16xbf16>
    %cst_86 = arith.constant dense<0.000000e+00> : vector<8x32xf32>
    %208 = tpu.matmul %207, %193, %cst_86 {dimension_numbers = #tpu.dot_dimension_numbers<[1], [0], [0], [1], [0, 0, 1, 1], [], []>} : vector<8x16xbf16>, vector<16x32xbf16>, vector<8x32xf32> -> vector<8x32xf32>
    %209 = vector.extract_strided_slice %170 {offsets = [0, 64], sizes = [8, 32], strides = [1, 1]} : vector<8x128xbf16> to vector<8x32xbf16>
    %210 = vector.extract_strided_slice %171 {offsets = [0, 64], sizes = [16, 32], strides = [1, 1]} : vector<16x128xbf16> to vector<16x32xbf16>
    %211 = vector.extract_strided_slice %172 {offsets = [0, 64], sizes = [16, 32], strides = [1, 1]} : vector<16x128xbf16> to vector<16x32xbf16>
    %cst_87 = arith.constant dense<0.000000e+00> : vector<8x16xf32>
    %212 = tpu.matmul %209, %210, %cst_87 {dimension_numbers = #tpu.dot_dimension_numbers<[1], [1], [0], [0], [0, 0, 1, 0], [], []>} : vector<8x32xbf16>, vector<16x32xbf16>, vector<8x16xf32> -> vector<8x16xf32>
    %cst_88 = arith.constant 0.176776692 : f32
    %213 = vector.broadcast %cst_88 : f32 to vector<8x16xf32>
    %214 = arith.mulf %212, %213 : vector<8x16xf32>
    %cst_89 = arith.constant dense<0xFF800000> : vector<8xf32>
    %215 = vector.multi_reduction <maximumf>, %214, %cst_89 [1] : vector<8x16xf32> to vector<8xf32>
    %216 = vector.shape_cast %215 : vector<8xf32> to vector<8x1xf32>
    %217 = vector.broadcast %216 : vector<8x1xf32> to vector<8x16xf32>
    %218 = arith.subf %214, %217 : vector<8x16xf32>
    %219 = math.exp %218 : vector<8x16xf32>
    %cst_90 = arith.constant dense<0.000000e+00> : vector<8xf32>
    %220 = vector.multi_reduction <add>, %219, %cst_90 [1] : vector<8x16xf32> to vector<8xf32>
    %221 = vector.shape_cast %220 : vector<8xf32> to vector<8x1xf32>
    %222 = tpu.reciprocal %221 {approx = true} : vector<8x1xf32> -> vector<8x1xf32>
    %223 = vector.broadcast %222 : vector<8x1xf32> to vector<8x16xf32>
    %224 = arith.mulf %219, %223 : vector<8x16xf32>
    %225 = arith.truncf %224 : vector<8x16xf32> to vector<8x16xbf16>
    %cst_91 = arith.constant dense<0.000000e+00> : vector<8x32xf32>
    %226 = tpu.matmul %225, %211, %cst_91 {dimension_numbers = #tpu.dot_dimension_numbers<[1], [0], [0], [1], [0, 0, 1, 1], [], []>} : vector<8x16xbf16>, vector<16x32xbf16>, vector<8x32xf32> -> vector<8x32xf32>
    %227 = vector.extract_strided_slice %170 {offsets = [0, 96], sizes = [8, 32], strides = [1, 1]} : vector<8x128xbf16> to vector<8x32xbf16>
    %228 = vector.extract_strided_slice %171 {offsets = [0, 96], sizes = [16, 32], strides = [1, 1]} : vector<16x128xbf16> to vector<16x32xbf16>
    %229 = vector.extract_strided_slice %172 {offsets = [0, 96], sizes = [16, 32], strides = [1, 1]} : vector<16x128xbf16> to vector<16x32xbf16>
    %cst_92 = arith.constant dense<0.000000e+00> : vector<8x16xf32>
    %230 = tpu.matmul %227, %228, %cst_92 {dimension_numbers = #tpu.dot_dimension_numbers<[1], [1], [0], [0], [0, 0, 1, 0], [], []>} : vector<8x32xbf16>, vector<16x32xbf16>, vector<8x16xf32> -> vector<8x16xf32>
    %cst_93 = arith.constant 0.176776692 : f32
    %231 = vector.broadcast %cst_93 : f32 to vector<8x16xf32>
    %232 = arith.mulf %230, %231 : vector<8x16xf32>
    %cst_94 = arith.constant dense<0xFF800000> : vector<8xf32>
    %233 = vector.multi_reduction <maximumf>, %232, %cst_94 [1] : vector<8x16xf32> to vector<8xf32>
    %234 = vector.shape_cast %233 : vector<8xf32> to vector<8x1xf32>
    %235 = vector.broadcast %234 : vector<8x1xf32> to vector<8x16xf32>
    %236 = arith.subf %232, %235 : vector<8x16xf32>
    %237 = math.exp %236 : vector<8x16xf32>
    %cst_95 = arith.constant dense<0.000000e+00> : vector<8xf32>
    %238 = vector.multi_reduction <add>, %237, %cst_95 [1] : vector<8x16xf32> to vector<8xf32>
    %239 = vector.shape_cast %238 : vector<8xf32> to vector<8x1xf32>
    %240 = tpu.reciprocal %239 {approx = true} : vector<8x1xf32> -> vector<8x1xf32>
    %241 = vector.broadcast %240 : vector<8x1xf32> to vector<8x16xf32>
    %242 = arith.mulf %237, %241 : vector<8x16xf32>
    %243 = arith.truncf %242 : vector<8x16xf32> to vector<8x16xbf16>
    %cst_96 = arith.constant dense<0.000000e+00> : vector<8x32xf32>
    %244 = tpu.matmul %243, %229, %cst_96 {dimension_numbers = #tpu.dot_dimension_numbers<[1], [0], [0], [1], [0, 0, 1, 1], [], []>} : vector<8x16xbf16>, vector<16x32xbf16>, vector<8x32xf32> -> vector<8x32xf32>
    %245 = tpu.concatenate %190, %208, %226, %244 in 1 : vector<8x32xf32>, vector<8x32xf32>, vector<8x32xf32>, vector<8x32xf32> -> vector<8x128xf32>
    %c0_97 = arith.constant 0 : index
    %c0_98 = arith.constant 0 : index
    %c0_99 = arith.constant 0 : index
    %246 = vector.load %arg13[%c0_97, %c0_98, %c0_99] : memref<2x128x128xbf16, #tpu.memory_space<vmem>>, vector<1x128x128xbf16>
    %247 = vector.shape_cast %246 : vector<1x128x128xbf16> to vector<128x128xbf16>
    %c0_100 = arith.constant 0 : index
    %c0_101 = arith.constant 0 : index
    %c0_102 = arith.constant 0 : index
    %248 = vector.load %arg14[%c0_100, %c0_101, %c0_102] : memref<2x1x128xf32, #tpu.memory_space<vmem>>, vector<1x1x128xf32>
    %249 = vector.shape_cast %248 : vector<1x1x128xf32> to vector<1x128xf32>
    %250 = arith.truncf %245 : vector<8x128xf32> to vector<8x128xbf16>
    %cst_103 = arith.constant dense<0.000000e+00> : vector<8x128xf32>
    %251 = tpu.matmul %250, %247, %cst_103 {dimension_numbers = #tpu.dot_dimension_numbers<[1], [0], [0], [1], [0, 0, 1, 1], [], []>} : vector<8x128xbf16>, vector<128x128xbf16>, vector<8x128xf32> -> vector<8x128xf32>
    %252 = vector.broadcast %249 : vector<1x128xf32> to vector<8x128xf32>
    %253 = arith.addf %251, %252 : vector<8x128xf32>
    %254 = arith.addf %125, %253 : vector<8x128xf32>
    %c0_104 = arith.constant 0 : index
    %c2 = arith.constant 2 : index
    %c0_105 = arith.constant 0 : index
    %c0_106 = arith.constant 0 : index
    %255 = vector.load %arg3[%c0_104, %c2, %c0_105, %c0_106] : memref<2x3x1x128xf32, #tpu.memory_space<vmem>>, vector<1x1x1x128xf32>
    %256 = vector.shape_cast %255 : vector<1x1x1x128xf32> to vector<1x128xf32>
    %c0_107 = arith.constant 0 : index
    %c2_108 = arith.constant 2 : index
    %c0_109 = arith.constant 0 : index
    %c0_110 = arith.constant 0 : index
    %257 = vector.load %arg4[%c0_107, %c2_108, %c0_109, %c0_110] : memref<2x3x1x128xf32, #tpu.memory_space<vmem>>, vector<1x1x1x128xf32>
    %258 = vector.shape_cast %257 : vector<1x1x1x128xf32> to vector<1x128xf32>
    %cst_111 = arith.constant dense<0.000000e+00> : vector<8xf32>
    %259 = vector.multi_reduction <add>, %254, %cst_111 [1] : vector<8x128xf32> to vector<8xf32>
    %260 = vector.shape_cast %259 : vector<8xf32> to vector<8x1xf32>
    %cst_112 = arith.constant 1.280000e+02 : f32
    %261 = vector.broadcast %cst_112 : f32 to vector<8x1xf32>
    %262 = arith.divf %260, %261 : vector<8x1xf32>
    %263 = vector.broadcast %262 : vector<8x1xf32> to vector<8x128xf32>
    %264 = arith.subf %254, %263 : vector<8x128xf32>
    %265 = arith.mulf %264, %264 : vector<8x128xf32>
    %cst_113 = arith.constant dense<0.000000e+00> : vector<8xf32>
    %266 = vector.multi_reduction <add>, %265, %cst_113 [1] : vector<8x128xf32> to vector<8xf32>
    %267 = vector.shape_cast %266 : vector<8xf32> to vector<8x1xf32>
    %cst_114 = arith.constant 1.270000e+02 : f32
    %268 = vector.broadcast %cst_114 : f32 to vector<8x1xf32>
    %269 = arith.divf %267, %268 : vector<8x1xf32>
    %270 = math.sqrt %269 : vector<8x1xf32>
    %271 = vector.broadcast %262 : vector<8x1xf32> to vector<8x128xf32>
    %272 = arith.subf %254, %271 : vector<8x128xf32>
    %273 = vector.broadcast %256 : vector<1x128xf32> to vector<8x128xf32>
    %274 = arith.mulf %273, %272 : vector<8x128xf32>
    %cst_115 = arith.constant 9.99999997E-7 : f32
    %275 = vector.broadcast %cst_115 : f32 to vector<8x1xf32>
    %276 = arith.addf %270, %275 : vector<8x1xf32>
    %277 = vector.broadcast %276 : vector<8x1xf32> to vector<8x128xf32>
    %278 = arith.divf %274, %277 : vector<8x128xf32>
    %279 = vector.broadcast %258 : vector<1x128xf32> to vector<8x128xf32>
    %280 = arith.addf %278, %279 : vector<8x128xf32>
    %c0_116 = arith.constant 0 : index
    %c0_117 = arith.constant 0 : index
    %c0_118 = arith.constant 0 : index
    %281 = vector.load %arg15[%c0_116, %c0_117, %c0_118] : memref<2x128x256xbf16, #tpu.memory_space<vmem>>, vector<1x128x256xbf16>
    %282 = vector.shape_cast %281 : vector<1x128x256xbf16> to vector<128x256xbf16>
    %c0_119 = arith.constant 0 : index
    %c0_120 = arith.constant 0 : index
    %c0_121 = arith.constant 0 : index
    %283 = vector.load %arg16[%c0_119, %c0_120, %c0_121] : memref<2x1x256xf32, #tpu.memory_space<vmem>>, vector<1x1x256xf32>
    %284 = vector.shape_cast %283 : vector<1x1x256xf32> to vector<1x256xf32>
    %285 = arith.truncf %280 : vector<8x128xf32> to vector<8x128xbf16>
    %cst_122 = arith.constant dense<0.000000e+00> : vector<8x256xf32>
    %286 = tpu.matmul %285, %282, %cst_122 {dimension_numbers = #tpu.dot_dimension_numbers<[1], [0], [0], [1], [0, 0, 1, 1], [], []>} : vector<8x128xbf16>, vector<128x256xbf16>, vector<8x256xf32> -> vector<8x256xf32>
    %287 = vector.broadcast %284 : vector<1x256xf32> to vector<8x256xf32>
    %288 = arith.addf %286, %287 : vector<8x256xf32>
    %cst_123 = arith.constant 0.000000e+00 : f32
    %289 = vector.broadcast %cst_123 : f32 to vector<8x256xf32>
    %290 = arith.maximumf %288, %289 : vector<8x256xf32>
    %c0_124 = arith.constant 0 : index
    %c0_125 = arith.constant 0 : index
    %c0_126 = arith.constant 0 : index
    %291 = vector.load %arg17[%c0_124, %c0_125, %c0_126] : memref<2x256x128xbf16, #tpu.memory_space<vmem>>, vector<1x256x128xbf16>
    %292 = vector.shape_cast %291 : vector<1x256x128xbf16> to vector<256x128xbf16>
    %c0_127 = arith.constant 0 : index
    %c0_128 = arith.constant 0 : index
    %c0_129 = arith.constant 0 : index
    %293 = vector.load %arg18[%c0_127, %c0_128, %c0_129] : memref<2x1x128xf32, #tpu.memory_space<vmem>>, vector<1x1x128xf32>
    %294 = vector.shape_cast %293 : vector<1x1x128xf32> to vector<1x128xf32>
    %295 = arith.truncf %290 : vector<8x256xf32> to vector<8x256xbf16>
    %cst_130 = arith.constant dense<0.000000e+00> : vector<8x128xf32>
    %296 = tpu.matmul %295, %292, %cst_130 {dimension_numbers = #tpu.dot_dimension_numbers<[1], [0], [0], [1], [0, 0, 1, 1], [], []>} : vector<8x256xbf16>, vector<256x128xbf16>, vector<8x128xf32> -> vector<8x128xf32>
    %297 = vector.broadcast %294 : vector<1x128xf32> to vector<8x128xf32>
    %298 = arith.addf %296, %297 : vector<8x128xf32>
    %299 = arith.addf %254, %298 : vector<8x128xf32>
    %c1_131 = arith.constant 1 : index
    %c0_132 = arith.constant 0 : index
    %c0_133 = arith.constant 0 : index
    %c0_134 = arith.constant 0 : index
    %300 = vector.load %arg3[%c1_131, %c0_132, %c0_133, %c0_134] : memref<2x3x1x128xf32, #tpu.memory_space<vmem>>, vector<1x1x1x128xf32>
    %301 = vector.shape_cast %300 : vector<1x1x1x128xf32> to vector<1x128xf32>
    %c1_135 = arith.constant 1 : index
    %c0_136 = arith.constant 0 : index
    %c0_137 = arith.constant 0 : index
    %c0_138 = arith.constant 0 : index
    %302 = vector.load %arg4[%c1_135, %c0_136, %c0_137, %c0_138] : memref<2x3x1x128xf32, #tpu.memory_space<vmem>>, vector<1x1x1x128xf32>
    %303 = vector.shape_cast %302 : vector<1x1x1x128xf32> to vector<1x128xf32>
    %cst_139 = arith.constant dense<0.000000e+00> : vector<8xf32>
    %304 = vector.multi_reduction <add>, %299, %cst_139 [1] : vector<8x128xf32> to vector<8xf32>
    %305 = vector.shape_cast %304 : vector<8xf32> to vector<8x1xf32>
    %cst_140 = arith.constant 1.280000e+02 : f32
    %306 = vector.broadcast %cst_140 : f32 to vector<8x1xf32>
    %307 = arith.divf %305, %306 : vector<8x1xf32>
    %308 = vector.broadcast %307 : vector<8x1xf32> to vector<8x128xf32>
    %309 = arith.subf %299, %308 : vector<8x128xf32>
    %310 = arith.mulf %309, %309 : vector<8x128xf32>
    %cst_141 = arith.constant dense<0.000000e+00> : vector<8xf32>
    %311 = vector.multi_reduction <add>, %310, %cst_141 [1] : vector<8x128xf32> to vector<8xf32>
    %312 = vector.shape_cast %311 : vector<8xf32> to vector<8x1xf32>
    %cst_142 = arith.constant 1.270000e+02 : f32
    %313 = vector.broadcast %cst_142 : f32 to vector<8x1xf32>
    %314 = arith.divf %312, %313 : vector<8x1xf32>
    %315 = math.sqrt %314 : vector<8x1xf32>
    %316 = vector.broadcast %307 : vector<8x1xf32> to vector<8x128xf32>
    %317 = arith.subf %299, %316 : vector<8x128xf32>
    %318 = vector.broadcast %301 : vector<1x128xf32> to vector<8x128xf32>
    %319 = arith.mulf %318, %317 : vector<8x128xf32>
    %cst_143 = arith.constant 9.99999997E-7 : f32
    %320 = vector.broadcast %cst_143 : f32 to vector<8x1xf32>
    %321 = arith.addf %315, %320 : vector<8x1xf32>
    %322 = vector.broadcast %321 : vector<8x1xf32> to vector<8x128xf32>
    %323 = arith.divf %319, %322 : vector<8x128xf32>
    %324 = vector.broadcast %303 : vector<1x128xf32> to vector<8x128xf32>
    %325 = arith.addf %323, %324 : vector<8x128xf32>
    %c1_144 = arith.constant 1 : index
    %c0_145 = arith.constant 0 : index
    %c0_146 = arith.constant 0 : index
    %326 = vector.load %arg5[%c1_144, %c0_145, %c0_146] : memref<2x128x384xbf16, #tpu.memory_space<vmem>>, vector<1x128x384xbf16>
    %327 = vector.shape_cast %326 : vector<1x128x384xbf16> to vector<128x384xbf16>
    %c1_147 = arith.constant 1 : index
    %c0_148 = arith.constant 0 : index
    %c0_149 = arith.constant 0 : index
    %328 = vector.load %arg6[%c1_147, %c0_148, %c0_149] : memref<2x1x384xf32, #tpu.memory_space<vmem>>, vector<1x1x384xf32>
    %329 = vector.shape_cast %328 : vector<1x1x384xf32> to vector<1x384xf32>
    %330 = arith.truncf %325 : vector<8x128xf32> to vector<8x128xbf16>
    %cst_150 = arith.constant dense<0.000000e+00> : vector<8x384xf32>
    %331 = tpu.matmul %330, %327, %cst_150 {dimension_numbers = #tpu.dot_dimension_numbers<[1], [0], [0], [1], [0, 0, 1, 1], [], []>} : vector<8x128xbf16>, vector<128x384xbf16>, vector<8x384xf32> -> vector<8x384xf32>
    %332 = vector.broadcast %329 : vector<1x384xf32> to vector<8x384xf32>
    %333 = arith.addf %331, %332 : vector<8x384xf32>
    %334 = vector.extract_strided_slice %333 {offsets = [0, 0], sizes = [8, 128], strides = [1, 1]} : vector<8x384xf32> to vector<8x128xf32>
    %335 = vector.extract_strided_slice %333 {offsets = [0, 128], sizes = [8, 128], strides = [1, 1]} : vector<8x384xf32> to vector<8x128xf32>
    %336 = vector.extract_strided_slice %333 {offsets = [0, 256], sizes = [8, 128], strides = [1, 1]} : vector<8x384xf32> to vector<8x128xf32>
    %337 = arith.truncf %334 : vector<8x128xf32> to vector<8x128xbf16>
    %338 = arith.truncf %335 : vector<8x128xf32> to vector<8x128xbf16>
    %339 = arith.truncf %336 : vector<8x128xf32> to vector<8x128xbf16>
    %340 = vector.extract_strided_slice %337 {offsets = [0, 0], sizes = [8, 32], strides = [1, 1]} : vector<8x128xbf16> to vector<8x32xbf16>
    %341 = vector.extract_strided_slice %338 {offsets = [0, 0], sizes = [8, 32], strides = [1, 1]} : vector<8x128xbf16> to vector<8x32xbf16>
    %342 = vector.extract_strided_slice %339 {offsets = [0, 0], sizes = [8, 32], strides = [1, 1]} : vector<8x128xbf16> to vector<8x32xbf16>
    %cst_151 = arith.constant dense<0.000000e+00> : vector<8x8xf32>
    %343 = tpu.matmul %340, %341, %cst_151 {dimension_numbers = #tpu.dot_dimension_numbers<[1], [1], [0], [0], [0, 0, 1, 0], [], []>} : vector<8x32xbf16>, vector<8x32xbf16>, vector<8x8xf32> -> vector<8x8xf32>
    %cst_152 = arith.constant 0.176776692 : f32
    %344 = vector.broadcast %cst_152 : f32 to vector<8x8xf32>
    %345 = arith.mulf %343, %344 : vector<8x8xf32>
    %cst_153 = arith.constant dense<0xFF800000> : vector<8xf32>
    %346 = vector.multi_reduction <maximumf>, %345, %cst_153 [1] : vector<8x8xf32> to vector<8xf32>
    %347 = vector.shape_cast %346 : vector<8xf32> to vector<8x1xf32>
    %348 = vector.broadcast %347 : vector<8x1xf32> to vector<8x8xf32>
    %349 = arith.subf %345, %348 : vector<8x8xf32>
    %350 = math.exp %349 : vector<8x8xf32>
    %cst_154 = arith.constant dense<0.000000e+00> : vector<8xf32>
    %351 = vector.multi_reduction <add>, %350, %cst_154 [1] : vector<8x8xf32> to vector<8xf32>
    %352 = vector.shape_cast %351 : vector<8xf32> to vector<8x1xf32>
    %353 = tpu.reciprocal %352 {approx = true} : vector<8x1xf32> -> vector<8x1xf32>
    %354 = vector.broadcast %353 : vector<8x1xf32> to vector<8x8xf32>
    %355 = arith.mulf %350, %354 : vector<8x8xf32>
    %356 = arith.truncf %355 : vector<8x8xf32> to vector<8x8xbf16>
    %cst_155 = arith.constant dense<0.000000e+00> : vector<8x32xf32>
    %357 = tpu.matmul %356, %342, %cst_155 {dimension_numbers = #tpu.dot_dimension_numbers<[1], [0], [0], [1], [0, 0, 1, 1], [], []>} : vector<8x8xbf16>, vector<8x32xbf16>, vector<8x32xf32> -> vector<8x32xf32>
    %358 = vector.extract_strided_slice %337 {offsets = [0, 32], sizes = [8, 32], strides = [1, 1]} : vector<8x128xbf16> to vector<8x32xbf16>
    %359 = vector.extract_strided_slice %338 {offsets = [0, 32], sizes = [8, 32], strides = [1, 1]} : vector<8x128xbf16> to vector<8x32xbf16>
    %360 = vector.extract_strided_slice %339 {offsets = [0, 32], sizes = [8, 32], strides = [1, 1]} : vector<8x128xbf16> to vector<8x32xbf16>
    %cst_156 = arith.constant dense<0.000000e+00> : vector<8x8xf32>
    %361 = tpu.matmul %358, %359, %cst_156 {dimension_numbers = #tpu.dot_dimension_numbers<[1], [1], [0], [0], [0, 0, 1, 0], [], []>} : vector<8x32xbf16>, vector<8x32xbf16>, vector<8x8xf32> -> vector<8x8xf32>
    %cst_157 = arith.constant 0.176776692 : f32
    %362 = vector.broadcast %cst_157 : f32 to vector<8x8xf32>
    %363 = arith.mulf %361, %362 : vector<8x8xf32>
    %cst_158 = arith.constant dense<0xFF800000> : vector<8xf32>
    %364 = vector.multi_reduction <maximumf>, %363, %cst_158 [1] : vector<8x8xf32> to vector<8xf32>
    %365 = vector.shape_cast %364 : vector<8xf32> to vector<8x1xf32>
    %366 = vector.broadcast %365 : vector<8x1xf32> to vector<8x8xf32>
    %367 = arith.subf %363, %366 : vector<8x8xf32>
    %368 = math.exp %367 : vector<8x8xf32>
    %cst_159 = arith.constant dense<0.000000e+00> : vector<8xf32>
    %369 = vector.multi_reduction <add>, %368, %cst_159 [1] : vector<8x8xf32> to vector<8xf32>
    %370 = vector.shape_cast %369 : vector<8xf32> to vector<8x1xf32>
    %371 = tpu.reciprocal %370 {approx = true} : vector<8x1xf32> -> vector<8x1xf32>
    %372 = vector.broadcast %371 : vector<8x1xf32> to vector<8x8xf32>
    %373 = arith.mulf %368, %372 : vector<8x8xf32>
    %374 = arith.truncf %373 : vector<8x8xf32> to vector<8x8xbf16>
    %cst_160 = arith.constant dense<0.000000e+00> : vector<8x32xf32>
    %375 = tpu.matmul %374, %360, %cst_160 {dimension_numbers = #tpu.dot_dimension_numbers<[1], [0], [0], [1], [0, 0, 1, 1], [], []>} : vector<8x8xbf16>, vector<8x32xbf16>, vector<8x32xf32> -> vector<8x32xf32>
    %376 = vector.extract_strided_slice %337 {offsets = [0, 64], sizes = [8, 32], strides = [1, 1]} : vector<8x128xbf16> to vector<8x32xbf16>
    %377 = vector.extract_strided_slice %338 {offsets = [0, 64], sizes = [8, 32], strides = [1, 1]} : vector<8x128xbf16> to vector<8x32xbf16>
    %378 = vector.extract_strided_slice %339 {offsets = [0, 64], sizes = [8, 32], strides = [1, 1]} : vector<8x128xbf16> to vector<8x32xbf16>
    %cst_161 = arith.constant dense<0.000000e+00> : vector<8x8xf32>
    %379 = tpu.matmul %376, %377, %cst_161 {dimension_numbers = #tpu.dot_dimension_numbers<[1], [1], [0], [0], [0, 0, 1, 0], [], []>} : vector<8x32xbf16>, vector<8x32xbf16>, vector<8x8xf32> -> vector<8x8xf32>
    %cst_162 = arith.constant 0.176776692 : f32
    %380 = vector.broadcast %cst_162 : f32 to vector<8x8xf32>
    %381 = arith.mulf %379, %380 : vector<8x8xf32>
    %cst_163 = arith.constant dense<0xFF800000> : vector<8xf32>
    %382 = vector.multi_reduction <maximumf>, %381, %cst_163 [1] : vector<8x8xf32> to vector<8xf32>
    %383 = vector.shape_cast %382 : vector<8xf32> to vector<8x1xf32>
    %384 = vector.broadcast %383 : vector<8x1xf32> to vector<8x8xf32>
    %385 = arith.subf %381, %384 : vector<8x8xf32>
    %386 = math.exp %385 : vector<8x8xf32>
    %cst_164 = arith.constant dense<0.000000e+00> : vector<8xf32>
    %387 = vector.multi_reduction <add>, %386, %cst_164 [1] : vector<8x8xf32> to vector<8xf32>
    %388 = vector.shape_cast %387 : vector<8xf32> to vector<8x1xf32>
    %389 = tpu.reciprocal %388 {approx = true} : vector<8x1xf32> -> vector<8x1xf32>
    %390 = vector.broadcast %389 : vector<8x1xf32> to vector<8x8xf32>
    %391 = arith.mulf %386, %390 : vector<8x8xf32>
    %392 = arith.truncf %391 : vector<8x8xf32> to vector<8x8xbf16>
    %cst_165 = arith.constant dense<0.000000e+00> : vector<8x32xf32>
    %393 = tpu.matmul %392, %378, %cst_165 {dimension_numbers = #tpu.dot_dimension_numbers<[1], [0], [0], [1], [0, 0, 1, 1], [], []>} : vector<8x8xbf16>, vector<8x32xbf16>, vector<8x32xf32> -> vector<8x32xf32>
    %394 = vector.extract_strided_slice %337 {offsets = [0, 96], sizes = [8, 32], strides = [1, 1]} : vector<8x128xbf16> to vector<8x32xbf16>
    %395 = vector.extract_strided_slice %338 {offsets = [0, 96], sizes = [8, 32], strides = [1, 1]} : vector<8x128xbf16> to vector<8x32xbf16>
    %396 = vector.extract_strided_slice %339 {offsets = [0, 96], sizes = [8, 32], strides = [1, 1]} : vector<8x128xbf16> to vector<8x32xbf16>
    %cst_166 = arith.constant dense<0.000000e+00> : vector<8x8xf32>
    %397 = tpu.matmul %394, %395, %cst_166 {dimension_numbers = #tpu.dot_dimension_numbers<[1], [1], [0], [0], [0, 0, 1, 0], [], []>} : vector<8x32xbf16>, vector<8x32xbf16>, vector<8x8xf32> -> vector<8x8xf32>
    %cst_167 = arith.constant 0.176776692 : f32
    %398 = vector.broadcast %cst_167 : f32 to vector<8x8xf32>
    %399 = arith.mulf %397, %398 : vector<8x8xf32>
    %cst_168 = arith.constant dense<0xFF800000> : vector<8xf32>
    %400 = vector.multi_reduction <maximumf>, %399, %cst_168 [1] : vector<8x8xf32> to vector<8xf32>
    %401 = vector.shape_cast %400 : vector<8xf32> to vector<8x1xf32>
    %402 = vector.broadcast %401 : vector<8x1xf32> to vector<8x8xf32>
    %403 = arith.subf %399, %402 : vector<8x8xf32>
    %404 = math.exp %403 : vector<8x8xf32>
    %cst_169 = arith.constant dense<0.000000e+00> : vector<8xf32>
    %405 = vector.multi_reduction <add>, %404, %cst_169 [1] : vector<8x8xf32> to vector<8xf32>
    %406 = vector.shape_cast %405 : vector<8xf32> to vector<8x1xf32>
    %407 = tpu.reciprocal %406 {approx = true} : vector<8x1xf32> -> vector<8x1xf32>
    %408 = vector.broadcast %407 : vector<8x1xf32> to vector<8x8xf32>
    %409 = arith.mulf %404, %408 : vector<8x8xf32>
    %410 = arith.truncf %409 : vector<8x8xf32> to vector<8x8xbf16>
    %cst_170 = arith.constant dense<0.000000e+00> : vector<8x32xf32>
    %411 = tpu.matmul %410, %396, %cst_170 {dimension_numbers = #tpu.dot_dimension_numbers<[1], [0], [0], [1], [0, 0, 1, 1], [], []>} : vector<8x8xbf16>, vector<8x32xbf16>, vector<8x32xf32> -> vector<8x32xf32>
    %412 = tpu.concatenate %357, %375, %393, %411 in 1 : vector<8x32xf32>, vector<8x32xf32>, vector<8x32xf32>, vector<8x32xf32> -> vector<8x128xf32>
    %c1_171 = arith.constant 1 : index
    %c0_172 = arith.constant 0 : index
    %c0_173 = arith.constant 0 : index
    %413 = vector.load %arg7[%c1_171, %c0_172, %c0_173] : memref<2x128x128xbf16, #tpu.memory_space<vmem>>, vector<1x128x128xbf16>
    %414 = vector.shape_cast %413 : vector<1x128x128xbf16> to vector<128x128xbf16>
    %c1_174 = arith.constant 1 : index
    %c0_175 = arith.constant 0 : index
    %c0_176 = arith.constant 0 : index
    %415 = vector.load %arg8[%c1_174, %c0_175, %c0_176] : memref<2x1x128xf32, #tpu.memory_space<vmem>>, vector<1x1x128xf32>
    %416 = vector.shape_cast %415 : vector<1x1x128xf32> to vector<1x128xf32>
    %417 = arith.truncf %412 : vector<8x128xf32> to vector<8x128xbf16>
    %cst_177 = arith.constant dense<0.000000e+00> : vector<8x128xf32>
    %418 = tpu.matmul %417, %414, %cst_177 {dimension_numbers = #tpu.dot_dimension_numbers<[1], [0], [0], [1], [0, 0, 1, 1], [], []>} : vector<8x128xbf16>, vector<128x128xbf16>, vector<8x128xf32> -> vector<8x128xf32>
    %419 = vector.broadcast %416 : vector<1x128xf32> to vector<8x128xf32>
    %420 = arith.addf %418, %419 : vector<8x128xf32>
    %421 = arith.addf %299, %420 : vector<8x128xf32>
    %c1_178 = arith.constant 1 : index
    %c1_179 = arith.constant 1 : index
    %c0_180 = arith.constant 0 : index
    %c0_181 = arith.constant 0 : index
    %422 = vector.load %arg3[%c1_178, %c1_179, %c0_180, %c0_181] : memref<2x3x1x128xf32, #tpu.memory_space<vmem>>, vector<1x1x1x128xf32>
    %423 = vector.shape_cast %422 : vector<1x1x1x128xf32> to vector<1x128xf32>
    %c1_182 = arith.constant 1 : index
    %c1_183 = arith.constant 1 : index
    %c0_184 = arith.constant 0 : index
    %c0_185 = arith.constant 0 : index
    %424 = vector.load %arg4[%c1_182, %c1_183, %c0_184, %c0_185] : memref<2x3x1x128xf32, #tpu.memory_space<vmem>>, vector<1x1x1x128xf32>
    %425 = vector.shape_cast %424 : vector<1x1x1x128xf32> to vector<1x128xf32>
    %cst_186 = arith.constant dense<0.000000e+00> : vector<8xf32>
    %426 = vector.multi_reduction <add>, %421, %cst_186 [1] : vector<8x128xf32> to vector<8xf32>
    %427 = vector.shape_cast %426 : vector<8xf32> to vector<8x1xf32>
    %cst_187 = arith.constant 1.280000e+02 : f32
    %428 = vector.broadcast %cst_187 : f32 to vector<8x1xf32>
    %429 = arith.divf %427, %428 : vector<8x1xf32>
    %430 = vector.broadcast %429 : vector<8x1xf32> to vector<8x128xf32>
    %431 = arith.subf %421, %430 : vector<8x128xf32>
    %432 = arith.mulf %431, %431 : vector<8x128xf32>
    %cst_188 = arith.constant dense<0.000000e+00> : vector<8xf32>
    %433 = vector.multi_reduction <add>, %432, %cst_188 [1] : vector<8x128xf32> to vector<8xf32>
    %434 = vector.shape_cast %433 : vector<8xf32> to vector<8x1xf32>
    %cst_189 = arith.constant 1.270000e+02 : f32
    %435 = vector.broadcast %cst_189 : f32 to vector<8x1xf32>
    %436 = arith.divf %434, %435 : vector<8x1xf32>
    %437 = math.sqrt %436 : vector<8x1xf32>
    %438 = vector.broadcast %429 : vector<8x1xf32> to vector<8x128xf32>
    %439 = arith.subf %421, %438 : vector<8x128xf32>
    %440 = vector.broadcast %423 : vector<1x128xf32> to vector<8x128xf32>
    %441 = arith.mulf %440, %439 : vector<8x128xf32>
    %cst_190 = arith.constant 9.99999997E-7 : f32
    %442 = vector.broadcast %cst_190 : f32 to vector<8x1xf32>
    %443 = arith.addf %437, %442 : vector<8x1xf32>
    %444 = vector.broadcast %443 : vector<8x1xf32> to vector<8x128xf32>
    %445 = arith.divf %441, %444 : vector<8x128xf32>
    %446 = vector.broadcast %425 : vector<1x128xf32> to vector<8x128xf32>
    %447 = arith.addf %445, %446 : vector<8x128xf32>
    %c1_191 = arith.constant 1 : index
    %c0_192 = arith.constant 0 : index
    %c0_193 = arith.constant 0 : index
    %448 = vector.load %arg9[%c1_191, %c0_192, %c0_193] : memref<2x128x128xbf16, #tpu.memory_space<vmem>>, vector<1x128x128xbf16>
    %449 = vector.shape_cast %448 : vector<1x128x128xbf16> to vector<128x128xbf16>
    %c1_194 = arith.constant 1 : index
    %c0_195 = arith.constant 0 : index
    %c0_196 = arith.constant 0 : index
    %450 = vector.load %arg10[%c1_194, %c0_195, %c0_196] : memref<2x1x128xf32, #tpu.memory_space<vmem>>, vector<1x1x128xf32>
    %451 = vector.shape_cast %450 : vector<1x1x128xf32> to vector<1x128xf32>
    %452 = arith.truncf %447 : vector<8x128xf32> to vector<8x128xbf16>
    %cst_197 = arith.constant dense<0.000000e+00> : vector<8x128xf32>
    %453 = tpu.matmul %452, %449, %cst_197 {dimension_numbers = #tpu.dot_dimension_numbers<[1], [0], [0], [1], [0, 0, 1, 1], [], []>} : vector<8x128xbf16>, vector<128x128xbf16>, vector<8x128xf32> -> vector<8x128xf32>
    %454 = vector.broadcast %451 : vector<1x128xf32> to vector<8x128xf32>
    %455 = arith.addf %453, %454 : vector<8x128xf32>
    %c1_198 = arith.constant 1 : index
    %c0_199 = arith.constant 0 : index
    %c0_200 = arith.constant 0 : index
    %456 = vector.load %arg11[%c1_198, %c0_199, %c0_200] : memref<2x128x256xbf16, #tpu.memory_space<vmem>>, vector<1x128x256xbf16>
    %457 = vector.shape_cast %456 : vector<1x128x256xbf16> to vector<128x256xbf16>
    %c1_201 = arith.constant 1 : index
    %c0_202 = arith.constant 0 : index
    %c0_203 = arith.constant 0 : index
    %458 = vector.load %arg12[%c1_201, %c0_202, %c0_203] : memref<2x1x256xf32, #tpu.memory_space<vmem>>, vector<1x1x256xf32>
    %459 = vector.shape_cast %458 : vector<1x1x256xf32> to vector<1x256xf32>
    %460 = arith.truncf %3 : vector<16x128xf32> to vector<16x128xbf16>
    %cst_204 = arith.constant dense<0.000000e+00> : vector<16x256xf32>
    %461 = tpu.matmul %460, %457, %cst_204 {dimension_numbers = #tpu.dot_dimension_numbers<[1], [0], [0], [1], [0, 0, 1, 1], [], []>} : vector<16x128xbf16>, vector<128x256xbf16>, vector<16x256xf32> -> vector<16x256xf32>
    %462 = vector.broadcast %459 : vector<1x256xf32> to vector<16x256xf32>
    %463 = arith.addf %461, %462 : vector<16x256xf32>
    %464 = vector.extract_strided_slice %463 {offsets = [0, 0], sizes = [16, 128], strides = [1, 1]} : vector<16x256xf32> to vector<16x128xf32>
    %465 = vector.extract_strided_slice %463 {offsets = [0, 128], sizes = [16, 128], strides = [1, 1]} : vector<16x256xf32> to vector<16x128xf32>
    %466 = arith.truncf %455 : vector<8x128xf32> to vector<8x128xbf16>
    %467 = arith.truncf %464 : vector<16x128xf32> to vector<16x128xbf16>
    %468 = arith.truncf %465 : vector<16x128xf32> to vector<16x128xbf16>
    %469 = vector.extract_strided_slice %466 {offsets = [0, 0], sizes = [8, 32], strides = [1, 1]} : vector<8x128xbf16> to vector<8x32xbf16>
    %470 = vector.extract_strided_slice %467 {offsets = [0, 0], sizes = [16, 32], strides = [1, 1]} : vector<16x128xbf16> to vector<16x32xbf16>
    %471 = vector.extract_strided_slice %468 {offsets = [0, 0], sizes = [16, 32], strides = [1, 1]} : vector<16x128xbf16> to vector<16x32xbf16>
    %cst_205 = arith.constant dense<0.000000e+00> : vector<8x16xf32>
    %472 = tpu.matmul %469, %470, %cst_205 {dimension_numbers = #tpu.dot_dimension_numbers<[1], [1], [0], [0], [0, 0, 1, 0], [], []>} : vector<8x32xbf16>, vector<16x32xbf16>, vector<8x16xf32> -> vector<8x16xf32>
    %cst_206 = arith.constant 0.176776692 : f32
    %473 = vector.broadcast %cst_206 : f32 to vector<8x16xf32>
    %474 = arith.mulf %472, %473 : vector<8x16xf32>
    %cst_207 = arith.constant dense<0xFF800000> : vector<8xf32>
    %475 = vector.multi_reduction <maximumf>, %474, %cst_207 [1] : vector<8x16xf32> to vector<8xf32>
    %476 = vector.shape_cast %475 : vector<8xf32> to vector<8x1xf32>
    %477 = vector.broadcast %476 : vector<8x1xf32> to vector<8x16xf32>
    %478 = arith.subf %474, %477 : vector<8x16xf32>
    %479 = math.exp %478 : vector<8x16xf32>
    %cst_208 = arith.constant dense<0.000000e+00> : vector<8xf32>
    %480 = vector.multi_reduction <add>, %479, %cst_208 [1] : vector<8x16xf32> to vector<8xf32>
    %481 = vector.shape_cast %480 : vector<8xf32> to vector<8x1xf32>
    %482 = tpu.reciprocal %481 {approx = true} : vector<8x1xf32> -> vector<8x1xf32>
    %483 = vector.broadcast %482 : vector<8x1xf32> to vector<8x16xf32>
    %484 = arith.mulf %479, %483 : vector<8x16xf32>
    %485 = arith.truncf %484 : vector<8x16xf32> to vector<8x16xbf16>
    %cst_209 = arith.constant dense<0.000000e+00> : vector<8x32xf32>
    %486 = tpu.matmul %485, %471, %cst_209 {dimension_numbers = #tpu.dot_dimension_numbers<[1], [0], [0], [1], [0, 0, 1, 1], [], []>} : vector<8x16xbf16>, vector<16x32xbf16>, vector<8x32xf32> -> vector<8x32xf32>
    %487 = vector.extract_strided_slice %466 {offsets = [0, 32], sizes = [8, 32], strides = [1, 1]} : vector<8x128xbf16> to vector<8x32xbf16>
    %488 = vector.extract_strided_slice %467 {offsets = [0, 32], sizes = [16, 32], strides = [1, 1]} : vector<16x128xbf16> to vector<16x32xbf16>
    %489 = vector.extract_strided_slice %468 {offsets = [0, 32], sizes = [16, 32], strides = [1, 1]} : vector<16x128xbf16> to vector<16x32xbf16>
    %cst_210 = arith.constant dense<0.000000e+00> : vector<8x16xf32>
    %490 = tpu.matmul %487, %488, %cst_210 {dimension_numbers = #tpu.dot_dimension_numbers<[1], [1], [0], [0], [0, 0, 1, 0], [], []>} : vector<8x32xbf16>, vector<16x32xbf16>, vector<8x16xf32> -> vector<8x16xf32>
    %cst_211 = arith.constant 0.176776692 : f32
    %491 = vector.broadcast %cst_211 : f32 to vector<8x16xf32>
    %492 = arith.mulf %490, %491 : vector<8x16xf32>
    %cst_212 = arith.constant dense<0xFF800000> : vector<8xf32>
    %493 = vector.multi_reduction <maximumf>, %492, %cst_212 [1] : vector<8x16xf32> to vector<8xf32>
    %494 = vector.shape_cast %493 : vector<8xf32> to vector<8x1xf32>
    %495 = vector.broadcast %494 : vector<8x1xf32> to vector<8x16xf32>
    %496 = arith.subf %492, %495 : vector<8x16xf32>
    %497 = math.exp %496 : vector<8x16xf32>
    %cst_213 = arith.constant dense<0.000000e+00> : vector<8xf32>
    %498 = vector.multi_reduction <add>, %497, %cst_213 [1] : vector<8x16xf32> to vector<8xf32>
    %499 = vector.shape_cast %498 : vector<8xf32> to vector<8x1xf32>
    %500 = tpu.reciprocal %499 {approx = true} : vector<8x1xf32> -> vector<8x1xf32>
    %501 = vector.broadcast %500 : vector<8x1xf32> to vector<8x16xf32>
    %502 = arith.mulf %497, %501 : vector<8x16xf32>
    %503 = arith.truncf %502 : vector<8x16xf32> to vector<8x16xbf16>
    %cst_214 = arith.constant dense<0.000000e+00> : vector<8x32xf32>
    %504 = tpu.matmul %503, %489, %cst_214 {dimension_numbers = #tpu.dot_dimension_numbers<[1], [0], [0], [1], [0, 0, 1, 1], [], []>} : vector<8x16xbf16>, vector<16x32xbf16>, vector<8x32xf32> -> vector<8x32xf32>
    %505 = vector.extract_strided_slice %466 {offsets = [0, 64], sizes = [8, 32], strides = [1, 1]} : vector<8x128xbf16> to vector<8x32xbf16>
    %506 = vector.extract_strided_slice %467 {offsets = [0, 64], sizes = [16, 32], strides = [1, 1]} : vector<16x128xbf16> to vector<16x32xbf16>
    %507 = vector.extract_strided_slice %468 {offsets = [0, 64], sizes = [16, 32], strides = [1, 1]} : vector<16x128xbf16> to vector<16x32xbf16>
    %cst_215 = arith.constant dense<0.000000e+00> : vector<8x16xf32>
    %508 = tpu.matmul %505, %506, %cst_215 {dimension_numbers = #tpu.dot_dimension_numbers<[1], [1], [0], [0], [0, 0, 1, 0], [], []>} : vector<8x32xbf16>, vector<16x32xbf16>, vector<8x16xf32> -> vector<8x16xf32>
    %cst_216 = arith.constant 0.176776692 : f32
    %509 = vector.broadcast %cst_216 : f32 to vector<8x16xf32>
    %510 = arith.mulf %508, %509 : vector<8x16xf32>
    %cst_217 = arith.constant dense<0xFF800000> : vector<8xf32>
    %511 = vector.multi_reduction <maximumf>, %510, %cst_217 [1] : vector<8x16xf32> to vector<8xf32>
    %512 = vector.shape_cast %511 : vector<8xf32> to vector<8x1xf32>
    %513 = vector.broadcast %512 : vector<8x1xf32> to vector<8x16xf32>
    %514 = arith.subf %510, %513 : vector<8x16xf32>
    %515 = math.exp %514 : vector<8x16xf32>
    %cst_218 = arith.constant dense<0.000000e+00> : vector<8xf32>
    %516 = vector.multi_reduction <add>, %515, %cst_218 [1] : vector<8x16xf32> to vector<8xf32>
    %517 = vector.shape_cast %516 : vector<8xf32> to vector<8x1xf32>
    %518 = tpu.reciprocal %517 {approx = true} : vector<8x1xf32> -> vector<8x1xf32>
    %519 = vector.broadcast %518 : vector<8x1xf32> to vector<8x16xf32>
    %520 = arith.mulf %515, %519 : vector<8x16xf32>
    %521 = arith.truncf %520 : vector<8x16xf32> to vector<8x16xbf16>
    %cst_219 = arith.constant dense<0.000000e+00> : vector<8x32xf32>
    %522 = tpu.matmul %521, %507, %cst_219 {dimension_numbers = #tpu.dot_dimension_numbers<[1], [0], [0], [1], [0, 0, 1, 1], [], []>} : vector<8x16xbf16>, vector<16x32xbf16>, vector<8x32xf32> -> vector<8x32xf32>
    %523 = vector.extract_strided_slice %466 {offsets = [0, 96], sizes = [8, 32], strides = [1, 1]} : vector<8x128xbf16> to vector<8x32xbf16>
    %524 = vector.extract_strided_slice %467 {offsets = [0, 96], sizes = [16, 32], strides = [1, 1]} : vector<16x128xbf16> to vector<16x32xbf16>
    %525 = vector.extract_strided_slice %468 {offsets = [0, 96], sizes = [16, 32], strides = [1, 1]} : vector<16x128xbf16> to vector<16x32xbf16>
    %cst_220 = arith.constant dense<0.000000e+00> : vector<8x16xf32>
    %526 = tpu.matmul %523, %524, %cst_220 {dimension_numbers = #tpu.dot_dimension_numbers<[1], [1], [0], [0], [0, 0, 1, 0], [], []>} : vector<8x32xbf16>, vector<16x32xbf16>, vector<8x16xf32> -> vector<8x16xf32>
    %cst_221 = arith.constant 0.176776692 : f32
    %527 = vector.broadcast %cst_221 : f32 to vector<8x16xf32>
    %528 = arith.mulf %526, %527 : vector<8x16xf32>
    %cst_222 = arith.constant dense<0xFF800000> : vector<8xf32>
    %529 = vector.multi_reduction <maximumf>, %528, %cst_222 [1] : vector<8x16xf32> to vector<8xf32>
    %530 = vector.shape_cast %529 : vector<8xf32> to vector<8x1xf32>
    %531 = vector.broadcast %530 : vector<8x1xf32> to vector<8x16xf32>
    %532 = arith.subf %528, %531 : vector<8x16xf32>
    %533 = math.exp %532 : vector<8x16xf32>
    %cst_223 = arith.constant dense<0.000000e+00> : vector<8xf32>
    %534 = vector.multi_reduction <add>, %533, %cst_223 [1] : vector<8x16xf32> to vector<8xf32>
    %535 = vector.shape_cast %534 : vector<8xf32> to vector<8x1xf32>
    %536 = tpu.reciprocal %535 {approx = true} : vector<8x1xf32> -> vector<8x1xf32>
    %537 = vector.broadcast %536 : vector<8x1xf32> to vector<8x16xf32>
    %538 = arith.mulf %533, %537 : vector<8x16xf32>
    %539 = arith.truncf %538 : vector<8x16xf32> to vector<8x16xbf16>
    %cst_224 = arith.constant dense<0.000000e+00> : vector<8x32xf32>
    %540 = tpu.matmul %539, %525, %cst_224 {dimension_numbers = #tpu.dot_dimension_numbers<[1], [0], [0], [1], [0, 0, 1, 1], [], []>} : vector<8x16xbf16>, vector<16x32xbf16>, vector<8x32xf32> -> vector<8x32xf32>
    %541 = tpu.concatenate %486, %504, %522, %540 in 1 : vector<8x32xf32>, vector<8x32xf32>, vector<8x32xf32>, vector<8x32xf32> -> vector<8x128xf32>
    %c1_225 = arith.constant 1 : index
    %c0_226 = arith.constant 0 : index
    %c0_227 = arith.constant 0 : index
    %542 = vector.load %arg13[%c1_225, %c0_226, %c0_227] : memref<2x128x128xbf16, #tpu.memory_space<vmem>>, vector<1x128x128xbf16>
    %543 = vector.shape_cast %542 : vector<1x128x128xbf16> to vector<128x128xbf16>
    %c1_228 = arith.constant 1 : index
    %c0_229 = arith.constant 0 : index
    %c0_230 = arith.constant 0 : index
    %544 = vector.load %arg14[%c1_228, %c0_229, %c0_230] : memref<2x1x128xf32, #tpu.memory_space<vmem>>, vector<1x1x128xf32>
    %545 = vector.shape_cast %544 : vector<1x1x128xf32> to vector<1x128xf32>
    %546 = arith.truncf %541 : vector<8x128xf32> to vector<8x128xbf16>
    %cst_231 = arith.constant dense<0.000000e+00> : vector<8x128xf32>
    %547 = tpu.matmul %546, %543, %cst_231 {dimension_numbers = #tpu.dot_dimension_numbers<[1], [0], [0], [1], [0, 0, 1, 1], [], []>} : vector<8x128xbf16>, vector<128x128xbf16>, vector<8x128xf32> -> vector<8x128xf32>
    %548 = vector.broadcast %545 : vector<1x128xf32> to vector<8x128xf32>
    %549 = arith.addf %547, %548 : vector<8x128xf32>
    %550 = arith.addf %421, %549 : vector<8x128xf32>
    %c1_232 = arith.constant 1 : index
    %c2_233 = arith.constant 2 : index
    %c0_234 = arith.constant 0 : index
    %c0_235 = arith.constant 0 : index
    %551 = vector.load %arg3[%c1_232, %c2_233, %c0_234, %c0_235] : memref<2x3x1x128xf32, #tpu.memory_space<vmem>>, vector<1x1x1x128xf32>
    %552 = vector.shape_cast %551 : vector<1x1x1x128xf32> to vector<1x128xf32>
    %c1_236 = arith.constant 1 : index
    %c2_237 = arith.constant 2 : index
    %c0_238 = arith.constant 0 : index
    %c0_239 = arith.constant 0 : index
    %553 = vector.load %arg4[%c1_236, %c2_237, %c0_238, %c0_239] : memref<2x3x1x128xf32, #tpu.memory_space<vmem>>, vector<1x1x1x128xf32>
    %554 = vector.shape_cast %553 : vector<1x1x1x128xf32> to vector<1x128xf32>
    %cst_240 = arith.constant dense<0.000000e+00> : vector<8xf32>
    %555 = vector.multi_reduction <add>, %550, %cst_240 [1] : vector<8x128xf32> to vector<8xf32>
    %556 = vector.shape_cast %555 : vector<8xf32> to vector<8x1xf32>
    %cst_241 = arith.constant 1.280000e+02 : f32
    %557 = vector.broadcast %cst_241 : f32 to vector<8x1xf32>
    %558 = arith.divf %556, %557 : vector<8x1xf32>
    %559 = vector.broadcast %558 : vector<8x1xf32> to vector<8x128xf32>
    %560 = arith.subf %550, %559 : vector<8x128xf32>
    %561 = arith.mulf %560, %560 : vector<8x128xf32>
    %cst_242 = arith.constant dense<0.000000e+00> : vector<8xf32>
    %562 = vector.multi_reduction <add>, %561, %cst_242 [1] : vector<8x128xf32> to vector<8xf32>
    %563 = vector.shape_cast %562 : vector<8xf32> to vector<8x1xf32>
    %cst_243 = arith.constant 1.270000e+02 : f32
    %564 = vector.broadcast %cst_243 : f32 to vector<8x1xf32>
    %565 = arith.divf %563, %564 : vector<8x1xf32>
    %566 = math.sqrt %565 : vector<8x1xf32>
    %567 = vector.broadcast %558 : vector<8x1xf32> to vector<8x128xf32>
    %568 = arith.subf %550, %567 : vector<8x128xf32>
    %569 = vector.broadcast %552 : vector<1x128xf32> to vector<8x128xf32>
    %570 = arith.mulf %569, %568 : vector<8x128xf32>
    %cst_244 = arith.constant 9.99999997E-7 : f32
    %571 = vector.broadcast %cst_244 : f32 to vector<8x1xf32>
    %572 = arith.addf %566, %571 : vector<8x1xf32>
    %573 = vector.broadcast %572 : vector<8x1xf32> to vector<8x128xf32>
    %574 = arith.divf %570, %573 : vector<8x128xf32>
    %575 = vector.broadcast %554 : vector<1x128xf32> to vector<8x128xf32>
    %576 = arith.addf %574, %575 : vector<8x128xf32>
    %c1_245 = arith.constant 1 : index
    %c0_246 = arith.constant 0 : index
    %c0_247 = arith.constant 0 : index
    %577 = vector.load %arg15[%c1_245, %c0_246, %c0_247] : memref<2x128x256xbf16, #tpu.memory_space<vmem>>, vector<1x128x256xbf16>
    %578 = vector.shape_cast %577 : vector<1x128x256xbf16> to vector<128x256xbf16>
    %c1_248 = arith.constant 1 : index
    %c0_249 = arith.constant 0 : index
    %c0_250 = arith.constant 0 : index
    %579 = vector.load %arg16[%c1_248, %c0_249, %c0_250] : memref<2x1x256xf32, #tpu.memory_space<vmem>>, vector<1x1x256xf32>
    %580 = vector.shape_cast %579 : vector<1x1x256xf32> to vector<1x256xf32>
    %581 = arith.truncf %576 : vector<8x128xf32> to vector<8x128xbf16>
    %cst_251 = arith.constant dense<0.000000e+00> : vector<8x256xf32>
    %582 = tpu.matmul %581, %578, %cst_251 {dimension_numbers = #tpu.dot_dimension_numbers<[1], [0], [0], [1], [0, 0, 1, 1], [], []>} : vector<8x128xbf16>, vector<128x256xbf16>, vector<8x256xf32> -> vector<8x256xf32>
    %583 = vector.broadcast %580 : vector<1x256xf32> to vector<8x256xf32>
    %584 = arith.addf %582, %583 : vector<8x256xf32>
    %cst_252 = arith.constant 0.000000e+00 : f32
    %585 = vector.broadcast %cst_252 : f32 to vector<8x256xf32>
    %586 = arith.maximumf %584, %585 : vector<8x256xf32>
    %c1_253 = arith.constant 1 : index
    %c0_254 = arith.constant 0 : index
    %c0_255 = arith.constant 0 : index
    %587 = vector.load %arg17[%c1_253, %c0_254, %c0_255] : memref<2x256x128xbf16, #tpu.memory_space<vmem>>, vector<1x256x128xbf16>
    %588 = vector.shape_cast %587 : vector<1x256x128xbf16> to vector<256x128xbf16>
    %c1_256 = arith.constant 1 : index
    %c0_257 = arith.constant 0 : index
    %c0_258 = arith.constant 0 : index
    %589 = vector.load %arg18[%c1_256, %c0_257, %c0_258] : memref<2x1x128xf32, #tpu.memory_space<vmem>>, vector<1x1x128xf32>
    %590 = vector.shape_cast %589 : vector<1x1x128xf32> to vector<1x128xf32>
    %591 = arith.truncf %586 : vector<8x256xf32> to vector<8x256xbf16>
    %cst_259 = arith.constant dense<0.000000e+00> : vector<8x128xf32>
    %592 = tpu.matmul %591, %588, %cst_259 {dimension_numbers = #tpu.dot_dimension_numbers<[1], [0], [0], [1], [0, 0, 1, 1], [], []>} : vector<8x256xbf16>, vector<256x128xbf16>, vector<8x128xf32> -> vector<8x128xf32>
    %593 = vector.broadcast %590 : vector<1x128xf32> to vector<8x128xf32>
    %594 = arith.addf %592, %593 : vector<8x128xf32>
    %595 = arith.addf %550, %594 : vector<8x128xf32>
    %c0_260 = arith.constant 0 : index
    %c0_261 = arith.constant 0 : index
    %596 = vector.load %arg19[%c0_260, %c0_261] : memref<1x128xf32, #tpu.memory_space<vmem>>, vector<1x128xf32>
    %c0_262 = arith.constant 0 : index
    %c0_263 = arith.constant 0 : index
    %597 = vector.load %arg20[%c0_262, %c0_263] : memref<1x128xf32, #tpu.memory_space<vmem>>, vector<1x128xf32>
    %cst_264 = arith.constant dense<0.000000e+00> : vector<8xf32>
    %598 = vector.multi_reduction <add>, %595, %cst_264 [1] : vector<8x128xf32> to vector<8xf32>
    %599 = vector.shape_cast %598 : vector<8xf32> to vector<8x1xf32>
    %cst_265 = arith.constant 1.280000e+02 : f32
    %600 = vector.broadcast %cst_265 : f32 to vector<8x1xf32>
    %601 = arith.divf %599, %600 : vector<8x1xf32>
    %602 = vector.broadcast %601 : vector<8x1xf32> to vector<8x128xf32>
    %603 = arith.subf %595, %602 : vector<8x128xf32>
    %604 = arith.mulf %603, %603 : vector<8x128xf32>
    %cst_266 = arith.constant dense<0.000000e+00> : vector<8xf32>
    %605 = vector.multi_reduction <add>, %604, %cst_266 [1] : vector<8x128xf32> to vector<8xf32>
    %606 = vector.shape_cast %605 : vector<8xf32> to vector<8x1xf32>
    %cst_267 = arith.constant 1.270000e+02 : f32
    %607 = vector.broadcast %cst_267 : f32 to vector<8x1xf32>
    %608 = arith.divf %606, %607 : vector<8x1xf32>
    %609 = math.sqrt %608 : vector<8x1xf32>
    %610 = vector.broadcast %601 : vector<8x1xf32> to vector<8x128xf32>
    %611 = arith.subf %595, %610 : vector<8x128xf32>
    %612 = vector.broadcast %596 : vector<1x128xf32> to vector<8x128xf32>
    %613 = arith.mulf %612, %611 : vector<8x128xf32>
    %cst_268 = arith.constant 9.99999997E-7 : f32
    %614 = vector.broadcast %cst_268 : f32 to vector<8x1xf32>
    %615 = arith.addf %609, %614 : vector<8x1xf32>
    %616 = vector.broadcast %615 : vector<8x1xf32> to vector<8x128xf32>
    %617 = arith.divf %613, %616 : vector<8x128xf32>
    %618 = vector.broadcast %597 : vector<1x128xf32> to vector<8x128xf32>
    %619 = arith.addf %617, %618 : vector<8x128xf32>
    %c0_269 = arith.constant 0 : index
    %c0_270 = arith.constant 0 : index
    %c0_271 = arith.constant 0 : index
    %620 = vector.load %arg21[%c0_269, %c0_270, %c0_271] : memref<1x8x128xf32, #tpu.memory_space<vmem>>, vector<1x8x128xf32>
    %621 = vector.shape_cast %620 : vector<1x8x128xf32> to vector<8x128xf32>
    %622 = vector.shape_cast %619 : vector<8x128xf32> to vector<1x8x128xf32>
    tpu.vector_store %arg21[%c0_269, %c0_270, %c0_271], %622 {strides = array<i32>} : memref<1x8x128xf32, #tpu.memory_space<vmem>>, vector<1x8x128xf32>,
    return
  }
  func.func @transform_0(%arg0: i32) -> (i32, i32, i32) {
    %c0_i32 = arith.constant 0 : i32
    %c0_i32_0 = arith.constant 0 : i32
    %c0_i32_1 = arith.constant 0 : i32
    return %arg0, %c0_i32, %c0_i32_0 : i32, i32, i32
  }
  func.func @transform_1(%arg0: i32) -> (i32, i32, i32) {
    %c0_i32 = arith.constant 0 : i32
    %c0_i32_0 = arith.constant 0 : i32
    %c0_i32_1 = arith.constant 0 : i32
    return %arg0, %c0_i32, %c0_i32_0 : i32, i32, i32
  }
  func.func @transform_2(%arg0: i32) -> (i32, i32, i32, i32) {
    %c0_i32 = arith.constant 0 : i32
    %c0_i32_0 = arith.constant 0 : i32
    %c0_i32_1 = arith.constant 0 : i32
    %c0_i32_2 = arith.constant 0 : i32
    %c0_i32_3 = arith.constant 0 : i32
    return %c0_i32, %c0_i32_0, %c0_i32_1, %c0_i32_2 : i32, i32, i32, i32
  }
  func.func @transform_3(%arg0: i32) -> (i32, i32, i32, i32) {
    %c0_i32 = arith.constant 0 : i32
    %c0_i32_0 = arith.constant 0 : i32
    %c0_i32_1 = arith.constant 0 : i32
    %c0_i32_2 = arith.constant 0 : i32
    %c0_i32_3 = arith.constant 0 : i32
    return %c0_i32, %c0_i32_0, %c0_i32_1, %c0_i32_2 : i32, i32, i32, i32
  }
  func.func @transform_4(%arg0: i32) -> (i32, i32, i32) {
    %c0_i32 = arith.constant 0 : i32
    %c0_i32_0 = arith.constant 0 : i32
    %c0_i32_1 = arith.constant 0 : i32
    %c0_i32_2 = arith.constant 0 : i32
    return %c0_i32, %c0_i32_0, %c0_i32_1 : i32, i32, i32
  }
  func.func @transform_5(%arg0: i32) -> (i32, i32, i32) {
    %c0_i32 = arith.constant 0 : i32
    %c0_i32_0 = arith.constant 0 : i32
    %c0_i32_1 = arith.constant 0 : i32
    %c0_i32_2 = arith.constant 0 : i32
    return %c0_i32, %c0_i32_0, %c0_i32_1 : i32, i32, i32
  }
  func.func @transform_6(%arg0: i32) -> (i32, i32, i32) {
    %c0_i32 = arith.constant 0 : i32
    %c0_i32_0 = arith.constant 0 : i32
    %c0_i32_1 = arith.constant 0 : i32
    %c0_i32_2 = arith.constant 0 : i32
    return %c0_i32, %c0_i32_0, %c0_i32_1 : i32, i32, i32
  }
  func.func @transform_7(%arg0: i32) -> (i32, i32, i32) {
    %c0_i32 = arith.constant 0 : i32
    %c0_i32_0 = arith.constant 0 : i32
    %c0_i32_1 = arith.constant 0 : i32
    %c0_i32_2 = arith.constant 0 : i32
    return %c0_i32, %c0_i32_0, %c0_i32_1 : i32, i32, i32
  }
  func.func @transform_8(%arg0: i32) -> (i32, i32, i32) {
    %c0_i32 = arith.constant 0 : i32
    %c0_i32_0 = arith.constant 0 : i32
    %c0_i32_1 = arith.constant 0 : i32
    %c0_i32_2 = arith.constant 0 : i32
    return %c0_i32, %c0_i32_0, %c0_i32_1 : i32, i32, i32
  }
  func.func @transform_9(%arg0: i32) -> (i32, i32, i32) {
    %c0_i32 = arith.constant 0 : i32
    %c0_i32_0 = arith.constant 0 : i32
    %c0_i32_1 = arith.constant 0 : i32
    %c0_i32_2 = arith.constant 0 : i32
    return %c0_i32, %c0_i32_0, %c0_i32_1 : i32, i32, i32
  }
  func.func @transform_10(%arg0: i32) -> (i32, i32, i32) {
    %c0_i32 = arith.constant 0 : i32
    %c0_i32_0 = arith.constant 0 : i32
    %c0_i32_1 = arith.constant 0 : i32
    %c0_i32_2 = arith.constant 0 : i32
    return %c0_i32, %c0_i32_0, %c0_i32_1 : i32, i32, i32
  }
  func.func @transform_11(%arg0: i32) -> (i32, i32, i32) {
    %c0_i32 = arith.constant 0 : i32
    %c0_i32_0 = arith.constant 0 : i32
    %c0_i32_1 = arith.constant 0 : i32
    %c0_i32_2 = arith.constant 0 : i32
    return %c0_i32, %c0_i32_0, %c0_i32_1 : i32, i32, i32
  }
  func.func @transform_12(%arg0: i32) -> (i32, i32, i32) {
    %c0_i32 = arith.constant 0 : i32
    %c0_i32_0 = arith.constant 0 : i32
    %c0_i32_1 = arith.constant 0 : i32
    %c0_i32_2 = arith.constant 0 : i32
    return %c0_i32, %c0_i32_0, %c0_i32_1 : i32, i32, i32
  }
  func.func @transform_13(%arg0: i32) -> (i32, i32, i32) {
    %c0_i32 = arith.constant 0 : i32
    %c0_i32_0 = arith.constant 0 : i32
    %c0_i32_1 = arith.constant 0 : i32
    %c0_i32_2 = arith.constant 0 : i32
    return %c0_i32, %c0_i32_0, %c0_i32_1 : i32, i32, i32
  }
  func.func @transform_14(%arg0: i32) -> (i32, i32, i32) {
    %c0_i32 = arith.constant 0 : i32
    %c0_i32_0 = arith.constant 0 : i32
    %c0_i32_1 = arith.constant 0 : i32
    %c0_i32_2 = arith.constant 0 : i32
    return %c0_i32, %c0_i32_0, %c0_i32_1 : i32, i32, i32
  }
  func.func @transform_15(%arg0: i32) -> (i32, i32, i32) {
    %c0_i32 = arith.constant 0 : i32
    %c0_i32_0 = arith.constant 0 : i32
    %c0_i32_1 = arith.constant 0 : i32
    %c0_i32_2 = arith.constant 0 : i32
    return %c0_i32, %c0_i32_0, %c0_i32_1 : i32, i32, i32
  }
  func.func @transform_16(%arg0: i32) -> (i32, i32, i32) {
    %c0_i32 = arith.constant 0 : i32
    %c0_i32_0 = arith.constant 0 : i32
    %c0_i32_1 = arith.constant 0 : i32
    %c0_i32_2 = arith.constant 0 : i32
    return %c0_i32, %c0_i32_0, %c0_i32_1 : i32, i32, i32
  }
  func.func @transform_17(%arg0: i32) -> (i32, i32, i32) {
    %c0_i32 = arith.constant 0 : i32
    %c0_i32_0 = arith.constant 0 : i32
    %c0_i32_1 = arith.constant 0 : i32
    %c0_i32_2 = arith.constant 0 : i32
    return %c0_i32, %c0_i32_0, %c0_i32_1 : i32, i32, i32
  }
  func.func @transform_18(%arg0: i32) -> (i32, i32) {
    %c0_i32 = arith.constant 0 : i32
    %c0_i32_0 = arith.constant 0 : i32
    %c0_i32_1 = arith.constant 0 : i32
    return %c0_i32, %c0_i32_0 : i32, i32
  }
  func.func @transform_19(%arg0: i32) -> (i32, i32) {
    %c0_i32 = arith.constant 0 : i32
    %c0_i32_0 = arith.constant 0 : i32
    %c0_i32_1 = arith.constant 0 : i32
    return %c0_i32, %c0_i32_0 : i32, i32
  }
  func.func @transform_20(%arg0: i32) -> (i32, i32, i32) {
    %c0_i32 = arith.constant 0 : i32
    %c0_i32_0 = arith.constant 0 : i32
    %c0_i32_1 = arith.constant 0 : i32
    return %arg0, %c0_i32, %c0_i32_0 : i32, i32, i32
  }
}

</mosaic_0001>

<llo_original>
// kernel: attention_submodel_forward.1
$region0: #{attention_submodel_forward.1}
  #allocation0 [shape = 'u32[]', space=smem, size = 0x4, offset = 0x4, fixed_abs, tag = 'smem constant byte address 0x4 - core index']
  #allocation1 [shape = 'u32[144,128]{1,0:T(1,128)}', space=vmem, size = 0x12000, scoped, tag = 'internal scratch']
  %s0 = inlined_call_operand.vmem [shape: f32[2,8,128], index: 0, kind: input, shape index: {}]
  %s1 = inlined_call_operand.vmem [shape: f32[2,16,128], index: 1, kind: input, shape index: {}]
  %s2 = inlined_call_operand.vmem [shape: f32[2,3,1,128], index: 2, kind: input, shape index: {}]
  %s3 = inlined_call_operand.vmem [shape: f32[2,3,1,128], index: 3, kind: input, shape index: {}]
  %s4 = inlined_call_operand.hbm [shape: bf16[2,128,384], index: 4, kind: input, shape index: {}]
  %s5 = inlined_call_operand.hbm [shape: f32[2,1,384], index: 5, kind: input, shape index: {}]
  %s6 = inlined_call_operand.hbm [shape: bf16[2,128,128], index: 6, kind: input, shape index: {}]
  %s7 = inlined_call_operand.vmem [shape: f32[2,1,128], index: 7, kind: input, shape index: {}]
  %s8 = inlined_call_operand.hbm [shape: bf16[2,128,128], index: 8, kind: input, shape index: {}]
  %s9 = inlined_call_operand.hbm [shape: f32[2,1,128], index: 9, kind: input, shape index: {}]
  %s10 = inlined_call_operand.hbm [shape: bf16[2,128,256], index: 10, kind: input, shape index: {}]
  %s11 = inlined_call_operand.hbm [shape: f32[2,1,256], index: 11, kind: input, shape index: {}]
  %s12 = inlined_call_operand.hbm [shape: bf16[2,128,128], index: 12, kind: input, shape index: {}]
  %s13 = inlined_call_operand.hbm [shape: f32[2,1,128], index: 13, kind: input, shape index: {}]
  %s14 = inlined_call_operand.hbm [shape: bf16[2,128,256], index: 14, kind: input, shape index: {}]
  %s15 = inlined_call_operand.hbm [shape: f32[2,1,256], index: 15, kind: input, shape index: {}]
  %s16 = inlined_call_operand.hbm [shape: bf16[2,256,128], index: 16, kind: input, shape index: {}]
  %s17 = inlined_call_operand.hbm [shape: f32[2,1,128], index: 17, kind: input, shape index: {}]
  %s18 = inlined_call_operand.hbm [shape: f32[1,128], index: 18, kind: input, shape index: {}]
  %s19 = inlined_call_operand.hbm [shape: f32[1,128], index: 19, kind: input, shape index: {}]
  %s20 = inlined_call_operand.hbm [shape: f32[2,8,128], index: 20, kind: output, shape index: {}]
  %s21 = sld [smem:[#allocation0]]
  $region173: #{attention_submodel_forward.1} parent=0
    _
  %s23 = ssub.s32 1, %s21
  %s24 = scalar_select 0, %s23, %s21
  $region1: #{attention_submodel_forward.1} parent=0
    #allocation2 [shape = 'u8[196608]{0}', space=vmem, size = 0x30000, scoped, tag = 'input window, operand 4, single buffered']
    #allocation3 [shape = 's32[2]{0}', space=sflag, size = 0x8, scoped, tag = 'scoped memory for attention_submodel_forward.1']
    #allocation4 [shape = 's32[2]{0}', space=sflag, size = 0x8, scoped, tag = 'scoped memory for attention_submodel_forward.1']
    #allocation5 [shape = 'u8[3072]{0}', space=vmem, size = 0xc00, scoped, tag = 'input window, operand 5, single buffered']
    #allocation6 [shape = 's32[1]{0}', space=sflag, size = 0x4, scoped, tag = 'scoped memory for attention_submodel_forward.1']
    #allocation7 [shape = 'u8[65536]{0}', space=vmem, size = 0x10000, scoped, tag = 'input window, operand 6, single buffered']
    #allocation8 [shape = 'u8[65536]{0}', space=vmem, size = 0x10000, scoped, tag = 'input window, operand 8, single buffered']
    #allocation9 [shape = 's32[1]{0}', space=sflag, size = 0x4, scoped, tag = 'scoped memory for attention_submodel_forward.1']
    #allocation10 [shape = 'u8[1024]{0}', space=vmem, size = 0x400, scoped, tag = 'input window, operand 9, single buffered']
    #allocation11 [shape = 'u8[131072]{0}', space=vmem, size = 0x20000, scoped, tag = 'input window, operand 10, single buffered']
    #allocation12 [shape = 's32[1]{0}', space=sflag, size = 0x4, scoped, tag = 'scoped memory for attention_submodel_forward.1']
    #allocation13 [shape = 'u8[2048]{0}', space=vmem, size = 0x800, scoped, tag = 'input window, operand 11, single buffered']
    #allocation14 [shape = 'u8[65536]{0}', space=vmem, size = 0x10000, scoped, tag = 'input window, operand 12, single buffered']
    #allocation15 [shape = 's32[1]{0}', space=sflag, size = 0x4, scoped, tag = 'scoped memory for attention_submodel_forward.1']
    #allocation16 [shape = 'u8[1024]{0}', space=vmem, size = 0x400, scoped, tag = 'input window, operand 13, single buffered']
    #allocation17 [shape = 'u8[131072]{0}', space=vmem, size = 0x20000, scoped, tag = 'input window, operand 14, single buffered']
    #allocation18 [shape = 's32[1]{0}', space=sflag, size = 0x4, scoped, tag = 'scoped memory for attention_submodel_forward.1']
    #allocation19 [shape = 'u8[2048]{0}', space=vmem, size = 0x800, scoped, tag = 'input window, operand 15, single buffered']
    #allocation20 [shape = 'u8[131072]{0}', space=vmem, size = 0x20000, scoped, tag = 'input window, operand 16, single buffered']
    #allocation21 [shape = 's32[1]{0}', space=sflag, size = 0x4, scoped, tag = 'scoped memory for attention_submodel_forward.1']
    #allocation22 [shape = 'u8[1024]{0}', space=vmem, size = 0x400, scoped, tag = 'input window, operand 17, single buffered']
    #allocation23 [shape = 'u8[512]{0}', space=vmem, size = 0x400, scoped, tag = 'input window, operand 18, single buffered']
    #allocation24 [shape = 's32[1]{0}', space=sflag, size = 0x4, scoped, tag = 'scoped memory for attention_submodel_forward.1']
    #allocation25 [shape = 'u8[512]{0}', space=vmem, size = 0x400, scoped, tag = 'input window, operand 19, single buffered']
    #allocation26 [shape = 'u8[8192]{0}', space=vmem, size = 0x2000, scoped, tag = 'output window, operand 0']
    %25 = vsyncpa [#allocation3], 0
    %26 = vsyncpa [#allocation6], 0
    %27 = vsyncpa [#allocation9], 0
    %28 = vsyncpa [#allocation12], 0
    %29 = vsyncpa [#allocation15], 0
    %30 = vsyncpa [#allocation18], 0
    %31 = vsyncpa [#allocation21], 0
    %32 = vsyncpa [#allocation24], 0
    %33 = vsyncpa [#allocation4], 0
    %s34 = scalar_lea.sflag [#allocation4], 1
    %35 = vsyncpa %s34, 0
    loop: start=0, step=1, limit=4
    $region2: #{attention_submodel_forward.1} parent=1 // loop_pre_header
      _
    $region3: #{attention_submodel_forward.1} parent=1 // loop_header
      %s37 = sphi 0, %s41
      %p38 = scmp.ge.s32.totalorder %s37, 4
      %s47 = sphi 0, %s49
      %s50 = sphi 0, %s47
      %s51 = sphi 0, %s50
      %s67 = sphi 0, %s51
      %s73 = sphi 0, %s75
      %s76 = sphi 0, %s73
      %s77 = sphi 0, %s76
      %s93 = sphi 0, %s77
      %s97 = sphi 0, %s97
      %s99 = sphi 0, %s97
      %s100 = sphi 0, %s99
      %s114 = sphi 0, %s100
      %s118 = sphi 0, %s118
      %s120 = sphi 0, %s118
      %s121 = sphi 0, %s120
      %s135 = sphi 0, %s121
      %s139 = sphi 0, %s139
      %s141 = sphi 0, %s139
      %s142 = sphi 0, %s141
      %s156 = sphi 0, %s142
      %s160 = sphi 0, %s160
      %s162 = sphi 0, %s160
      %s163 = sphi 0, %s162
      %s177 = sphi 0, %s163
      %s181 = sphi 0, %s181
      %s183 = sphi 0, %s181
      %s184 = sphi 0, %s183
      %s198 = sphi 0, %s184
      %s202 = sphi 0, %s202
      %s204 = sphi 0, %s202
      %s205 = sphi 0, %s204
      %s219 = sphi 0, %s205
      %s223 = sphi 0, %s223
      %s225 = sphi 0, %s223
      %s226 = sphi 0, %s225
      %s240 = sphi 0, %s226
      %s244 = sphi 0, %s244
      %s246 = sphi 0, %s244
      %s247 = sphi 0, %s246
      %s261 = sphi 0, %s247
      %s265 = sphi 0, %s265
      %s267 = sphi 0, %s265
      %s268 = sphi 0, %s267
      %s282 = sphi 0, %s268
      %s286 = sphi 0, %s286
      %s288 = sphi 0, %s286
      %s289 = sphi 0, %s288
      %s303 = sphi 0, %s289
      %s307 = sphi 0, %s307
      %s309 = sphi 0, %s307
      %s310 = sphi 0, %s309
      %s324 = sphi 0, %s310
      %s328 = sphi 0, %s328
      %s330 = sphi 0, %s328
      %s331 = sphi 0, %s330
      %s345 = sphi 0, %s331
      %s349 = sphi 0, %s349
      %s351 = sphi 0, %s349
      %s352 = sphi 0, %s351
      %s366 = sphi 0, %s352
      %s370 = sphi 0, %s370
      %s372 = sphi 0, %s370
      %s373 = sphi 0, %s372
      %s387 = sphi 0, %s373
      %s391 = sphi 0, %s391
      %s393 = sphi 0, %s391
      %s394 = sphi 0, %s393
      %s408 = sphi 0, %s394
      %s412 = sphi 0, %s412
      %s414 = sphi 0, %s412
      %s415 = sphi 0, %s414
      %s429 = sphi 0, %s415
      %s433 = sphi 0, %s433
      %s435 = sphi 0, %s433
      %s436 = sphi 0, %s435
      %s450 = sphi 0, %s436
      %s454 = sphi 0, %s454
      %s456 = sphi 0, %s454
      %s457 = sphi 0, %s456
      %s471 = sphi 0, %s457
      %s477 = sphi 0, %s479
      %s480 = sphi 0, %s477
      %s481 = sphi 0, %s480
      %s497 = sphi 0, %s481
    $region4: #{attention_submodel_forward.1} parent=1 // loop_header_branch
      %40 = sbr.rel (%p38) target = $region8
    $region5: #{attention_submodel_forward.1} parent=1 // loop_body
      %s42 = ssub.s32 %s37, 1
      %s43 = ssub.s32 %s37, 2
      %s44 = sadd.s32 %s37, 1
      %s45 = ssub.s32 %s37, %s44
      %p46 = scmp.eq.s32.totalorder %s45, 0
      %s48 = sadd.s32 %s47, 1
      %s49 = scalar_select %p46, %s47, %s48
      %p52 = pneg %p46
      %p53 = scmp.eq.s32.totalorder %s37, 1
      %p54 = por %p52, %p53
      %p55 = scmp.ne.s32.totalorder %s47, %s50
      %p56 = scmp.eq.s32.totalorder %s37, 0
      %p57 = por %p55, %p56
      %p58 = scmp.ne.s32.totalorder %s47, %s50
      %p59 = scmp.eq.s32.totalorder %s42, 1
      %p60 = por %p58, %p59
      %p61 = scmp.ne.s32.totalorder %s50, %s51
      %p62 = scmp.eq.s32.totalorder %s42, 0
      %p63 = por %p61, %p62
      %p64 = scmp.ne.s32.totalorder %s50, %s51
      %p65 = scmp.eq.s32.totalorder %s43, 1
      %p66 = por %p64, %p65
      %p68 = scmp.ne.s32.totalorder %s51, %s67
      %p69 = scmp.eq.s32.totalorder %s43, 0
      %p70 = por %p68, %p69
      %s71 = ssub.s32 %s37, %s44
      %p72 = scmp.eq.s32.totalorder %s71, 0
      %s74 = sadd.s32 %s73, 1
      %s75 = scalar_select %p72, %s73, %s74
      %p78 = pneg %p72
      %p79 = scmp.eq.s32.totalorder %s37, 1
      %p80 = por %p78, %p79
      %p81 = scmp.ne.s32.totalorder %s73, %s76
      %p82 = scmp.eq.s32.totalorder %s37, 0
      %p83 = por %p81, %p82
      %p84 = scmp.ne.s32.totalorder %s73, %s76
      %p85 = scmp.eq.s32.totalorder %s42, 1
      %p86 = por %p84, %p85
      %p87 = scmp.ne.s32.totalorder %s76, %s77
      %p88 = scmp.eq.s32.totalorder %s42, 0
      %p89 = por %p87, %p88
      %p90 = scmp.ne.s32.totalorder %s76, %s77
      %p91 = scmp.eq.s32.totalorder %s43, 1
      %p92 = por %p90, %p91
      %p94 = scmp.ne.s32.totalorder %s77, %s93
      %p95 = scmp.eq.s32.totalorder %s43, 0
      %p96 = por %p94, %p95
      %s98 = sadd.s32 %s97, 1
      %p101 = scmp.eq.s32.totalorder %s37, 1
      %p102 = scmp.ne.s32.totalorder %s97, %s99
      %p103 = scmp.eq.s32.totalorder %s37, 0
      %p104 = por %p102, %p103
      %p105 = scmp.ne.s32.totalorder %s97, %s99
      %p106 = scmp.eq.s32.totalorder %s42, 1
      %p107 = por %p105, %p106
      %p108 = scmp.ne.s32.totalorder %s99, %s100
      %p109 = scmp.eq.s32.totalorder %s42, 0
      %p110 = por %p108, %p109
      %p111 = scmp.ne.s32.totalorder %s99, %s100
      %p112 = scmp.eq.s32.totalorder %s43, 1
      %p113 = por %p111, %p112
      %p115 = scmp.ne.s32.totalorder %s100, %s114
      %p116 = scmp.eq.s32.totalorder %s43, 0
      %p117 = por %p115, %p116
      %s119 = sadd.s32 %s118, 1
      %p122 = scmp.eq.s32.totalorder %s37, 1
      %p123 = scmp.ne.s32.totalorder %s118, %s120
      %p124 = scmp.eq.s32.totalorder %s37, 0
      %p125 = por %p123, %p124
      %p126 = scmp.ne.s32.totalorder %s118, %s120
      %p127 = scmp.eq.s32.totalorder %s42, 1
      %p128 = por %p126, %p127
      %p129 = scmp.ne.s32.totalorder %s120, %s121
      %p130 = scmp.eq.s32.totalorder %s42, 0
      %p131 = por %p129, %p130
      %p132 = scmp.ne.s32.totalorder %s120, %s121
      %p133 = scmp.eq.s32.totalorder %s43, 1
      %p134 = por %p132, %p133
      %p136 = scmp.ne.s32.totalorder %s121, %s135
      %p137 = scmp.eq.s32.totalorder %s43, 0
      %p138 = por %p136, %p137
      %s140 = sadd.s32 %s139, 1
      %p143 = scmp.eq.s32.totalorder %s37, 1
      %p144 = scmp.ne.s32.totalorder %s139, %s141
      %p145 = scmp.eq.s32.totalorder %s37, 0
      %p146 = por %p144, %p145
      %p147 = scmp.ne.s32.totalorder %s139, %s141
      %p148 = scmp.eq.s32.totalorder %s42, 1
      %p149 = por %p147, %p148
      %p150 = scmp.ne.s32.totalorder %s141, %s142
      %p151 = scmp.eq.s32.totalorder %s42, 0
      %p152 = por %p150, %p151
      %p153 = scmp.ne.s32.totalorder %s141, %s142
      %p154 = scmp.eq.s32.totalorder %s43, 1
      %p155 = por %p153, %p154
      %p157 = scmp.ne.s32.totalorder %s142, %s156
      %p158 = scmp.eq.s32.totalorder %s43, 0
      %p159 = por %p157, %p158
      %s161 = sadd.s32 %s160, 1
      %p164 = scmp.eq.s32.totalorder %s37, 1
      %p165 = scmp.ne.s32.totalorder %s160, %s162
      %p166 = scmp.eq.s32.totalorder %s37, 0
      %p167 = por %p165, %p166
      %p168 = scmp.ne.s32.totalorder %s160, %s162
      %p169 = scmp.eq.s32.totalorder %s42, 1
      %p170 = por %p168, %p169
      %p171 = scmp.ne.s32.totalorder %s162, %s163
      %p172 = scmp.eq.s32.totalorder %s42, 0
      %p173 = por %p171, %p172
      %p174 = scmp.ne.s32.totalorder %s162, %s163
      %p175 = scmp.eq.s32.totalorder %s43, 1
      %p176 = por %p174, %p175
      %p178 = scmp.ne.s32.totalorder %s163, %s177
      %p179 = scmp.eq.s32.totalorder %s43, 0
      %p180 = por %p178, %p179
      %s182 = sadd.s32 %s181, 1
      %p185 = scmp.eq.s32.totalorder %s37, 1
      %p186 = scmp.ne.s32.totalorder %s181, %s183
      %p187 = scmp.eq.s32.totalorder %s37, 0
      %p188 = por %p186, %p187
      %p189 = scmp.ne.s32.totalorder %s181, %s183
      %p190 = scmp.eq.s32.totalorder %s42, 1
      %p191 = por %p189, %p190
      %p192 = scmp.ne.s32.totalorder %s183, %s184
      %p193 = scmp.eq.s32.totalorder %s42, 0
      %p194 = por %p192, %p193
      %p195 = scmp.ne.s32.totalorder %s183, %s184
      %p196 = scmp.eq.s32.totalorder %s43, 1
      %p197 = por %p195, %p196
      %p199 = scmp.ne.s32.totalorder %s184, %s198
      %p200 = scmp.eq.s32.totalorder %s43, 0
      %p201 = por %p199, %p200
      %s203 = sadd.s32 %s202, 1
      %p206 = scmp.eq.s32.totalorder %s37, 1
      %p207 = scmp.ne.s32.totalorder %s202, %s204
      %p208 = scmp.eq.s32.totalorder %s37, 0
      %p209 = por %p207, %p208
      %p210 = scmp.ne.s32.totalorder %s202, %s204
      %p211 = scmp.eq.s32.totalorder %s42, 1
      %p212 = por %p210, %p211
      %p213 = scmp.ne.s32.totalorder %s204, %s205
      %p214 = scmp.eq.s32.totalorder %s42, 0
      %p215 = por %p213, %p214
      %p216 = scmp.ne.s32.totalorder %s204, %s205
      %p217 = scmp.eq.s32.totalorder %s43, 1
      %p218 = por %p216, %p217
      %p220 = scmp.ne.s32.totalorder %s205, %s219
      %p221 = scmp.eq.s32.totalorder %s43, 0
      %p222 = por %p220, %p221
      %s224 = sadd.s32 %s223, 1
      %p227 = scmp.eq.s32.totalorder %s37, 1
      %p228 = scmp.ne.s32.totalorder %s223, %s225
      %p229 = scmp.eq.s32.totalorder %s37, 0
      %p230 = por %p228, %p229
      %p231 = scmp.ne.s32.totalorder %s223, %s225
      %p232 = scmp.eq.s32.totalorder %s42, 1
      %p233 = por %p231, %p232
      %p234 = scmp.ne.s32.totalorder %s225, %s226
      %p235 = scmp.eq.s32.totalorder %s42, 0
      %p236 = por %p234, %p235
      %p237 = scmp.ne.s32.totalorder %s225, %s226
      %p238 = scmp.eq.s32.totalorder %s43, 1
      %p239 = por %p237, %p238
      %p241 = scmp.ne.s32.totalorder %s226, %s240
      %p242 = scmp.eq.s32.totalorder %s43, 0
      %p243 = por %p241, %p242
      %s245 = sadd.s32 %s244, 1
      %p248 = scmp.eq.s32.totalorder %s37, 1
      %p249 = scmp.ne.s32.totalorder %s244, %s246
      %p250 = scmp.eq.s32.totalorder %s37, 0
      %p251 = por %p249, %p250
      %p252 = scmp.ne.s32.totalorder %s244, %s246
      %p253 = scmp.eq.s32.totalorder %s42, 1
      %p254 = por %p252, %p253
      %p255 = scmp.ne.s32.totalorder %s246, %s247
      %p256 = scmp.eq.s32.totalorder %s42, 0
      %p257 = por %p255, %p256
      %p258 = scmp.ne.s32.totalorder %s246, %s247
      %p259 = scmp.eq.s32.totalorder %s43, 1
      %p260 = por %p258, %p259
      %p262 = scmp.ne.s32.totalorder %s247, %s261
      %p263 = scmp.eq.s32.totalorder %s43, 0
      %p264 = por %p262, %p263
      %s266 = sadd.s32 %s265, 1
      %p269 = scmp.eq.s32.totalorder %s37, 1
      %p270 = scmp.ne.s32.totalorder %s265, %s267
      %p271 = scmp.eq.s32.totalorder %s37, 0
      %p272 = por %p270, %p271
      %p273 = scmp.ne.s32.totalorder %s265, %s267
      %p274 = scmp.eq.s32.totalorder %s42, 1
      %p275 = por %p273, %p274
      %p276 = scmp.ne.s32.totalorder %s267, %s268
      %p277 = scmp.eq.s32.totalorder %s42, 0
      %p278 = por %p276, %p277
      %p279 = scmp.ne.s32.totalorder %s267, %s268
      %p280 = scmp.eq.s32.totalorder %s43, 1
      %p281 = por %p279, %p280
      %p283 = scmp.ne.s32.totalorder %s268, %s282
      %p284 = scmp.eq.s32.totalorder %s43, 0
      %p285 = por %p283, %p284
      %s287 = sadd.s32 %s286, 1
      %p290 = scmp.eq.s32.totalorder %s37, 1
      %p291 = scmp.ne.s32.totalorder %s286, %s288
      %p292 = scmp.eq.s32.totalorder %s37, 0
      %p293 = por %p291, %p292
      %p294 = scmp.ne.s32.totalorder %s286, %s288
      %p295 = scmp.eq.s32.totalorder %s42, 1
      %p296 = por %p294, %p295
      %p297 = scmp.ne.s32.totalorder %s288, %s289
      %p298 = scmp.eq.s32.totalorder %s42, 0
      %p299 = por %p297, %p298
      %p300 = scmp.ne.s32.totalorder %s288, %s289
      %p301 = scmp.eq.s32.totalorder %s43, 1
      %p302 = por %p300, %p301
      %p304 = scmp.ne.s32.totalorder %s289, %s303
      %p305 = scmp.eq.s32.totalorder %s43, 0
      %p306 = por %p304, %p305
      %s308 = sadd.s32 %s307, 1
      %p311 = scmp.eq.s32.totalorder %s37, 1
      %p312 = scmp.ne.s32.totalorder %s307, %s309
      %p313 = scmp.eq.s32.totalorder %s37, 0
      %p314 = por %p312, %p313
      %p315 = scmp.ne.s32.totalorder %s307, %s309
      %p316 = scmp.eq.s32.totalorder %s42, 1
      %p317 = por %p315, %p316
      %p318 = scmp.ne.s32.totalorder %s309, %s310
      %p319 = scmp.eq.s32.totalorder %s42, 0
      %p320 = por %p318, %p319
      %p321 = scmp.ne.s32.totalorder %s309, %s310
      %p322 = scmp.eq.s32.totalorder %s43, 1
      %p323 = por %p321, %p322
      %p325 = scmp.ne.s32.totalorder %s310, %s324
      %p326 = scmp.eq.s32.totalorder %s43, 0
      %p327 = por %p325, %p326
      %s329 = sadd.s32 %s328, 1
      %p332 = scmp.eq.s32.totalorder %s37, 1
      %p333 = scmp.ne.s32.totalorder %s328, %s330
      %p334 = scmp.eq.s32.totalorder %s37, 0
      %p335 = por %p333, %p334
      %p336 = scmp.ne.s32.totalorder %s328, %s330
      %p337 = scmp.eq.s32.totalorder %s42, 1
      %p338 = por %p336, %p337
      %p339 = scmp.ne.s32.totalorder %s330, %s331
      %p340 = scmp.eq.s32.totalorder %s42, 0
      %p341 = por %p339, %p340
      %p342 = scmp.ne.s32.totalorder %s330, %s331
      %p343 = scmp.eq.s32.totalorder %s43, 1
      %p344 = por %p342, %p343
      %p346 = scmp.ne.s32.totalorder %s331, %s345
      %p347 = scmp.eq.s32.totalorder %s43, 0
      %p348 = por %p346, %p347
      %s350 = sadd.s32 %s349, 1
      %p353 = scmp.eq.s32.totalorder %s37, 1
      %p354 = scmp.ne.s32.totalorder %s349, %s351
      %p355 = scmp.eq.s32.totalorder %s37, 0
      %p356 = por %p354, %p355
      %p357 = scmp.ne.s32.totalorder %s349, %s351
      %p358 = scmp.eq.s32.totalorder %s42, 1
      %p359 = por %p357, %p358
      %p360 = scmp.ne.s32.totalorder %s351, %s352
      %p361 = scmp.eq.s32.totalorder %s42, 0
      %p362 = por %p360, %p361
      %p363 = scmp.ne.s32.totalorder %s351, %s352
      %p364 = scmp.eq.s32.totalorder %s43, 1
      %p365 = por %p363, %p364
      %p367 = scmp.ne.s32.totalorder %s352, %s366
      %p368 = scmp.eq.s32.totalorder %s43, 0
      %p369 = por %p367, %p368
      %s371 = sadd.s32 %s370, 1
      %p374 = scmp.eq.s32.totalorder %s37, 1
      %p375 = scmp.ne.s32.totalorder %s370, %s372
      %p376 = scmp.eq.s32.totalorder %s37, 0
      %p377 = por %p375, %p376
      %p378 = scmp.ne.s32.totalorder %s370, %s372
      %p379 = scmp.eq.s32.totalorder %s42, 1
      %p380 = por %p378, %p379
      %p381 = scmp.ne.s32.totalorder %s372, %s373
      %p382 = scmp.eq.s32.totalorder %s42, 0
      %p383 = por %p381, %p382
      %p384 = scmp.ne.s32.totalorder %s372, %s373
      %p385 = scmp.eq.s32.totalorder %s43, 1
      %p386 = por %p384, %p385
      %p388 = scmp.ne.s32.totalorder %s373, %s387
      %p389 = scmp.eq.s32.totalorder %s43, 0
      %p390 = por %p388, %p389
      %s392 = sadd.s32 %s391, 1
      %p395 = scmp.eq.s32.totalorder %s37, 1
      %p396 = scmp.ne.s32.totalorder %s391, %s393
      %p397 = scmp.eq.s32.totalorder %s37, 0
      %p398 = por %p396, %p397
      %p399 = scmp.ne.s32.totalorder %s391, %s393
      %p400 = scmp.eq.s32.totalorder %s42, 1
      %p401 = por %p399, %p400
      %p402 = scmp.ne.s32.totalorder %s393, %s394
      %p403 = scmp.eq.s32.totalorder %s42, 0
      %p404 = por %p402, %p403
      %p405 = scmp.ne.s32.totalorder %s393, %s394
      %p406 = scmp.eq.s32.totalorder %s43, 1
      %p407 = por %p405, %p406
      %p409 = scmp.ne.s32.totalorder %s394, %s408
      %p410 = scmp.eq.s32.totalorder %s43, 0
      %p411 = por %p409, %p410
      %s413 = sadd.s32 %s412, 1
      %p416 = scmp.eq.s32.totalorder %s37, 1
      %p417 = scmp.ne.s32.totalorder %s412, %s414
      %p418 = scmp.eq.s32.totalorder %s37, 0
      %p419 = por %p417, %p418
      %p420 = scmp.ne.s32.totalorder %s412, %s414
      %p421 = scmp.eq.s32.totalorder %s42, 1
      %p422 = por %p420, %p421
      %p423 = scmp.ne.s32.totalorder %s414, %s415
      %p424 = scmp.eq.s32.totalorder %s42, 0
      %p425 = por %p423, %p424
      %p426 = scmp.ne.s32.totalorder %s414, %s415
      %p427 = scmp.eq.s32.totalorder %s43, 1
      %p428 = por %p426, %p427
      %p430 = scmp.ne.s32.totalorder %s415, %s429
      %p431 = scmp.eq.s32.totalorder %s43, 0
      %p432 = por %p430, %p431
      %s434 = sadd.s32 %s433, 1
      %p437 = scmp.eq.s32.totalorder %s37, 1
      %p438 = scmp.ne.s32.totalorder %s433, %s435
      %p439 = scmp.eq.s32.totalorder %s37, 0
      %p440 = por %p438, %p439
      %p441 = scmp.ne.s32.totalorder %s433, %s435
      %p442 = scmp.eq.s32.totalorder %s42, 1
      %p443 = por %p441, %p442
      %p444 = scmp.ne.s32.totalorder %s435, %s436
      %p445 = scmp.eq.s32.totalorder %s42, 0
      %p446 = por %p444, %p445
      %p447 = scmp.ne.s32.totalorder %s435, %s436
      %p448 = scmp.eq.s32.totalorder %s43, 1
      %p449 = por %p447, %p448
      %p451 = scmp.ne.s32.totalorder %s436, %s450
      %p452 = scmp.eq.s32.totalorder %s43, 0
      %p453 = por %p451, %p452
      %s455 = sadd.s32 %s454, 1
      %p458 = scmp.eq.s32.totalorder %s37, 1
      %p459 = scmp.ne.s32.totalorder %s454, %s456
      %p460 = scmp.eq.s32.totalorder %s37, 0
      %p461 = por %p459, %p460
      %p462 = scmp.ne.s32.totalorder %s454, %s456
      %p463 = scmp.eq.s32.totalorder %s42, 1
      %p464 = por %p462, %p463
      %p465 = scmp.ne.s32.totalorder %s456, %s457
      %p466 = scmp.eq.s32.totalorder %s42, 0
      %p467 = por %p465, %p466
      %p468 = scmp.ne.s32.totalorder %s456, %s457
      %p469 = scmp.eq.s32.totalorder %s43, 1
      %p470 = por %p468, %p469
      %p472 = scmp.ne.s32.totalorder %s457, %s471
      %p473 = scmp.eq.s32.totalorder %s43, 0
      %p474 = por %p472, %p473
      %s475 = ssub.s32 %s37, %s44
      %p476 = scmp.eq.s32.totalorder %s475, 0
      %s478 = sadd.s32 %s477, 1
      %s479 = scalar_select %p476, %s477, %s478
      %p482 = pneg %p476
      %p483 = scmp.eq.s32.totalorder %s37, 1
      %p484 = por %p482, %p483
      %p485 = scmp.ne.s32.totalorder %s477, %s480
      %p486 = scmp.eq.s32.totalorder %s37, 0
      %p487 = por %p485, %p486
      %p488 = scmp.ne.s32.totalorder %s477, %s480
      %p489 = scmp.eq.s32.totalorder %s42, 1
      %p490 = por %p488, %p489
      %p491 = scmp.ne.s32.totalorder %s480, %s481
      %p492 = scmp.eq.s32.totalorder %s42, 0
      %p493 = por %p491, %p492
      %p494 = scmp.ne.s32.totalorder %s480, %s481
      %p495 = scmp.eq.s32.totalorder %s43, 1
      %p496 = por %p494, %p495
      %p498 = scmp.ne.s32.totalorder %s481, %s497
      %p499 = scmp.eq.s32.totalorder %s43, 0
      %p500 = por %p498, %p499
      %p501 = scmp.le.s32.totalorder 1, %s37
      %p502 = scmp.lt.s32.totalorder %s37, 3
      %p503 = pnand %p501, %p502
      %p504 = pneg %p503
      // Predicated region
      $region9: #{attention_submodel_forward.1} parent=5 // pred_check
        _
      $region10: #{attention_submodel_forward.1} parent=5 // pred_check_branch
        %506 = sbr.rel (%p503) target = $region12
      $region11: #{attention_submodel_forward.1} parent=5 // pred_region
        %s507 = ssub.s32 %s37, 1
        // Predicated region
        $region13: #{attention_submodel_forward.1} parent=11 // pred_check
          %p508 = pneg %p110
        $region14: #{attention_submodel_forward.1} parent=11 // pred_check_branch
          %510 = sbr.rel (%p508) target = $region16
        $region15: #{attention_submodel_forward.1} parent=11 // pred_region
          _
        $region16: #{attention_submodel_forward.1} parent=11 // pred_fallthru
          _
        // Predicated region
        $region17: #{attention_submodel_forward.1} parent=11 // pred_check
          %p511 = pneg %p131
        $region18: #{attention_submodel_forward.1} parent=11 // pred_check_branch
          %513 = sbr.rel (%p511) target = $region20
        $region19: #{attention_submodel_forward.1} parent=11 // pred_region
          _
        $region20: #{attention_submodel_forward.1} parent=11 // pred_fallthru
          _
        // Predicated region
        $region21: #{attention_submodel_forward.1} parent=11 // pred_check
          %p514 = pneg %p152
        $region22: #{attention_submodel_forward.1} parent=11 // pred_check_branch
          %516 = sbr.rel (%p514) target = $region24
        $region23: #{attention_submodel_forward.1} parent=11 // pred_region
          %s518 = ssub.s32 6144, 6144
          %519 = vsyncadd [#allocation3], %s518
          %s520 = sshll.u32 [#allocation2], 4
          %s521 = int_to_ptr.vmem [resolvable:$true] %s520
          %526 = dma.hbm_to_vmem [thread:$0]  %s4, 6144, %s521, [#allocation3], 192, 192, 12
        $region24: #{attention_submodel_forward.1} parent=11 // pred_fallthru
          _
        // Predicated region
        $region25: #{attention_submodel_forward.1} parent=11 // pred_check
          %p527 = pneg %p173
        $region26: #{attention_submodel_forward.1} parent=11 // pred_check_branch
          %529 = sbr.rel (%p527) target = $region28
        $region27: #{attention_submodel_forward.1} parent=11 // pred_region
          %s531 = ssub.s32 96, 96
          %532 = vsyncadd [#allocation6], %s531
          %s533 = sshll.u32 [#allocation5], 4
          %s534 = int_to_ptr.vmem [resolvable:$true] %s533
          %539 = dma.hbm_to_vmem [thread:$0]  %s5, 96, %s534, [#allocation6], 48, 48, 3
        $region28: #{attention_submodel_forward.1} parent=11 // pred_fallthru
          _
        // Predicated region
        $region29: #{attention_submodel_forward.1} parent=11 // pred_check
          %p540 = pneg %p194
        $region30: #{attention_submodel_forward.1} parent=11 // pred_check_branch
          %542 = sbr.rel (%p540) target = $region32
        $region31: #{attention_submodel_forward.1} parent=11 // pred_region
          %s544 = ssub.s32 2048, 2048
          %545 = vsyncadd [#allocation6], %s544
          %s546 = sshll.u32 [#allocation7], 4
          %s547 = int_to_ptr.vmem [resolvable:$true] %s546
          %552 = dma.hbm_to_vmem [thread:$0]  %s6, 2048, %s547, [#allocation6], 64, 64, 4
        $region32: #{attention_submodel_forward.1} parent=11 // pred_fallthru
          _
        // Predicated region
        $region33: #{attention_submodel_forward.1} parent=11 // pred_check
          %p553 = pneg %p215
        $region34: #{attention_submodel_forward.1} parent=11 // pred_check_branch
          %555 = sbr.rel (%p553) target = $region36
        $region35: #{attention_submodel_forward.1} parent=11 // pred_region
          _
        $region36: #{attention_submodel_forward.1} parent=11 // pred_fallthru
          _
        // Predicated region
        $region37: #{attention_submodel_forward.1} parent=11 // pred_check
          %p556 = pneg %p236
        $region38: #{attention_submodel_forward.1} parent=11 // pred_check_branch
          %558 = sbr.rel (%p556) target = $region40
        $region39: #{attention_submodel_forward.1} parent=11 // pred_region
          %s560 = ssub.s32 2048, 2048
          %561 = vsyncadd [#allocation9], %s560
          %s562 = sshll.u32 [#allocation8], 4
          %s563 = int_to_ptr.vmem [resolvable:$true] %s562
          %568 = dma.hbm_to_vmem [thread:$0]  %s8, 2048, %s563, [#allocation9], 64, 64, 4
        $region40: #{attention_submodel_forward.1} parent=11 // pred_fallthru
          _
        // Predicated region
        $region41: #{attention_submodel_forward.1} parent=11 // pred_check
          %p569 = pneg %p257
        $region42: #{attention_submodel_forward.1} parent=11 // pred_check_branch
          %571 = sbr.rel (%p569) target = $region44
        $region43: #{attention_submodel_forward.1} parent=11 // pred_region
          %s573 = ssub.s32 32, 32
          %574 = vsyncadd [#allocation9], %s573
          %s575 = sshll.u32 [#allocation10], 4
          %s576 = int_to_ptr.vmem [resolvable:$true] %s575
          %581 = dma.hbm_to_vmem [thread:$0]  %s9, 32, %s576, [#allocation9], 16, 16, 1
        $region44: #{attention_submodel_forward.1} parent=11 // pred_fallthru
          _
        // Predicated region
        $region45: #{attention_submodel_forward.1} parent=11 // pred_check
          %p582 = pneg %p278
        $region46: #{attention_submodel_forward.1} parent=11 // pred_check_branch
          %584 = sbr.rel (%p582) target = $region48
        $region47: #{attention_submodel_forward.1} parent=11 // pred_region
          %s586 = ssub.s32 4096, 4096
          %587 = vsyncadd [#allocation12], %s586
          %s588 = sshll.u32 [#allocation11], 4
          %s589 = int_to_ptr.vmem [resolvable:$true] %s588
          %594 = dma.hbm_to_vmem [thread:$0]  %s10, 4096, %s589, [#allocation12], 128, 128, 8
        $region48: #{attention_submodel_forward.1} parent=11 // pred_fallthru
          _
        // Predicated region
        $region49: #{attention_submodel_forward.1} parent=11 // pred_check
          %p595 = pneg %p299
        $region50: #{attention_submodel_forward.1} parent=11 // pred_check_branch
          %597 = sbr.rel (%p595) target = $region52
        $region51: #{attention_submodel_forward.1} parent=11 // pred_region
          %s599 = ssub.s32 64, 64
          %600 = vsyncadd [#allocation12], %s599
          %s601 = sshll.u32 [#allocation13], 4
          %s602 = int_to_ptr.vmem [resolvable:$true] %s601
          %607 = dma.hbm_to_vmem [thread:$0]  %s11, 64, %s602, [#allocation12], 32, 32, 2
        $region52: #{attention_submodel_forward.1} parent=11 // pred_fallthru
          _
        // Predicated region
        $region53: #{attention_submodel_forward.1} parent=11 // pred_check
          %p608 = pneg %p320
        $region54: #{attention_submodel_forward.1} parent=11 // pred_check_branch
          %610 = sbr.rel (%p608) target = $region56
        $region55: #{attention_submodel_forward.1} parent=11 // pred_region
          %s612 = ssub.s32 2048, 2048
          %613 = vsyncadd [#allocation15], %s612
          %s614 = sshll.u32 [#allocation14], 4
          %s615 = int_to_ptr.vmem [resolvable:$true] %s614
          %620 = dma.hbm_to_vmem [thread:$0]  %s12, 2048, %s615, [#allocation15], 64, 64, 4
        $region56: #{attention_submodel_forward.1} parent=11 // pred_fallthru
          _
        // Predicated region
        $region57: #{attention_submodel_forward.1} parent=11 // pred_check
          %p621 = pneg %p341
        $region58: #{attention_submodel_forward.1} parent=11 // pred_check_branch
          %623 = sbr.rel (%p621) target = $region60
        $region59: #{attention_submodel_forward.1} parent=11 // pred_region
          %s625 = ssub.s32 32, 32
          %626 = vsyncadd [#allocation15], %s625
          %s627 = sshll.u32 [#allocation16], 4
          %s628 = int_to_ptr.vmem [resolvable:$true] %s627
          %633 = dma.hbm_to_vmem [thread:$0]  %s13, 32, %s628, [#allocation15], 16, 16, 1
        $region60: #{attention_submodel_forward.1} parent=11 // pred_fallthru
          _
        // Predicated region
        $region61: #{attention_submodel_forward.1} parent=11 // pred_check
          %p634 = pneg %p362
        $region62: #{attention_submodel_forward.1} parent=11 // pred_check_branch
          %636 = sbr.rel (%p634) target = $region64
        $region63: #{attention_submodel_forward.1} parent=11 // pred_region
          %s638 = ssub.s32 4096, 4096
          %639 = vsyncadd [#allocation18], %s638
          %s640 = sshll.u32 [#allocation17], 4
          %s641 = int_to_ptr.vmem [resolvable:$true] %s640
          %646 = dma.hbm_to_vmem [thread:$0]  %s14, 4096, %s641, [#allocation18], 128, 128, 8
        $region64: #{attention_submodel_forward.1} parent=11 // pred_fallthru
          _
        // Predicated region
        $region65: #{attention_submodel_forward.1} parent=11 // pred_check
          %p647 = pneg %p383
        $region66: #{attention_submodel_forward.1} parent=11 // pred_check_branch
          %649 = sbr.rel (%p647) target = $region68
        $region67: #{attention_submodel_forward.1} parent=11 // pred_region
          %s651 = ssub.s32 64, 64
          %652 = vsyncadd [#allocation18], %s651
          %s653 = sshll.u32 [#allocation19], 4
          %s654 = int_to_ptr.vmem [resolvable:$true] %s653
          %659 = dma.hbm_to_vmem [thread:$0]  %s15, 64, %s654, [#allocation18], 32, 32, 2
        $region68: #{attention_submodel_forward.1} parent=11 // pred_fallthru
          _
        // Predicated region
        $region69: #{attention_submodel_forward.1} parent=11 // pred_check
          %p660 = pneg %p404
        $region70: #{attention_submodel_forward.1} parent=11 // pred_check_branch
          %662 = sbr.rel (%p660) target = $region72
        $region71: #{attention_submodel_forward.1} parent=11 // pred_region
          %s664 = ssub.s32 4096, 4096
          %665 = vsyncadd [#allocation21], %s664
          %s666 = sshll.u32 [#allocation20], 4
          %s667 = int_to_ptr.vmem [resolvable:$true] %s666
          %672 = dma.hbm_to_vmem [thread:$0]  %s16, 4096, %s667, [#allocation21], 64, 64, 4
        $region72: #{attention_submodel_forward.1} parent=11 // pred_fallthru
          _
        // Predicated region
        $region73: #{attention_submodel_forward.1} parent=11 // pred_check
          %p673 = pneg %p425
        $region74: #{attention_submodel_forward.1} parent=11 // pred_check_branch
          %675 = sbr.rel (%p673) target = $region76
        $region75: #{attention_submodel_forward.1} parent=11 // pred_region
          %s677 = ssub.s32 32, 32
          %678 = vsyncadd [#allocation21], %s677
          %s679 = sshll.u32 [#allocation22], 4
          %s680 = int_to_ptr.vmem [resolvable:$true] %s679
          %685 = dma.hbm_to_vmem [thread:$0]  %s17, 32, %s680, [#allocation21], 16, 16, 1
        $region76: #{attention_submodel_forward.1} parent=11 // pred_fallthru
          _
        // Predicated region
        $region77: #{attention_submodel_forward.1} parent=11 // pred_check
          %p686 = pneg %p446
        $region78: #{attention_submodel_forward.1} parent=11 // pred_check_branch
          %688 = sbr.rel (%p686) target = $region80
        $region79: #{attention_submodel_forward.1} parent=11 // pred_region
          %s690 = ssub.s32 16, 16
          %691 = vsyncadd [#allocation24], %s690
          %s693 = sshll.u32 [#allocation23], 4
          %s694 = int_to_ptr.vmem [resolvable:$true] %s693
          %696 = dma.hbm_to_vmem [thread:$0]  %s18, 16, %s694, [#allocation24]
        $region80: #{attention_submodel_forward.1} parent=11 // pred_fallthru
          _
        // Predicated region
        $region81: #{attention_submodel_forward.1} parent=11 // pred_check
          %p697 = pneg %p467
        $region82: #{attention_submodel_forward.1} parent=11 // pred_check_branch
          %699 = sbr.rel (%p697) target = $region84
        $region83: #{attention_submodel_forward.1} parent=11 // pred_region
          %s701 = ssub.s32 16, 16
          %702 = vsyncadd [#allocation24], %s701
          %s704 = sshll.u32 [#allocation25], 4
          %s705 = int_to_ptr.vmem [resolvable:$true] %s704
          %707 = dma.hbm_to_vmem [thread:$0]  %s19, 16, %s705, [#allocation24]
        $region84: #{attention_submodel_forward.1} parent=11 // pred_fallthru
          _
      $region12: #{attention_submodel_forward.1} parent=5 // pred_fallthru
        _
      %p708 = scmp.lt.s32.totalorder %s37, 2
      // Predicated region
      $region85: #{attention_submodel_forward.1} parent=5 // pred_check
        %p709 = pneg %p708
      $region86: #{attention_submodel_forward.1} parent=5 // pred_check_branch
        %711 = sbr.rel (%p709) target = $region88
      $region87: #{attention_submodel_forward.1} parent=5 // pred_region
        // Predicated region
        $region89: #{attention_submodel_forward.1} parent=87 // pred_check
          %p712 = pneg %p57
        $region90: #{attention_submodel_forward.1} parent=87 // pred_check_branch
          %714 = sbr.rel (%p712) target = $region92
        $region91: #{attention_submodel_forward.1} parent=87 // pred_region
          %p715 = scmp.lt.s32.totalorder %s37, 1
          %s716 = scalar_select %p715, %s37, 1
          %s717 = smul.addr %s716, 8
          %s718 = scalar_lea.vmem %s0, %s717
        $region92: #{attention_submodel_forward.1} parent=87 // pred_fallthru
          _
        // Predicated region
        $region93: #{attention_submodel_forward.1} parent=87 // pred_check
          %p719 = pneg %p83
        $region94: #{attention_submodel_forward.1} parent=87 // pred_check_branch
          %721 = sbr.rel (%p719) target = $region96
        $region95: #{attention_submodel_forward.1} parent=87 // pred_region
          %p722 = scmp.lt.s32.totalorder %s37, 1
          %s723 = scalar_select %p722, %s37, 1
          %s724 = smul.addr %s723, 2
          %s725 = smul.addr %s724, 8
          %s726 = scalar_lea.vmem %s1, %s725
        $region96: #{attention_submodel_forward.1} parent=87 // pred_fallthru
          _
      $region88: #{attention_submodel_forward.1} parent=5 // pred_fallthru
        _
      %p727 = scmp.le.s32.totalorder 1, %s37
      %p728 = scmp.lt.s32.totalorder %s37, 3
      %p729 = pnand %p727, %p728
      %p730 = pneg %p729
      // Predicated region
      $region97: #{attention_submodel_forward.1} parent=5 // pred_check
        _
      $region98: #{attention_submodel_forward.1} parent=5 // pred_check_branch
        %732 = sbr.rel (%p729) target = $region100
      $region99: #{attention_submodel_forward.1} parent=5 // pred_region
        %s733 = ssub.s32 %s37, 1
        // Predicated region
        $region101: #{attention_submodel_forward.1} parent=99 // pred_check
          %p734 = pneg %p152
        $region102: #{attention_submodel_forward.1} parent=99 // pred_check_branch
          %736 = sbr.rel (%p734) target = $region104
        $region103: #{attention_submodel_forward.1} parent=99 // pred_region
          %737 = dma.done [#allocation3], 6144
        $region104: #{attention_submodel_forward.1} parent=99 // pred_fallthru
          _
        // Predicated region
        $region105: #{attention_submodel_forward.1} parent=99 // pred_check
          %p738 = pneg %p173
        $region106: #{attention_submodel_forward.1} parent=99 // pred_check_branch
          %740 = sbr.rel (%p738) target = $region108
        $region107: #{attention_submodel_forward.1} parent=99 // pred_region
          %741 = dma.done [#allocation6], 96
        $region108: #{attention_submodel_forward.1} parent=99 // pred_fallthru
          _
        // Predicated region
        $region109: #{attention_submodel_forward.1} parent=99 // pred_check
          %p742 = pneg %p194
        $region110: #{attention_submodel_forward.1} parent=99 // pred_check_branch
          %744 = sbr.rel (%p742) target = $region112
        $region111: #{attention_submodel_forward.1} parent=99 // pred_region
          %745 = dma.done [#allocation6], 2048
        $region112: #{attention_submodel_forward.1} parent=99 // pred_fallthru
          _
        // Predicated region
        $region113: #{attention_submodel_forward.1} parent=99 // pred_check
          %p746 = pneg %p236
        $region114: #{attention_submodel_forward.1} parent=99 // pred_check_branch
          %748 = sbr.rel (%p746) target = $region116
        $region115: #{attention_submodel_forward.1} parent=99 // pred_region
          %749 = dma.done [#allocation9], 2048
        $region116: #{attention_submodel_forward.1} parent=99 // pred_fallthru
          _
        // Predicated region
        $region117: #{attention_submodel_forward.1} parent=99 // pred_check
          %p750 = pneg %p257
        $region118: #{attention_submodel_forward.1} parent=99 // pred_check_branch
          %752 = sbr.rel (%p750) target = $region120
        $region119: #{attention_submodel_forward.1} parent=99 // pred_region
          %753 = dma.done [#allocation9], 32
        $region120: #{attention_submodel_forward.1} parent=99 // pred_fallthru
          _
        // Predicated region
        $region121: #{attention_submodel_forward.1} parent=99 // pred_check
          %p754 = pneg %p278
        $region122: #{attention_submodel_forward.1} parent=99 // pred_check_branch
          %756 = sbr.rel (%p754) target = $region124
        $region123: #{attention_submodel_forward.1} parent=99 // pred_region
          %757 = dma.done [#allocation12], 4096
        $region124: #{attention_submodel_forward.1} parent=99 // pred_fallthru
          _
        // Predicated region
        $region125: #{attention_submodel_forward.1} parent=99 // pred_check
          %p758 = pneg %p299
        $region126: #{attention_submodel_forward.1} parent=99 // pred_check_branch
          %760 = sbr.rel (%p758) target = $region128
        $region127: #{attention_submodel_forward.1} parent=99 // pred_region
          %761 = dma.done [#allocation12], 64
        $region128: #{attention_submodel_forward.1} parent=99 // pred_fallthru
          _
        // Predicated region
        $region129: #{attention_submodel_forward.1} parent=99 // pred_check
          %p762 = pneg %p320
        $region130: #{attention_submodel_forward.1} parent=99 // pred_check_branch
          %764 = sbr.rel (%p762) target = $region132
        $region131: #{attention_submodel_forward.1} parent=99 // pred_region
          %765 = dma.done [#allocation15], 2048
        $region132: #{attention_submodel_forward.1} parent=99 // pred_fallthru
          _
        // Predicated region
        $region133: #{attention_submodel_forward.1} parent=99 // pred_check
          %p766 = pneg %p341
        $region134: #{attention_submodel_forward.1} parent=99 // pred_check_branch
          %768 = sbr.rel (%p766) target = $region136
        $region135: #{attention_submodel_forward.1} parent=99 // pred_region
          %769 = dma.done [#allocation15], 32
        $region136: #{attention_submodel_forward.1} parent=99 // pred_fallthru
          _
        // Predicated region
        $region137: #{attention_submodel_forward.1} parent=99 // pred_check
          %p770 = pneg %p362
        $region138: #{attention_submodel_forward.1} parent=99 // pred_check_branch
          %772 = sbr.rel (%p770) target = $region140
        $region139: #{attention_submodel_forward.1} parent=99 // pred_region
          %773 = dma.done [#allocation18], 4096
        $region140: #{attention_submodel_forward.1} parent=99 // pred_fallthru
          _
        // Predicated region
        $region141: #{attention_submodel_forward.1} parent=99 // pred_check
          %p774 = pneg %p383
        $region142: #{attention_submodel_forward.1} parent=99 // pred_check_branch
          %776 = sbr.rel (%p774) target = $region144
        $region143: #{attention_submodel_forward.1} parent=99 // pred_region
          %777 = dma.done [#allocation18], 64
        $region144: #{attention_submodel_forward.1} parent=99 // pred_fallthru
          _
        // Predicated region
        $region145: #{attention_submodel_forward.1} parent=99 // pred_check
          %p778 = pneg %p404
        $region146: #{attention_submodel_forward.1} parent=99 // pred_check_branch
          %780 = sbr.rel (%p778) target = $region148
        $region147: #{attention_submodel_forward.1} parent=99 // pred_region
          %781 = dma.done [#allocation21], 4096
        $region148: #{attention_submodel_forward.1} parent=99 // pred_fallthru
          _
        // Predicated region
        $region149: #{attention_submodel_forward.1} parent=99 // pred_check
          %p782 = pneg %p425
        $region150: #{attention_submodel_forward.1} parent=99 // pred_check_branch
          %784 = sbr.rel (%p782) target = $region152
        $region151: #{attention_submodel_forward.1} parent=99 // pred_region
          %785 = dma.done [#allocation21], 32
        $region152: #{attention_submodel_forward.1} parent=99 // pred_fallthru
          _
        // Predicated region
        $region153: #{attention_submodel_forward.1} parent=99 // pred_check
          %p786 = pneg %p446
        $region154: #{attention_submodel_forward.1} parent=99 // pred_check_branch
          %788 = sbr.rel (%p786) target = $region156
        $region155: #{attention_submodel_forward.1} parent=99 // pred_region
          %789 = dma.done [#allocation24], 16
        $region156: #{attention_submodel_forward.1} parent=99 // pred_fallthru
          _
        // Predicated region
        $region157: #{attention_submodel_forward.1} parent=99 // pred_check
          %p790 = pneg %p467
        $region158: #{attention_submodel_forward.1} parent=99 // pred_check_branch
          %792 = sbr.rel (%p790) target = $region160
        $region159: #{attention_submodel_forward.1} parent=99 // pred_region
          %793 = dma.done [#allocation24], 16
        $region160: #{attention_submodel_forward.1} parent=99 // pred_fallthru
          _
        %p794 = scmp.lt.s32.totalorder %s42, 1
        %s795 = scalar_select %p794, %s42, 1
        %s796 = smul.addr %s795, 8
        %s797 = scalar_lea.vmem %s0, %s796
        %p798 = pneg %p63
        %p799 = pneg %p60
        %p800 = scmp.lt.s32.totalorder %s42, 1
        %s801 = scalar_select %p800, %s42, 1
        %s802 = smul.addr %s801, 2
        %s803 = smul.addr %s802, 8
        %s804 = scalar_lea.vmem %s1, %s803
        %p805 = pneg %p89
        %p806 = pneg %p86
        %p807 = pneg %p110
        %p808 = pneg %p107
        %p809 = pneg %p131
        %p810 = pneg %p128
        %p811 = pneg %p152
        %p812 = pneg %p149
        %p813 = pneg %p173
        %p814 = pneg %p170
        %p815 = pneg %p194
        %p816 = pneg %p191
        %p817 = pneg %p215
        %p818 = pneg %p212
        %p819 = pneg %p236
        %p820 = pneg %p233
        %p821 = pneg %p257
        %p822 = pneg %p254
        %p823 = pneg %p278
        %p824 = pneg %p275
        %p825 = pneg %p299
        %p826 = pneg %p296
        %p827 = pneg %p320
        %p828 = pneg %p317
        %p829 = pneg %p341
        %p830 = pneg %p338
        %p831 = pneg %p362
        %p832 = pneg %p359
        %p833 = pneg %p383
        %p834 = pneg %p380
        %p835 = pneg %p404
        %p836 = pneg %p401
        %p837 = pneg %p425
        %p838 = pneg %p422
        %p839 = pneg %p446
        %p840 = pneg %p443
        %p841 = pneg %p467
        %p842 = pneg %p464
        %p843 = pneg %p493
        %p844 = pneg %p490
        %s845 = sand.u32 %s480, 1
        %s846 = scalar_lea.sflag [#allocation4], %s845
        %s847 = sand.u32 %s480, 1
        %s848 = smul.addr %s847, 8
        %s849 = scalar_lea.vmem [#allocation26], %s848
        %p850 = scmp.lt.s32.totalorder %s42, 1
        %s851 = scalar_select %p850, %s42, 1
        %s852 = smul.addr %s851, 8
        %s853 = scalar_lea.vmem %s0, %s852
        %p854 = scmp.lt.s32.totalorder %s42, 1
        %s855 = scalar_select %p854, %s42, 1
        %s856 = smul.addr %s855, 2
        %s857 = smul.addr %s856, 8
        %s858 = scalar_lea.vmem %s1, %s857
        %v860 = vld [vmem:[%s853] sm:$0xff]
        %v861 = vld [vmem:[%s858] sm:$0xff]
        %v862 = vld [vmem:[%s858 + $0x8] sm:$0xff]
        %v863 = vld [vmem:[%s2] sm:$0x1]
        %v864 = vld [vmem:[%s3] sm:$0x1]
        %865 = vadd.xlane.f32.xlu0 %v860
        %v866 = vpop.xlane.xlu0 %865
        %v867 = vrcp.pop 128.0
        %v868 = vmul.f32 %v866, %v867
        %v869 = vsub.f32 %v860, %v868
        %v870 = vmul.f32 %v869, %v869
        %871 = vadd.xlane.f32.xlu0 %v870
        %v872 = vpop.xlane.xlu0 %871
        %v873 = vrcp.pop 127.0
        %v874 = vmul.f32 %v872, %v873
        %v875 = vrsqrt.pop %v874
        %v876 = vmul.f32 %v874, %v875
        %vm877 = vcmp.eq.f32.partialorder %v874, inf
        %v878 = vsel %vm877, %v874, %v876
        %vm879 = vcmp.eq.f32.partialorder %v874, 0.0
        %v880 = vand.u32 %v874, 2147483648
        %v881 = vsel %vm879, %v880, %v878
        %v883 = vlaneseq
        %v884 = vshrl.u32 %v883, 7
        %v885 = vsub.s32 0, %v884
        %v886 = vrot.slane %v863, %v885
        %v888 = vmul.f32 %v886, %v869
        %v889 = vadd.f32 %v881, 1e-06
        %v890 = vrcp.pop %v889
        %v891 = vmul.f32 %v888, %v890
        %v893 = vlaneseq
        %v894 = vshrl.u32 %v893, 7
        %v895 = vsub.s32 0, %v894
        %v896 = vrot.slane %v864, %v895
        %v898 = vadd.f32 %v891, %v896
        %v899 = vld [vmem:[#allocation2] sm:$0xff]
        %v900 = vld [vmem:[#allocation2 + $0x8] sm:$0xf]
        %v901 = vld [vmem:[#allocation2 + $0xc] sm:$0xff]
        %v902 = vld [vmem:[#allocation2 + $0x14] sm:$0xf]
        %v903 = vld [vmem:[#allocation2 + $0x18] sm:$0xff]
        %v904 = vld [vmem:[#allocation2 + $0x20] sm:$0xf]
        %v905 = vld [vmem:[#allocation2 + $0x24] sm:$0xff]
        %v906 = vld [vmem:[#allocation2 + $0x2c] sm:$0xf]
        %v907 = vld [vmem:[#allocation2 + $0x30] sm:$0xff]
        %v908 = vld [vmem:[#allocation2 + $0x38] sm:$0xf]
        %v909 = vld [vmem:[#allocation2 + $0x3c] sm:$0xff]
        %v910 = vld [vmem:[#allocation2 + $0x44] sm:$0xf]
        %v911 = vld [vmem:[#allocation2 + $0x48] sm:$0xff]
        %v912 = vld [vmem:[#allocation2 + $0x50] sm:$0xf]
        %v913 = vld [vmem:[#allocation2 + $0x54] sm:$0xff]
        %v914 = vld [vmem:[#allocation2 + $0x5c] sm:$0xf]
        %v915 = vld [vmem:[#allocation2 + $0x60] sm:$0xff]
        %v916 = vld [vmem:[#allocation2 + $0x68] sm:$0xf]
        %v917 = vld [vmem:[#allocation2 + $0x6c] sm:$0xff]
        %v918 = vld [vmem:[#allocation2 + $0x74] sm:$0xf]
        %v919 = vld [vmem:[#allocation2 + $0x78] sm:$0xff]
        %v920 = vld [vmem:[#allocation2 + $0x80] sm:$0xf]
        %v921 = vld [vmem:[#allocation2 + $0x84] sm:$0xff]
        %v922 = vld [vmem:[#allocation2 + $0x8c] sm:$0xf]
        %v923 = vld [vmem:[#allocation2 + $0x90] sm:$0xff]
        %v924 = vld [vmem:[#allocation2 + $0x98] sm:$0xf]
        %v925 = vld [vmem:[#allocation2 + $0x9c] sm:$0xff]
        %v926 = vld [vmem:[#allocation2 + $0xa4] sm:$0xf]
        %v927 = vld [vmem:[#allocation2 + $0xa8] sm:$0xff]
        %v928 = vld [vmem:[#allocation2 + $0xb0] sm:$0xf]
        %v929 = vld [vmem:[#allocation2 + $0xb4] sm:$0xff]
        %v930 = vld [vmem:[#allocation2 + $0xbc] sm:$0xf]
        %v931 = vld [vmem:[#allocation5] sm:$0x7]
        %v932 = vpack.c.bf16 %v898, %v898
        %v934 = vlaneseq
        %v935 = vshrl.u32 %v934, 7
        %v936 = vsub.s32 0, %v935
        %v937 = vrot.slane %v931, %v936
        %v938 = vlaneseq
        %v939 = vshrl.u32 %v938, 7
        %v940 = vsub.s32 1, %v939
        %v941 = vrot.slane %v931, %v940
        %v942 = vlaneseq
        %v943 = vshrl.u32 %v942, 7
        %v944 = vsub.s32 2, %v943
        %v945 = vrot.slane %v931, %v944
        %v981 = vunpack.c.l.b16 %v899
        %v982 = vunpack.c.h.b16 %v899
        %v983 = vunpack.c.l.b16 %v900
        %v984 = vunpack.c.l.b16 %v901
        %v985 = vunpack.c.h.b16 %v901
        %v986 = vunpack.c.l.b16 %v902
        %v987 = vunpack.c.l.b16 %v903
        %v988 = vunpack.c.h.b16 %v903
        %v989 = vunpack.c.l.b16 %v904
        %v990 = vunpack.c.l.b16 %v905
        %v991 = vunpack.c.h.b16 %v905
        %v992 = vunpack.c.l.b16 %v906
        %v993 = vunpack.c.l.b16 %v907
        %v994 = vunpack.c.h.b16 %v907
        %v995 = vunpack.c.l.b16 %v908
        %v996 = vunpack.c.l.b16 %v909
        %v997 = vunpack.c.h.b16 %v909
        %v998 = vunpack.c.l.b16 %v910
        %v999 = vunpack.c.l.b16 %v911
        %v1000 = vunpack.c.h.b16 %v911
        %v1001 = vunpack.c.l.b16 %v912
        %v1002 = vunpack.c.l.b16 %v913
        %v1003 = vunpack.c.h.b16 %v913
        %v1004 = vunpack.c.l.b16 %v914
        %v1005 = vunpack.c.l.b16 %v915
        %v1006 = vunpack.c.h.b16 %v915
        %v1007 = vunpack.c.l.b16 %v916
        %v1008 = vunpack.c.l.b16 %v917
        %v1009 = vunpack.c.h.b16 %v917
        %v1010 = vunpack.c.l.b16 %v918
        %v1011 = vunpack.c.l.b16 %v919
        %v1012 = vunpack.c.h.b16 %v919
        %v1013 = vunpack.c.l.b16 %v920
        %v1014 = vunpack.c.l.b16 %v921
        %v1015 = vunpack.c.h.b16 %v921
        %v1016 = vunpack.c.l.b16 %v922
        %v1017 = vunpack.c.l.b16 %v923
        %v1018 = vunpack.c.h.b16 %v923
        %v1019 = vunpack.c.l.b16 %v924
        %v1020 = vunpack.c.l.b16 %v925
        %v1021 = vunpack.c.h.b16 %v925
        %v1022 = vunpack.c.l.b16 %v926
        %v1023 = vunpack.c.l.b16 %v927
        %v1024 = vunpack.c.h.b16 %v927
        %v1025 = vunpack.c.l.b16 %v928
        %v1026 = vunpack.c.l.b16 %v929
        %v1027 = vunpack.c.h.b16 %v929
        %v1028 = vunpack.c.l.b16 %v930
        %v1029 = vpack.c.b16 %v984, %v981
        %v1030 = vpack.c.b16 %v985, %v982
        %v1031 = vpack.c.b16 %v986, %v983
        %v1032 = vpack.c.b16 %v990, %v987
        %v1033 = vpack.c.b16 %v991, %v988
        %v1034 = vpack.c.b16 %v992, %v989
        %v1035 = vpack.c.b16 %v996, %v993
        %v1036 = vpack.c.b16 %v997, %v994
        %v1037 = vpack.c.b16 %v998, %v995
        %v1038 = vpack.c.b16 %v1002, %v999
        %v1039 = vpack.c.b16 %v1003, %v1000
        %v1040 = vpack.c.b16 %v1004, %v1001
        %v1041 = vpack.c.b16 %v1008, %v1005
        %v1042 = vpack.c.b16 %v1009, %v1006
        %v1043 = vpack.c.b16 %v1010, %v1007
        %v1044 = vpack.c.b16 %v1014, %v1011
        %v1045 = vpack.c.b16 %v1015, %v1012
        %v1046 = vpack.c.b16 %v1016, %v1013
        %v1047 = vpack.c.b16 %v1020, %v1017
        %v1048 = vpack.c.b16 %v1021, %v1018
        %v1049 = vpack.c.b16 %v1022, %v1019
        %v1050 = vpack.c.b16 %v1026, %v1023
        %v1051 = vpack.c.b16 %v1027, %v1024
        %v1052 = vpack.c.b16 %v1028, %v1025
        %1077 = vmatprep.subr.bf16.mxu0 %v1030
        %1078 = vmatpush1.bf16.msra.mxu0 %v1029
        %1079 = vmatprep.subr.bf16.mxu0 %v1033
        %1080 = vmatpush1.bf16.msra.mxu0 %v1032
        %1081 = vmatprep.subr.bf16.mxu0 %v1036
        %1082 = vmatpush1.bf16.msra.mxu0 %v1035
        %1083 = vmatprep.subr.bf16.mxu0 %v1039
        %1084 = vmatpush1.bf16.msra.mxu0 %v1038
        %1085 = vmatprep.subr.bf16.mxu0 %v1042
        %1086 = vmatpush1.bf16.msra.mxu0 %v1041
        %1087 = vmatprep.subr.bf16.mxu0 %v1045
        %1088 = vmatpush1.bf16.msra.mxu0 %v1044
        %1089 = vmatprep.subr.bf16.mxu0 %v1048
        %1090 = vmatpush1.bf16.msra.mxu0 %v1047
        %1091 = vmatprep.subr.bf16.mxu0 %v1051
        %1092 = vmatpush1.bf16.msra.mxu0 %v1050
        %1093 = vmatprep.subr.bf16.mxu0 0
        %1094 = vmatpush1.bf16.msra.mxu0 0
        %1095 = vmatprep.subr.bf16.mxu0 0
        %1096 = vmatpush1.bf16.msra.mxu0 0
        %1097 = vmatprep.subr.bf16.mxu0 0
        %1098 = vmatpush1.bf16.msra.mxu0 0
        %1099 = vmatprep.subr.bf16.mxu0 0
        %1100 = vmatpush1.bf16.msra.mxu0 0
        %1101 = vmatprep.subr.bf16.mxu0 0
        %1102 = vmatpush1.bf16.msra.mxu0 0
        %1103 = vmatprep.subr.bf16.mxu0 0
        %1104 = vmatpush1.bf16.msra.mxu0 0
        %1105 = vmatprep.subr.bf16.mxu0 0
        %1106 = vmatpush1.bf16.msra.mxu0 0
        %1107 = vmatprep.subr.bf16.mxu0 0
        %1108 = vmatpush1.bf16.msra.mxu0 0
        %1109 = vmatprep.mubr.bf16.mxu0 0
        %1110 = vmatmul.mubr.bf16.gmra.mrb[0].mxu0 %v932
        %v1111 = vpop.f32.mrb[0].mxu0
        %v1112 = vadd.f32 %v937, %v1111
        %v1113 = vpop.f32.mrb[0].mxu0
        %v1114 = vadd.f32 %v941, %v1113
        %v1115 = vpop.f32.mrb[0].mxu0
        %v1116 = vpop.f32.mrb[0].mxu0
        %1117 = vdwg.mxu0
        %1118 = vmatprep.subr.bf16.mxu0 0
        %1119 = vmatpush1.bf16.msra.mxu0 %v1031
        %1120 = vmatprep.subr.bf16.mxu0 0
        %1121 = vmatpush1.bf16.msra.mxu0 %v1034
        %1122 = vmatprep.subr.bf16.mxu0 0
        %1123 = vmatpush1.bf16.msra.mxu0 %v1037
        %1124 = vmatprep.subr.bf16.mxu0 0
        %1125 = vmatpush1.bf16.msra.mxu0 %v1040
        %1126 = vmatprep.subr.bf16.mxu0 0
        %1127 = vmatpush1.bf16.msra.mxu0 %v1043
        %1128 = vmatprep.subr.bf16.mxu0 0
        %1129 = vmatpush1.bf16.msra.mxu0 %v1046
        %1130 = vmatprep.subr.bf16.mxu0 0
        %1131 = vmatpush1.bf16.msra.mxu0 %v1049
        %1132 = vmatprep.subr.bf16.mxu0 0
        %1133 = vmatpush1.bf16.msra.mxu0 %v1052
        %1134 = vmatprep.subr.bf16.mxu0 0
        %1135 = vmatpush1.bf16.msra.mxu0 0
        %1136 = vmatprep.subr.bf16.mxu0 0
        %1137 = vmatpush1.bf16.msra.mxu0 0
        %1138 = vmatprep.subr.bf16.mxu0 0
        %1139 = vmatpush1.bf16.msra.mxu0 0
        %1140 = vmatprep.subr.bf16.mxu0 0
        %1141 = vmatpush1.bf16.msra.mxu0 0
        %1142 = vmatprep.subr.bf16.mxu0 0
        %1143 = vmatpush1.bf16.msra.mxu0 0
        %1144 = vmatprep.subr.bf16.mxu0 0
        %1145 = vmatpush1.bf16.msra.mxu0 0
        %1146 = vmatprep.subr.bf16.mxu0 0
        %1147 = vmatpush1.bf16.msra.mxu0 0
        %1148 = vmatprep.subr.bf16.mxu0 0
        %1149 = vmatpush1.bf16.msra.mxu0 0
        %1150 = vmatprep.mubr.bf16.mxu0 0
        %1151 = vmatmul.mubr.bf16.gmra.mrb[0].mxu0 %v932
        %v1152 = vpop.f32.mrb[0].mxu0
        %v1153 = vadd.f32 %v945, %v1152
        %v1154 = vpop.f32.mrb[0].mxu0
        %v1155 = vpop.f32.mrb[0].mxu0
        %v1156 = vpop.f32.mrb[0].mxu0
        %1157 = vdwg.mxu0
        %v1158 = vpack.c.bf16 %v1112, %v1112
        %v1159 = vpack.c.bf16 %v1114, %v1114
        %v1160 = vpack.c.bf16 %v1153, %v1153
        %vm1161 = vcmask 261120
        %v1163 = vsel %vm1161, %v1158, 0
        %v1166 = vsel %vm1161, %v1159, 0
        %1168 = vmatprep.subr.bf16.mxu0 0
        %1169 = vmatpush1.bf16.xpose.msra.mxu0 %v1166
        %1170 = vmatprep.subr.bf16.mxu0 0
        %1171 = vmatpush1.bf16.xpose.msra.mxu0 0
        %1172 = vmatprep.subr.bf16.mxu0 0
        %1173 = vmatpush1.bf16.xpose.msra.mxu0 0
        %1174 = vmatprep.subr.bf16.mxu0 0
        %1175 = vmatpush1.bf16.xpose.msra.mxu0 0
        %1176 = vmatprep.subr.bf16.mxu0 0
        %1177 = vmatpush1.bf16.xpose.msra.mxu0 0
        %1178 = vmatprep.subr.bf16.mxu0 0
        %1179 = vmatpush1.bf16.xpose.msra.mxu0 0
        %1180 = vmatprep.subr.bf16.mxu0 0
        %1181 = vmatpush1.bf16.xpose.msra.mxu0 0
        %1182 = vmatprep.subr.bf16.mxu0 0
        %1183 = vmatpush1.bf16.xpose.msra.mxu0 0
        %1184 = vmatprep.subr.bf16.mxu0 0
        %1185 = vmatpush1.bf16.xpose.msra.mxu0 0
        %1186 = vmatprep.subr.bf16.mxu0 0
        %1187 = vmatpush1.bf16.xpose.msra.mxu0 0
        %1188 = vmatprep.subr.bf16.mxu0 0
        %1189 = vmatpush1.bf16.xpose.msra.mxu0 0
        %1190 = vmatprep.subr.bf16.mxu0 0
        %1191 = vmatpush1.bf16.xpose.msra.mxu0 0
        %1192 = vmatprep.subr.bf16.mxu0 0
        %1193 = vmatpush1.bf16.xpose.msra.mxu0 0
        %1194 = vmatprep.subr.bf16.mxu0 0
        %1195 = vmatpush1.bf16.xpose.msra.mxu0 0
        %1196 = vmatprep.subr.bf16.mxu0 0
        %1197 = vmatpush1.bf16.xpose.msra.mxu0 0
        %1198 = vmatprep.subr.bf16.mxu0 0
        %1199 = vmatpush1.bf16.xpose.msra.mxu0 0
        %1200 = vmatprep.mubr.bf16.mxu0 0
        %1201 = vmatmul.mubr.bf16.gmra.mrb[0].mxu0 %v1163
        %v1202 = vpop.f32.mrb[0].mxu0
        %v1203 = vadd.f32 0.0, %v1202
        %v1204 = vpop.f32.mrb[0].mxu0
        %v1205 = vpop.f32.mrb[0].mxu0
        %v1206 = vpop.f32.mrb[0].mxu0
        %1207 = vdwg.mxu0
        %v1208 = vmul.f32 %v1203, 0.17677669
        %vm1209 = vcmask 64512
        %v1210 = vsel %vm1209, %v1208, -inf
        %1211 = vmax.xlane.f32.xlu0 %v1210
        %v1212 = vpop.xlane.xlu0 %1211
        %v1213 = vsub.f32 %v1208, %v1212
        %v1214 = vmul.f32 %v1213, 1.442695
        %v1215 = vpow.pop %v1214
        %v1216 = vsel %vm1209, %v1215, 0.0
        %1217 = vadd.xlane.f32.xlu0 %v1216
        %v1218 = vpop.xlane.xlu0 %1217
        %v1219 = vrcp.pop %v1218
        %v1220 = vmul.f32 %v1215, %v1219
        %v1221 = vpack.c.bf16 %v1220, %v1220
        %v1223 = vsel %vm1209, %v1221, 0
        %vm1225 = vcmask 1043456
        %v1227 = vsel %vm1225, %v1160, 0
        %1229 = vmatprep.subr.bf16.mxu0 0
        %1230 = vmatpush1.bf16.msra.mxu0 %v1227
        %1231 = vmatprep.subr.bf16.mxu0 0
        %1232 = vmatpush1.bf16.msra.mxu0 0
        %1233 = vmatprep.subr.bf16.mxu0 0
        %1234 = vmatpush1.bf16.msra.mxu0 0
        %1235 = vmatprep.subr.bf16.mxu0 0
        %1236 = vmatpush1.bf16.msra.mxu0 0
        %1237 = vmatprep.subr.bf16.mxu0 0
        %1238 = vmatpush1.bf16.msra.mxu0 0
        %1239 = vmatprep.subr.bf16.mxu0 0
        %1240 = vmatpush1.bf16.msra.mxu0 0
        %1241 = vmatprep.subr.bf16.mxu0 0
        %1242 = vmatpush1.bf16.msra.mxu0 0
        %1243 = vmatprep.subr.bf16.mxu0 0
        %1244 = vmatpush1.bf16.msra.mxu0 0
        %1245 = vmatprep.subr.bf16.mxu0 0
        %1246 = vmatpush1.bf16.msra.mxu0 0
        %1247 = vmatprep.subr.bf16.mxu0 0
        %1248 = vmatpush1.bf16.msra.mxu0 0
        %1249 = vmatprep.subr.bf16.mxu0 0
        %1250 = vmatpush1.bf16.msra.mxu0 0
        %1251 = vmatprep.subr.bf16.mxu0 0
        %1252 = vmatpush1.bf16.msra.mxu0 0
        %1253 = vmatprep.subr.bf16.mxu0 0
        %1254 = vmatpush1.bf16.msra.mxu0 0
        %1255 = vmatprep.subr.bf16.mxu0 0
        %1256 = vmatpush1.bf16.msra.mxu0 0
        %1257 = vmatprep.subr.bf16.mxu0 0
        %1258 = vmatpush1.bf16.msra.mxu0 0
        %1259 = vmatprep.subr.bf16.mxu0 0
        %1260 = vmatpush1.bf16.msra.mxu0 0
        %1261 = vmatprep.mubr.bf16.mxu0 0
        %1262 = vmatmul.mubr.bf16.gmra.mrb[0].mxu0 %v1223
        %v1263 = vpop.f32.mrb[0].mxu0
        %v1264 = vadd.f32 0.0, %v1263
        %v1265 = vpop.f32.mrb[0].mxu0
        %v1266 = vpop.f32.mrb[0].mxu0
        %v1267 = vpop.f32.mrb[0].mxu0
        %1268 = vdwg.mxu0
        %1270 = vrot.lane.b32.xlu0 %v1158, 96
        %v1271 = vpop.permute.xlu0 %1270
        %1273 = vrot.lane.b32.xlu0 %v1159, 96
        %v1274 = vpop.permute.xlu0 %1273
        %v1276 = vsel %vm1161, %v1271, 0
        %v1279 = vsel %vm1161, %v1274, 0
        %1281 = vmatprep.subr.bf16.mxu0 0
        %1282 = vmatpush1.bf16.xpose.msra.mxu0 %v1279
        %1283 = vmatprep.subr.bf16.mxu0 0
        %1284 = vmatpush1.bf16.xpose.msra.mxu0 0
        %1285 = vmatprep.subr.bf16.mxu0 0
        %1286 = vmatpush1.bf16.xpose.msra.mxu0 0
        %1287 = vmatprep.subr.bf16.mxu0 0
        %1288 = vmatpush1.bf16.xpose.msra.mxu0 0
        %1289 = vmatprep.subr.bf16.mxu0 0
        %1290 = vmatpush1.bf16.xpose.msra.mxu0 0
        %1291 = vmatprep.subr.bf16.mxu0 0
        %1292 = vmatpush1.bf16.xpose.msra.mxu0 0
        %1293 = vmatprep.subr.bf16.mxu0 0
        %1294 = vmatpush1.bf16.xpose.msra.mxu0 0
        %1295 = vmatprep.subr.bf16.mxu0 0
        %1296 = vmatpush1.bf16.xpose.msra.mxu0 0
        %1297 = vmatprep.subr.bf16.mxu0 0
        %1298 = vmatpush1.bf16.xpose.msra.mxu0 0
        %1299 = vmatprep.subr.bf16.mxu0 0
        %1300 = vmatpush1.bf16.xpose.msra.mxu0 0
        %1301 = vmatprep.subr.bf16.mxu0 0
        %1302 = vmatpush1.bf16.xpose.msra.mxu0 0
        %1303 = vmatprep.subr.bf16.mxu0 0
        %1304 = vmatpush1.bf16.xpose.msra.mxu0 0
        %1305 = vmatprep.subr.bf16.mxu0 0
        %1306 = vmatpush1.bf16.xpose.msra.mxu0 0
        %1307 = vmatprep.subr.bf16.mxu0 0
        %1308 = vmatpush1.bf16.xpose.msra.mxu0 0
        %1309 = vmatprep.subr.bf16.mxu0 0
        %1310 = vmatpush1.bf16.xpose.msra.mxu0 0
        %1311 = vmatprep.subr.bf16.mxu0 0
        %1312 = vmatpush1.bf16.xpose.msra.mxu0 0
        %1313 = vmatprep.mubr.bf16.mxu0 0
        %1314 = vmatmul.mubr.bf16.gmra.mrb[0].mxu0 %v1276
        %v1315 = vpop.f32.mrb[0].mxu0
        %v1316 = vadd.f32 0.0, %v1315
        %v1317 = vpop.f32.mrb[0].mxu0
        %v1318 = vpop.f32.mrb[0].mxu0
        %v1319 = vpop.f32.mrb[0].mxu0
        %1320 = vdwg.mxu0
        %v1321 = vmul.f32 %v1316, 0.17677669
        %v1322 = vsel %vm1209, %v1321, -inf
        %1323 = vmax.xlane.f32.xlu0 %v1322
        %v1324 = vpop.xlane.xlu0 %1323
        %v1325 = vsub.f32 %v1321, %v1324
        %v1326 = vmul.f32 %v1325, 1.442695
        %v1327 = vpow.pop %v1326
        %v1328 = vsel %vm1209, %v1327, 0.0
        %1329 = vadd.xlane.f32.xlu0 %v1328
        %v1330 = vpop.xlane.xlu0 %1329
        %v1331 = vrcp.pop %v1330
        %v1332 = vmul.f32 %v1327, %v1331
        %v1333 = vpack.c.bf16 %v1332, %v1332
        %1335 = vrot.lane.b32.xlu0 %v1160, 96
        %v1336 = vpop.permute.xlu0 %1335
        %v1338 = vsel %vm1209, %v1333, 0
        %v1341 = vsel %vm1225, %v1336, 0
        %1343 = vmatprep.subr.bf16.mxu0 0
        %1344 = vmatpush1.bf16.msra.mxu0 %v1341
        %1345 = vmatprep.subr.bf16.mxu0 0
        %1346 = vmatpush1.bf16.msra.mxu0 0
        %1347 = vmatprep.subr.bf16.mxu0 0
        %1348 = vmatpush1.bf16.msra.mxu0 0
        %1349 = vmatprep.subr.bf16.mxu0 0
        %1350 = vmatpush1.bf16.msra.mxu0 0
        %1351 = vmatprep.subr.bf16.mxu0 0
        %1352 = vmatpush1.bf16.msra.mxu0 0
        %1353 = vmatprep.subr.bf16.mxu0 0
        %1354 = vmatpush1.bf16.msra.mxu0 0
        %1355 = vmatprep.subr.bf16.mxu0 0
        %1356 = vmatpush1.bf16.msra.mxu0 0
        %1357 = vmatprep.subr.bf16.mxu0 0
        %1358 = vmatpush1.bf16.msra.mxu0 0
        %1359 = vmatprep.subr.bf16.mxu0 0
        %1360 = vmatpush1.bf16.msra.mxu0 0
        %1361 = vmatprep.subr.bf16.mxu0 0
        %1362 = vmatpush1.bf16.msra.mxu0 0
        %1363 = vmatprep.subr.bf16.mxu0 0
        %1364 = vmatpush1.bf16.msra.mxu0 0
        %1365 = vmatprep.subr.bf16.mxu0 0
        %1366 = vmatpush1.bf16.msra.mxu0 0
        %1367 = vmatprep.subr.bf16.mxu0 0
        %1368 = vmatpush1.bf16.msra.mxu0 0
        %1369 = vmatprep.subr.bf16.mxu0 0
        %1370 = vmatpush1.bf16.msra.mxu0 0
        %1371 = vmatprep.subr.bf16.mxu0 0
        %1372 = vmatpush1.bf16.msra.mxu0 0
        %1373 = vmatprep.subr.bf16.mxu0 0
        %1374 = vmatpush1.bf16.msra.mxu0 0
        %1375 = vmatprep.mubr.bf16.mxu0 0
        %1376 = vmatmul.mubr.bf16.gmra.mrb[0].mxu0 %v1338
        %v1377 = vpop.f32.mrb[0].mxu0
        %v1378 = vadd.f32 0.0, %v1377
        %v1379 = vpop.f32.mrb[0].mxu0
        %v1380 = vpop.f32.mrb[0].mxu0
        %v1381 = vpop.f32.mrb[0].mxu0
        %1382 = vdwg.mxu0
        %1383 = vrot.lane.b32.xlu0 %v1158, 64
        %v1384 = vpop.permute.xlu0 %1383
        %1385 = vrot.lane.b32.xlu0 %v1159, 64
        %v1386 = vpop.permute.xlu0 %1385
        %v1388 = vsel %vm1161, %v1384, 0
        %v1391 = vsel %vm1161, %v1386, 0
        %1393 = vmatprep.subr.bf16.mxu0 0
        %1394 = vmatpush1.bf16.xpose.msra.mxu0 %v1391
        %1395 = vmatprep.subr.bf16.mxu0 0
        %1396 = vmatpush1.bf16.xpose.msra.mxu0 0
        %1397 = vmatprep.subr.bf16.mxu0 0
        %1398 = vmatpush1.bf16.xpose.msra.mxu0 0
        %1399 = vmatprep.subr.bf16.mxu0 0
        %1400 = vmatpush1.bf16.xpose.msra.mxu0 0
        %1401 = vmatprep.subr.bf16.mxu0 0
        %1402 = vmatpush1.bf16.xpose.msra.mxu0 0
        %1403 = vmatprep.subr.bf16.mxu0 0
        %1404 = vmatpush1.bf16.xpose.msra.mxu0 0
        %1405 = vmatprep.subr.bf16.mxu0 0
        %1406 = vmatpush1.bf16.xpose.msra.mxu0 0
        %1407 = vmatprep.subr.bf16.mxu0 0
        %1408 = vmatpush1.bf16.xpose.msra.mxu0 0
        %1409 = vmatprep.subr.bf16.mxu0 0
        %1410 = vmatpush1.bf16.xpose.msra.mxu0 0
        %1411 = vmatprep.subr.bf16.mxu0 0
        %1412 = vmatpush1.bf16.xpose.msra.mxu0 0
        %1413 = vmatprep.subr.bf16.mxu0 0
        %1414 = vmatpush1.bf16.xpose.msra.mxu0 0
        %1415 = vmatprep.subr.bf16.mxu0 0
        %1416 = vmatpush1.bf16.xpose.msra.mxu0 0
        %1417 = vmatprep.subr.bf16.mxu0 0
        %1418 = vmatpush1.bf16.xpose.msra.mxu0 0
        %1419 = vmatprep.subr.bf16.mxu0 0
        %1420 = vmatpush1.bf16.xpose.msra.mxu0 0
        %1421 = vmatprep.subr.bf16.mxu0 0
        %1422 = vmatpush1.bf16.xpose.msra.mxu0 0
        %1423 = vmatprep.subr.bf16.mxu0 0
        %1424 = vmatpush1.bf16.xpose.msra.mxu0 0
        %1425 = vmatprep.mubr.bf16.mxu0 0
        %1426 = vmatmul.mubr.bf16.gmra.mrb[0].mxu0 %v1388
        %v1427 = vpop.f32.mrb[0].mxu0
        %v1428 = vadd.f32 0.0, %v1427
        %v1429 = vpop.f32.mrb[0].mxu0
        %v1430 = vpop.f32.mrb[0].mxu0
        %v1431 = vpop.f32.mrb[0].mxu0
        %1432 = vdwg.mxu0
        %v1433 = vmul.f32 %v1428, 0.17677669
        %v1434 = vsel %vm1209, %v1433, -inf
        %1435 = vmax.xlane.f32.xlu0 %v1434
        %v1436 = vpop.xlane.xlu0 %1435
        %v1437 = vsub.f32 %v1433, %v1436
        %v1438 = vmul.f32 %v1437, 1.442695
        %v1439 = vpow.pop %v1438
        %v1440 = vsel %vm1209, %v1439, 0.0
        %1441 = vadd.xlane.f32.xlu0 %v1440
        %v1442 = vpop.xlane.xlu0 %1441
        %v1443 = vrcp.pop %v1442
        %v1444 = vmul.f32 %v1439, %v1443
        %v1445 = vpack.c.bf16 %v1444, %v1444
        %1446 = vrot.lane.b32.xlu0 %v1160, 64
        %v1447 = vpop.permute.xlu0 %1446
        %v1449 = vsel %vm1209, %v1445, 0
        %v1452 = vsel %vm1225, %v1447, 0
        %1454 = vmatprep.subr.bf16.mxu0 0
        %1455 = vmatpush1.bf16.msra.mxu0 %v1452
        %1456 = vmatprep.subr.bf16.mxu0 0
        %1457 = vmatpush1.bf16.msra.mxu0 0
        %1458 = vmatprep.subr.bf16.mxu0 0
        %1459 = vmatpush1.bf16.msra.mxu0 0
        %1460 = vmatprep.subr.bf16.mxu0 0
        %1461 = vmatpush1.bf16.msra.mxu0 0
        %1462 = vmatprep.subr.bf16.mxu0 0
        %1463 = vmatpush1.bf16.msra.mxu0 0
        %1464 = vmatprep.subr.bf16.mxu0 0
        %1465 = vmatpush1.bf16.msra.mxu0 0
        %1466 = vmatprep.subr.bf16.mxu0 0
        %1467 = vmatpush1.bf16.msra.mxu0 0
        %1468 = vmatprep.subr.bf16.mxu0 0
        %1469 = vmatpush1.bf16.msra.mxu0 0
        %1470 = vmatprep.subr.bf16.mxu0 0
        %1471 = vmatpush1.bf16.msra.mxu0 0
        %1472 = vmatprep.subr.bf16.mxu0 0
        %1473 = vmatpush1.bf16.msra.mxu0 0
        %1474 = vmatprep.subr.bf16.mxu0 0
        %1475 = vmatpush1.bf16.msra.mxu0 0
        %1476 = vmatprep.subr.bf16.mxu0 0
        %1477 = vmatpush1.bf16.msra.mxu0 0
        %1478 = vmatprep.subr.bf16.mxu0 0
        %1479 = vmatpush1.bf16.msra.mxu0 0
        %1480 = vmatprep.subr.bf16.mxu0 0
        %1481 = vmatpush1.bf16.msra.mxu0 0
        %1482 = vmatprep.subr.bf16.mxu0 0
        %1483 = vmatpush1.bf16.msra.mxu0 0
        %1484 = vmatprep.subr.bf16.mxu0 0
        %1485 = vmatpush1.bf16.msra.mxu0 0
        %1486 = vmatprep.mubr.bf16.mxu0 0
        %1487 = vmatmul.mubr.bf16.gmra.mrb[0].mxu0 %v1449
        %v1488 = vpop.f32.mrb[0].mxu0
        %v1489 = vadd.f32 0.0, %v1488
        %v1490 = vpop.f32.mrb[0].mxu0
        %v1491 = vpop.f32.mrb[0].mxu0
        %v1492 = vpop.f32.mrb[0].mxu0
        %1493 = vdwg.mxu0
        %1494 = vrot.lane.b32.xlu0 %v1158, 32
        %v1495 = vpop.permute.xlu0 %1494
        %1496 = vrot.lane.b32.xlu0 %v1159, 32
        %v1497 = vpop.permute.xlu0 %1496
        %v1499 = vsel %vm1161, %v1495, 0
        %v1502 = vsel %vm1161, %v1497, 0
        %1504 = vmatprep.subr.bf16.mxu0 0
        %1505 = vmatpush1.bf16.xpose.msra.mxu0 %v1502
        %1506 = vmatprep.subr.bf16.mxu0 0
        %1507 = vmatpush1.bf16.xpose.msra.mxu0 0
        %1508 = vmatprep.subr.bf16.mxu0 0
        %1509 = vmatpush1.bf16.xpose.msra.mxu0 0
        %1510 = vmatprep.subr.bf16.mxu0 0
        %1511 = vmatpush1.bf16.xpose.msra.mxu0 0
        %1512 = vmatprep.subr.bf16.mxu0 0
        %1513 = vmatpush1.bf16.xpose.msra.mxu0 0
        %1514 = vmatprep.subr.bf16.mxu0 0
        %1515 = vmatpush1.bf16.xpose.msra.mxu0 0
        %1516 = vmatprep.subr.bf16.mxu0 0
        %1517 = vmatpush1.bf16.xpose.msra.mxu0 0
        %1518 = vmatprep.subr.bf16.mxu0 0
        %1519 = vmatpush1.bf16.xpose.msra.mxu0 0
        %1520 = vmatprep.subr.bf16.mxu0 0
        %1521 = vmatpush1.bf16.xpose.msra.mxu0 0
        %1522 = vmatprep.subr.bf16.mxu0 0
        %1523 = vmatpush1.bf16.xpose.msra.mxu0 0
        %1524 = vmatprep.subr.bf16.mxu0 0
        %1525 = vmatpush1.bf16.xpose.msra.mxu0 0
        %1526 = vmatprep.subr.bf16.mxu0 0
        %1527 = vmatpush1.bf16.xpose.msra.mxu0 0
        %1528 = vmatprep.subr.bf16.mxu0 0
        %1529 = vmatpush1.bf16.xpose.msra.mxu0 0
        %1530 = vmatprep.subr.bf16.mxu0 0
        %1531 = vmatpush1.bf16.xpose.msra.mxu0 0
        %1532 = vmatprep.subr.bf16.mxu0 0
        %1533 = vmatpush1.bf16.xpose.msra.mxu0 0
        %1534 = vmatprep.subr.bf16.mxu0 0
        %1535 = vmatpush1.bf16.xpose.msra.mxu0 0
        %1536 = vmatprep.mubr.bf16.mxu0 0
        %1537 = vmatmul.mubr.bf16.gmra.mrb[0].mxu0 %v1499
        %v1538 = vpop.f32.mrb[0].mxu0
        %v1539 = vadd.f32 0.0, %v1538
        %v1540 = vpop.f32.mrb[0].mxu0
        %v1541 = vpop.f32.mrb[0].mxu0
        %v1542 = vpop.f32.mrb[0].mxu0
        %1543 = vdwg.mxu0
        %v1544 = vmul.f32 %v1539, 0.17677669
        %v1545 = vsel %vm1209, %v1544, -inf
        %1546 = vmax.xlane.f32.xlu0 %v1545
        %v1547 = vpop.xlane.xlu0 %1546
        %v1548 = vsub.f32 %v1544, %v1547
        %v1549 = vmul.f32 %v1548, 1.442695
        %v1550 = vpow.pop %v1549
        %v1551 = vsel %vm1209, %v1550, 0.0
        %1552 = vadd.xlane.f32.xlu0 %v1551
        %v1553 = vpop.xlane.xlu0 %1552
        %v1554 = vrcp.pop %v1553
        %v1555 = vmul.f32 %v1550, %v1554
        %v1556 = vpack.c.bf16 %v1555, %v1555
        %1557 = vrot.lane.b32.xlu0 %v1160, 32
        %v1558 = vpop.permute.xlu0 %1557
        %v1560 = vsel %vm1209, %v1556, 0
        %v1563 = vsel %vm1225, %v1558, 0
        %1565 = vmatprep.subr.bf16.mxu0 0
        %1566 = vmatpush1.bf16.msra.mxu0 %v1563
        %1567 = vmatprep.subr.bf16.mxu0 0
        %1568 = vmatpush1.bf16.msra.mxu0 0
        %1569 = vmatprep.subr.bf16.mxu0 0
        %1570 = vmatpush1.bf16.msra.mxu0 0
        %1571 = vmatprep.subr.bf16.mxu0 0
        %1572 = vmatpush1.bf16.msra.mxu0 0
        %1573 = vmatprep.subr.bf16.mxu0 0
        %1574 = vmatpush1.bf16.msra.mxu0 0
        %1575 = vmatprep.subr.bf16.mxu0 0
        %1576 = vmatpush1.bf16.msra.mxu0 0
        %1577 = vmatprep.subr.bf16.mxu0 0
        %1578 = vmatpush1.bf16.msra.mxu0 0
        %1579 = vmatprep.subr.bf16.mxu0 0
        %1580 = vmatpush1.bf16.msra.mxu0 0
        %1581 = vmatprep.subr.bf16.mxu0 0
        %1582 = vmatpush1.bf16.msra.mxu0 0
        %1583 = vmatprep.subr.bf16.mxu0 0
        %1584 = vmatpush1.bf16.msra.mxu0 0
        %1585 = vmatprep.subr.bf16.mxu0 0
        %1586 = vmatpush1.bf16.msra.mxu0 0
        %1587 = vmatprep.subr.bf16.mxu0 0
        %1588 = vmatpush1.bf16.msra.mxu0 0
        %1589 = vmatprep.subr.bf16.mxu0 0
        %1590 = vmatpush1.bf16.msra.mxu0 0
        %1591 = vmatprep.subr.bf16.mxu0 0
        %1592 = vmatpush1.bf16.msra.mxu0 0
        %1593 = vmatprep.subr.bf16.mxu0 0
        %1594 = vmatpush1.bf16.msra.mxu0 0
        %1595 = vmatprep.subr.bf16.mxu0 0
        %1596 = vmatpush1.bf16.msra.mxu0 0
        %1597 = vmatprep.mubr.bf16.mxu0 0
        %1598 = vmatmul.mubr.bf16.gmra.mrb[0].mxu0 %v1560
        %v1599 = vpop.f32.mrb[0].mxu0
        %v1600 = vadd.f32 0.0, %v1599
        %v1601 = vpop.f32.mrb[0].mxu0
        %v1602 = vpop.f32.mrb[0].mxu0
        %v1603 = vpop.f32.mrb[0].mxu0
        %1604 = vdwg.mxu0
        %1606 = vrot.lane.b32.xlu0 %v1378, 32
        %v1607 = vpop.permute.xlu0 %1606
        %1610 = vrot.lane.b32.xlu0 %v1489, 64
        %v1611 = vpop.permute.xlu0 %1610
        %1614 = vrot.lane.b32.xlu0 %v1600, 96
        %v1615 = vpop.permute.xlu0 %1614
        %v1617 = vsel %vm1161, %v1264, %v1607
        %vm1618 = vcmask 523264
        %v1619 = vsel %vm1618, %v1617, %v1611
        %vm1620 = vcmask 785408
        %v1621 = vsel %vm1620, %v1619, %v1615
        %v1622 = vld [vmem:[#allocation7] sm:$0xf]
        %v1623 = vld [vmem:[#allocation7 + $0x4] sm:$0xf]
        %v1624 = vld [vmem:[#allocation7 + $0x8] sm:$0xf]
        %v1625 = vld [vmem:[#allocation7 + $0xc] sm:$0xf]
        %v1626 = vld [vmem:[#allocation7 + $0x10] sm:$0xf]
        %v1627 = vld [vmem:[#allocation7 + $0x14] sm:$0xf]
        %v1628 = vld [vmem:[#allocation7 + $0x18] sm:$0xf]
        %v1629 = vld [vmem:[#allocation7 + $0x1c] sm:$0xf]
        %v1630 = vld [vmem:[#allocation7 + $0x20] sm:$0xf]
        %v1631 = vld [vmem:[#allocation7 + $0x24] sm:$0xf]
        %v1632 = vld [vmem:[#allocation7 + $0x28] sm:$0xf]
        %v1633 = vld [vmem:[#allocation7 + $0x2c] sm:$0xf]
        %v1634 = vld [vmem:[#allocation7 + $0x30] sm:$0xf]
        %v1635 = vld [vmem:[#allocation7 + $0x34] sm:$0xf]
        %v1636 = vld [vmem:[#allocation7 + $0x38] sm:$0xf]
        %v1637 = vld [vmem:[#allocation7 + $0x3c] sm:$0xf]
        %v1638 = vld [vmem:[%s7] sm:$0x1]
        %v1639 = vpack.c.bf16 %v1621, %v1621
        %v1641 = vlaneseq
        %v1642 = vshrl.u32 %v1641, 7
        %v1643 = vsub.s32 0, %v1642
        %v1644 = vrot.slane %v1638, %v1643
        %v1662 = vunpack.c.l.b16 %v1622
        %v1663 = vunpack.c.l.b16 %v1623
        %v1664 = vunpack.c.l.b16 %v1624
        %v1665 = vunpack.c.l.b16 %v1625
        %v1666 = vunpack.c.l.b16 %v1626
        %v1667 = vunpack.c.l.b16 %v1627
        %v1668 = vunpack.c.l.b16 %v1628
        %v1669 = vunpack.c.l.b16 %v1629
        %v1670 = vunpack.c.l.b16 %v1630
        %v1671 = vunpack.c.l.b16 %v1631
        %v1672 = vunpack.c.l.b16 %v1632
        %v1673 = vunpack.c.l.b16 %v1633
        %v1674 = vunpack.c.l.b16 %v1634
        %v1675 = vunpack.c.l.b16 %v1635
        %v1676 = vunpack.c.l.b16 %v1636
        %v1677 = vunpack.c.l.b16 %v1637
        %v1678 = vpack.c.b16 %v1663, %v1662
        %v1679 = vpack.c.b16 %v1665, %v1664
        %v1680 = vpack.c.b16 %v1667, %v1666
        %v1681 = vpack.c.b16 %v1669, %v1668
        %v1682 = vpack.c.b16 %v1671, %v1670
        %v1683 = vpack.c.b16 %v1673, %v1672
        %v1684 = vpack.c.b16 %v1675, %v1674
        %v1685 = vpack.c.b16 %v1677, %v1676
        %1694 = vmatprep.subr.bf16.mxu0 0
        %1695 = vmatpush1.bf16.msra.mxu0 %v1678
        %1696 = vmatprep.subr.bf16.mxu0 0
        %1697 = vmatpush1.bf16.msra.mxu0 %v1679
        %1698 = vmatprep.subr.bf16.mxu0 0
        %1699 = vmatpush1.bf16.msra.mxu0 %v1680
        %1700 = vmatprep.subr.bf16.mxu0 0
        %1701 = vmatpush1.bf16.msra.mxu0 %v1681
        %1702 = vmatprep.subr.bf16.mxu0 0
        %1703 = vmatpush1.bf16.msra.mxu0 %v1682
        %1704 = vmatprep.subr.bf16.mxu0 0
        %1705 = vmatpush1.bf16.msra.mxu0 %v1683
        %1706 = vmatprep.subr.bf16.mxu0 0
        %1707 = vmatpush1.bf16.msra.mxu0 %v1684
        %1708 = vmatprep.subr.bf16.mxu0 0
        %1709 = vmatpush1.bf16.msra.mxu0 %v1685
        %1710 = vmatprep.subr.bf16.mxu0 0
        %1711 = vmatpush1.bf16.msra.mxu0 0
        %1712 = vmatprep.subr.bf16.mxu0 0
        %1713 = vmatpush1.bf16.msra.mxu0 0
        %1714 = vmatprep.subr.bf16.mxu0 0
        %1715 = vmatpush1.bf16.msra.mxu0 0
        %1716 = vmatprep.subr.bf16.mxu0 0
        %1717 = vmatpush1.bf16.msra.mxu0 0
        %1718 = vmatprep.subr.bf16.mxu0 0
        %1719 = vmatpush1.bf16.msra.mxu0 0
        %1720 = vmatprep.subr.bf16.mxu0 0
        %1721 = vmatpush1.bf16.msra.mxu0 0
        %1722 = vmatprep.subr.bf16.mxu0 0
        %1723 = vmatpush1.bf16.msra.mxu0 0
        %1724 = vmatprep.subr.bf16.mxu0 0
        %1725 = vmatpush1.bf16.msra.mxu0 0
        %1726 = vmatprep.mubr.bf16.mxu0 0
        %1727 = vmatmul.mubr.bf16.gmra.mrb[0].mxu0 %v1639
        %v1728 = vpop.f32.mrb[0].mxu0
        %v1729 = vadd.f32 %v1644, %v1728
        %v1730 = vpop.f32.mrb[0].mxu0
        %v1731 = vpop.f32.mrb[0].mxu0
        %v1732 = vpop.f32.mrb[0].mxu0
        %1733 = vdwg.mxu0
        %v1734 = vadd.f32 %v860, %v1729
        %s1735 = scalar_lea.vmem %s2, 1
        %v1736 = vld [vmem:[%s1735] sm:$0x1]
        %s1737 = scalar_lea.vmem %s3, 1
        %v1738 = vld [vmem:[%s1737] sm:$0x1]
        %1739 = vadd.xlane.f32.xlu0 %v1734
        %v1740 = vpop.xlane.xlu0 %1739
        %v1741 = vmul.f32 %v1740, %v867
        %v1742 = vsub.f32 %v1734, %v1741
        %v1743 = vmul.f32 %v1742, %v1742
        %1744 = vadd.xlane.f32.xlu0 %v1743
        %v1745 = vpop.xlane.xlu0 %1744
        %v1746 = vmul.f32 %v1745, %v873
        %v1747 = vrsqrt.pop %v1746
        %v1748 = vmul.f32 %v1746, %v1747
        %vm1749 = vcmp.eq.f32.partialorder %v1746, inf
        %v1750 = vsel %vm1749, %v1746, %v1748
        %vm1751 = vcmp.eq.f32.partialorder %v1746, 0.0
        %v1752 = vand.u32 %v1746, 2147483648
        %v1753 = vsel %vm1751, %v1752, %v1750
        %v1755 = vlaneseq
        %v1756 = vshrl.u32 %v1755, 7
        %v1757 = vsub.s32 0, %v1756
        %v1758 = vrot.slane %v1736, %v1757
        %v1760 = vmul.f32 %v1758, %v1742
        %v1761 = vadd.f32 %v1753, 1e-06
        %v1762 = vrcp.pop %v1761
        %v1763 = vmul.f32 %v1760, %v1762
        %v1765 = vlaneseq
        %v1766 = vshrl.u32 %v1765, 7
        %v1767 = vsub.s32 0, %v1766
        %v1768 = vrot.slane %v1738, %v1767
        %v1770 = vadd.f32 %v1763, %v1768
        %v1771 = vld [vmem:[#allocation8] sm:$0xf]
        %v1772 = vld [vmem:[#allocation8 + $0x4] sm:$0xf]
        %v1773 = vld [vmem:[#allocation8 + $0x8] sm:$0xf]
        %v1774 = vld [vmem:[#allocation8 + $0xc] sm:$0xf]
        %v1775 = vld [vmem:[#allocation8 + $0x10] sm:$0xf]
        %v1776 = vld [vmem:[#allocation8 + $0x14] sm:$0xf]
        %v1777 = vld [vmem:[#allocation8 + $0x18] sm:$0xf]
        %v1778 = vld [vmem:[#allocation8 + $0x1c] sm:$0xf]
        %v1779 = vld [vmem:[#allocation8 + $0x20] sm:$0xf]
        %v1780 = vld [vmem:[#allocation8 + $0x24] sm:$0xf]
        %v1781 = vld [vmem:[#allocation8 + $0x28] sm:$0xf]
        %v1782 = vld [vmem:[#allocation8 + $0x2c] sm:$0xf]
        %v1783 = vld [vmem:[#allocation8 + $0x30] sm:$0xf]
        %v1784 = vld [vmem:[#allocation8 + $0x34] sm:$0xf]
        %v1785 = vld [vmem:[#allocation8 + $0x38] sm:$0xf]
        %v1786 = vld [vmem:[#allocation8 + $0x3c] sm:$0xf]
        %v1787 = vld [vmem:[#allocation10] sm:$0x1]
        %v1788 = vpack.c.bf16 %v1770, %v1770
        %v1790 = vlaneseq
        %v1791 = vshrl.u32 %v1790, 7
        %v1792 = vsub.s32 0, %v1791
        %v1793 = vrot.slane %v1787, %v1792
        %v1811 = vunpack.c.l.b16 %v1771
        %v1812 = vunpack.c.l.b16 %v1772
        %v1813 = vunpack.c.l.b16 %v1773
        %v1814 = vunpack.c.l.b16 %v1774
        %v1815 = vunpack.c.l.b16 %v1775
        %v1816 = vunpack.c.l.b16 %v1776
        %v1817 = vunpack.c.l.b16 %v1777
        %v1818 = vunpack.c.l.b16 %v1778
        %v1819 = vunpack.c.l.b16 %v1779
        %v1820 = vunpack.c.l.b16 %v1780
        %v1821 = vunpack.c.l.b16 %v1781
        %v1822 = vunpack.c.l.b16 %v1782
        %v1823 = vunpack.c.l.b16 %v1783
        %v1824 = vunpack.c.l.b16 %v1784
        %v1825 = vunpack.c.l.b16 %v1785
        %v1826 = vunpack.c.l.b16 %v1786
        %v1827 = vpack.c.b16 %v1812, %v1811
        %v1828 = vpack.c.b16 %v1814, %v1813
        %v1829 = vpack.c.b16 %v1816, %v1815
        %v1830 = vpack.c.b16 %v1818, %v1817
        %v1831 = vpack.c.b16 %v1820, %v1819
        %v1832 = vpack.c.b16 %v1822, %v1821
        %v1833 = vpack.c.b16 %v1824, %v1823
        %v1834 = vpack.c.b16 %v1826, %v1825
        %1843 = vmatprep.subr.bf16.mxu0 0
        %1844 = vmatpush1.bf16.msra.mxu0 %v1827
        %1845 = vmatprep.subr.bf16.mxu0 0
        %1846 = vmatpush1.bf16.msra.mxu0 %v1828
        %1847 = vmatprep.subr.bf16.mxu0 0
        %1848 = vmatpush1.bf16.msra.mxu0 %v1829
        %1849 = vmatprep.subr.bf16.mxu0 0
        %1850 = vmatpush1.bf16.msra.mxu0 %v1830
        %1851 = vmatprep.subr.bf16.mxu0 0
        %1852 = vmatpush1.bf16.msra.mxu0 %v1831
        %1853 = vmatprep.subr.bf16.mxu0 0
        %1854 = vmatpush1.bf16.msra.mxu0 %v1832
        %1855 = vmatprep.subr.bf16.mxu0 0
        %1856 = vmatpush1.bf16.msra.mxu0 %v1833
        %1857 = vmatprep.subr.bf16.mxu0 0
        %1858 = vmatpush1.bf16.msra.mxu0 %v1834
        %1859 = vmatprep.subr.bf16.mxu0 0
        %1860 = vmatpush1.bf16.msra.mxu0 0
        %1861 = vmatprep.subr.bf16.mxu0 0
        %1862 = vmatpush1.bf16.msra.mxu0 0
        %1863 = vmatprep.subr.bf16.mxu0 0
        %1864 = vmatpush1.bf16.msra.mxu0 0
        %1865 = vmatprep.subr.bf16.mxu0 0
        %1866 = vmatpush1.bf16.msra.mxu0 0
        %1867 = vmatprep.subr.bf16.mxu0 0
        %1868 = vmatpush1.bf16.msra.mxu0 0
        %1869 = vmatprep.subr.bf16.mxu0 0
        %1870 = vmatpush1.bf16.msra.mxu0 0
        %1871 = vmatprep.subr.bf16.mxu0 0
        %1872 = vmatpush1.bf16.msra.mxu0 0
        %1873 = vmatprep.subr.bf16.mxu0 0
        %1874 = vmatpush1.bf16.msra.mxu0 0
        %1875 = vmatprep.mubr.bf16.mxu0 0
        %1876 = vmatmul.mubr.bf16.gmra.mrb[0].mxu0 %v1788
        %v1877 = vpop.f32.mrb[0].mxu0
        %v1878 = vadd.f32 %v1793, %v1877
        %v1879 = vpop.f32.mrb[0].mxu0
        %v1880 = vpop.f32.mrb[0].mxu0
        %v1881 = vpop.f32.mrb[0].mxu0
        %1882 = vdwg.mxu0
        %v1883 = vld [vmem:[#allocation11] sm:$0xff]
        %v1884 = vld [vmem:[#allocation11 + $0x8] sm:$0xff]
        %v1885 = vld [vmem:[#allocation11 + $0x10] sm:$0xff]
        %v1886 = vld [vmem:[#allocation11 + $0x18] sm:$0xff]
        %v1887 = vld [vmem:[#allocation11 + $0x20] sm:$0xff]
        %v1888 = vld [vmem:[#allocation11 + $0x28] sm:$0xff]
        %v1889 = vld [vmem:[#allocation11 + $0x30] sm:$0xff]
        %v1890 = vld [vmem:[#allocation11 + $0x38] sm:$0xff]
        %v1891 = vld [vmem:[#allocation11 + $0x40] sm:$0xff]
        %v1892 = vld [vmem:[#allocation11 + $0x48] sm:$0xff]
        %v1893 = vld [vmem:[#allocation11 + $0x50] sm:$0xff]
        %v1894 = vld [vmem:[#allocation11 + $0x58] sm:$0xff]
        %v1895 = vld [vmem:[#allocation11 + $0x60] sm:$0xff]
        %v1896 = vld [vmem:[#allocation11 + $0x68] sm:$0xff]
        %v1897 = vld [vmem:[#allocation11 + $0x70] sm:$0xff]
        %v1898 = vld [vmem:[#allocation11 + $0x78] sm:$0xff]
        %v1899 = vld [vmem:[#allocation13] sm:$0x3]
        %v1900 = vpack.c.bf16 %v862, %v861
        %v1902 = vlaneseq
        %v1903 = vshrl.u32 %v1902, 7
        %v1904 = vsub.s32 0, %v1903
        %v1905 = vrot.slane %v1899, %v1904
        %v1906 = vlaneseq
        %v1907 = vshrl.u32 %v1906, 7
        %v1908 = vsub.s32 1, %v1907
        %v1909 = vrot.slane %v1899, %v1908
        %v1928 = vunpack.c.l.b16 %v1883
        %v1929 = vunpack.c.h.b16 %v1883
        %v1930 = vunpack.c.l.b16 %v1884
        %v1931 = vunpack.c.h.b16 %v1884
        %v1932 = vunpack.c.l.b16 %v1885
        %v1933 = vunpack.c.h.b16 %v1885
        %v1934 = vunpack.c.l.b16 %v1886
        %v1935 = vunpack.c.h.b16 %v1886
        %v1936 = vunpack.c.l.b16 %v1887
        %v1937 = vunpack.c.h.b16 %v1887
        %v1938 = vunpack.c.l.b16 %v1888
        %v1939 = vunpack.c.h.b16 %v1888
        %v1940 = vunpack.c.l.b16 %v1889
        %v1941 = vunpack.c.h.b16 %v1889
        %v1942 = vunpack.c.l.b16 %v1890
        %v1943 = vunpack.c.h.b16 %v1890
        %v1944 = vunpack.c.l.b16 %v1891
        %v1945 = vunpack.c.h.b16 %v1891
        %v1946 = vunpack.c.l.b16 %v1892
        %v1947 = vunpack.c.h.b16 %v1892
        %v1948 = vunpack.c.l.b16 %v1893
        %v1949 = vunpack.c.h.b16 %v1893
        %v1950 = vunpack.c.l.b16 %v1894
        %v1951 = vunpack.c.h.b16 %v1894
        %v1952 = vunpack.c.l.b16 %v1895
        %v1953 = vunpack.c.h.b16 %v1895
        %v1954 = vunpack.c.l.b16 %v1896
        %v1955 = vunpack.c.h.b16 %v1896
        %v1956 = vunpack.c.l.b16 %v1897
        %v1957 = vunpack.c.h.b16 %v1897
        %v1958 = vunpack.c.l.b16 %v1898
        %v1959 = vunpack.c.h.b16 %v1898
        %v1960 = vpack.c.b16 %v1930, %v1928
        %v1961 = vpack.c.b16 %v1931, %v1929
        %v1962 = vpack.c.b16 %v1934, %v1932
        %v1963 = vpack.c.b16 %v1935, %v1933
        %v1964 = vpack.c.b16 %v1938, %v1936
        %v1965 = vpack.c.b16 %v1939, %v1937
        %v1966 = vpack.c.b16 %v1942, %v1940
        %v1967 = vpack.c.b16 %v1943, %v1941
        %v1968 = vpack.c.b16 %v1946, %v1944
        %v1969 = vpack.c.b16 %v1947, %v1945
        %v1970 = vpack.c.b16 %v1950, %v1948
        %v1971 = vpack.c.b16 %v1951, %v1949
        %v1972 = vpack.c.b16 %v1954, %v1952
        %v1973 = vpack.c.b16 %v1955, %v1953
        %v1974 = vpack.c.b16 %v1958, %v1956
        %v1975 = vpack.c.b16 %v1959, %v1957
        %1992 = vmatprep.subr.bf16.mxu0 %v1961
        %1993 = vmatpush1.bf16.msra.mxu0 %v1960
        %1994 = vmatprep.subr.bf16.mxu0 %v1963
        %1995 = vmatpush1.bf16.msra.mxu0 %v1962
        %1996 = vmatprep.subr.bf16.mxu0 %v1965
        %1997 = vmatpush1.bf16.msra.mxu0 %v1964
        %1998 = vmatprep.subr.bf16.mxu0 %v1967
        %1999 = vmatpush1.bf16.msra.mxu0 %v1966
        %2000 = vmatprep.subr.bf16.mxu0 %v1969
        %2001 = vmatpush1.bf16.msra.mxu0 %v1968
        %2002 = vmatprep.subr.bf16.mxu0 %v1971
        %2003 = vmatpush1.bf16.msra.mxu0 %v1970
        %2004 = vmatprep.subr.bf16.mxu0 %v1973
        %2005 = vmatpush1.bf16.msra.mxu0 %v1972
        %2006 = vmatprep.subr.bf16.mxu0 %v1975
        %2007 = vmatpush1.bf16.msra.mxu0 %v1974
        %2008 = vmatprep.subr.bf16.mxu0 0
        %2009 = vmatpush1.bf16.msra.mxu0 0
        %2010 = vmatprep.subr.bf16.mxu0 0
        %2011 = vmatpush1.bf16.msra.mxu0 0
        %2012 = vmatprep.subr.bf16.mxu0 0
        %2013 = vmatpush1.bf16.msra.mxu0 0
        %2014 = vmatprep.subr.bf16.mxu0 0
        %2015 = vmatpush1.bf16.msra.mxu0 0
        %2016 = vmatprep.subr.bf16.mxu0 0
        %2017 = vmatpush1.bf16.msra.mxu0 0
        %2018 = vmatprep.subr.bf16.mxu0 0
        %2019 = vmatpush1.bf16.msra.mxu0 0
        %2020 = vmatprep.subr.bf16.mxu0 0
        %2021 = vmatpush1.bf16.msra.mxu0 0
        %2022 = vmatprep.subr.bf16.mxu0 0
        %2023 = vmatpush1.bf16.msra.mxu0 0
        %2024 = vmatprep.mubr.bf16.mxu0 0
        %2025 = vmatmul.mubr.bf16.gmra.mrb[0].mxu0 %v1900
        %v2026 = vpop.f32.mrb[0].mxu0
        %v2027 = vadd.f32 %v1905, %v2026
        %v2028 = vpop.f32.mrb[0].mxu0
        %v2029 = vadd.f32 %v1909, %v2028
        %v2030 = vpop.f32.mrb[0].mxu0
        %v2031 = vadd.f32 %v1905, %v2030
        %v2032 = vpop.f32.mrb[0].mxu0
        %v2033 = vadd.f32 %v1909, %v2032
        %2034 = vdwg.mxu0
        %v2035 = vpack.c.bf16 %v1878, %v1878
        %v2036 = vpack.c.bf16 %v2031, %v2027
        %v2037 = vpack.c.bf16 %v2033, %v2029
        %v2039 = vsel %vm1161, %v2035, 0
        %v2042 = vsel %vm1161, %v2036, 0
        %2044 = vmatprep.subr.bf16.mxu0 0
        %2045 = vmatpush1.bf16.xpose.msra.mxu0 %v2042
        %2046 = vmatprep.subr.bf16.mxu0 0
        %2047 = vmatpush1.bf16.xpose.msra.mxu0 0
        %2048 = vmatprep.subr.bf16.mxu0 0
        %2049 = vmatpush1.bf16.xpose.msra.mxu0 0
        %2050 = vmatprep.subr.bf16.mxu0 0
        %2051 = vmatpush1.bf16.xpose.msra.mxu0 0
        %2052 = vmatprep.subr.bf16.mxu0 0
        %2053 = vmatpush1.bf16.xpose.msra.mxu0 0
        %2054 = vmatprep.subr.bf16.mxu0 0
        %2055 = vmatpush1.bf16.xpose.msra.mxu0 0
        %2056 = vmatprep.subr.bf16.mxu0 0
        %2057 = vmatpush1.bf16.xpose.msra.mxu0 0
        %2058 = vmatprep.subr.bf16.mxu0 0
        %2059 = vmatpush1.bf16.xpose.msra.mxu0 0
        %2060 = vmatprep.subr.bf16.mxu0 0
        %2061 = vmatpush1.bf16.xpose.msra.mxu0 0
        %2062 = vmatprep.subr.bf16.mxu0 0
        %2063 = vmatpush1.bf16.xpose.msra.mxu0 0
        %2064 = vmatprep.subr.bf16.mxu0 0
        %2065 = vmatpush1.bf16.xpose.msra.mxu0 0
        %2066 = vmatprep.subr.bf16.mxu0 0
        %2067 = vmatpush1.bf16.xpose.msra.mxu0 0
        %2068 = vmatprep.subr.bf16.mxu0 0
        %2069 = vmatpush1.bf16.xpose.msra.mxu0 0
        %2070 = vmatprep.subr.bf16.mxu0 0
        %2071 = vmatpush1.bf16.xpose.msra.mxu0 0
        %2072 = vmatprep.subr.bf16.mxu0 0
        %2073 = vmatpush1.bf16.xpose.msra.mxu0 0
        %2074 = vmatprep.subr.bf16.mxu0 0
        %2075 = vmatpush1.bf16.xpose.msra.mxu0 0
        %2076 = vmatprep.mubr.bf16.mxu0 0
        %2077 = vmatmul.mubr.bf16.gmra.mrb[0].mxu0 %v2039
        %v2078 = vpop.f32.mrb[0].mxu0
        %v2079 = vadd.f32 0.0, %v2078
        %v2080 = vpop.f32.mrb[0].mxu0
        %v2081 = vpop.f32.mrb[0].mxu0
        %v2082 = vpop.f32.mrb[0].mxu0
        %2083 = vdwg.mxu0
        %v2084 = vmul.f32 %v2079, 0.17677669
        %vm2085 = vcmask 130048
        %v2086 = vsel %vm2085, %v2084, -inf
        %2087 = vmax.xlane.f32.xlu0 %v2086
        %v2088 = vpop.xlane.xlu0 %2087
        %v2089 = vsub.f32 %v2084, %v2088
        %v2090 = vmul.f32 %v2089, 1.442695
        %v2091 = vpow.pop %v2090
        %v2092 = vsel %vm2085, %v2091, 0.0
        %2093 = vadd.xlane.f32.xlu0 %v2092
        %v2094 = vpop.xlane.xlu0 %2093
        %v2095 = vrcp.pop %v2094
        %v2096 = vmul.f32 %v2091, %v2095
        %v2097 = vpack.c.bf16 %v2096, %v2096
        %v2099 = vsel %vm2085, %v2097, 0
        %2101 = vmatprep.subr.bf16.mxu0 0
        %2102 = vmatpush1.bf16.msra.mxu0 %v2037
        %2103 = vmatprep.subr.bf16.mxu0 0
        %2104 = vmatpush1.bf16.msra.mxu0 0
        %2105 = vmatprep.subr.bf16.mxu0 0
        %2106 = vmatpush1.bf16.msra.mxu0 0
        %2107 = vmatprep.subr.bf16.mxu0 0
        %2108 = vmatpush1.bf16.msra.mxu0 0
        %2109 = vmatprep.subr.bf16.mxu0 0
        %2110 = vmatpush1.bf16.msra.mxu0 0
        %2111 = vmatprep.subr.bf16.mxu0 0
        %2112 = vmatpush1.bf16.msra.mxu0 0
        %2113 = vmatprep.subr.bf16.mxu0 0
        %2114 = vmatpush1.bf16.msra.mxu0 0
        %2115 = vmatprep.subr.bf16.mxu0 0
        %2116 = vmatpush1.bf16.msra.mxu0 0
        %2117 = vmatprep.subr.bf16.mxu0 0
        %2118 = vmatpush1.bf16.msra.mxu0 0
        %2119 = vmatprep.subr.bf16.mxu0 0
        %2120 = vmatpush1.bf16.msra.mxu0 0
        %2121 = vmatprep.subr.bf16.mxu0 0
        %2122 = vmatpush1.bf16.msra.mxu0 0
        %2123 = vmatprep.subr.bf16.mxu0 0
        %2124 = vmatpush1.bf16.msra.mxu0 0
        %2125 = vmatprep.subr.bf16.mxu0 0
        %2126 = vmatpush1.bf16.msra.mxu0 0
        %2127 = vmatprep.subr.bf16.mxu0 0
        %2128 = vmatpush1.bf16.msra.mxu0 0
        %2129 = vmatprep.subr.bf16.mxu0 0
        %2130 = vmatpush1.bf16.msra.mxu0 0
        %2131 = vmatprep.subr.bf16.mxu0 0
        %2132 = vmatpush1.bf16.msra.mxu0 0
        %2133 = vmatprep.mubr.bf16.mxu0 0
        %2134 = vmatmul.mubr.bf16.gmra.mrb[0].mxu0 %v2099
        %v2135 = vpop.f32.mrb[0].mxu0
        %v2136 = vadd.f32 0.0, %v2135
        %v2137 = vpop.f32.mrb[0].mxu0
        %v2138 = vpop.f32.mrb[0].mxu0
        %v2139 = vpop.f32.mrb[0].mxu0
        %2140 = vdwg.mxu0
        %2142 = vrot.lane.b32.xlu0 %v2035, 96
        %v2143 = vpop.permute.xlu0 %2142
        %2145 = vrot.lane.b32.xlu0 %v2036, 96
        %v2146 = vpop.permute.xlu0 %2145
        %v2148 = vsel %vm1161, %v2143, 0
        %v2151 = vsel %vm1161, %v2146, 0
        %2153 = vmatprep.subr.bf16.mxu0 0
        %2154 = vmatpush1.bf16.xpose.msra.mxu0 %v2151
        %2155 = vmatprep.subr.bf16.mxu0 0
        %2156 = vmatpush1.bf16.xpose.msra.mxu0 0
        %2157 = vmatprep.subr.bf16.mxu0 0
        %2158 = vmatpush1.bf16.xpose.msra.mxu0 0
        %2159 = vmatprep.subr.bf16.mxu0 0
        %2160 = vmatpush1.bf16.xpose.msra.mxu0 0
        %2161 = vmatprep.subr.bf16.mxu0 0
        %2162 = vmatpush1.bf16.xpose.msra.mxu0 0
        %2163 = vmatprep.subr.bf16.mxu0 0
        %2164 = vmatpush1.bf16.xpose.msra.mxu0 0
        %2165 = vmatprep.subr.bf16.mxu0 0
        %2166 = vmatpush1.bf16.xpose.msra.mxu0 0
        %2167 = vmatprep.subr.bf16.mxu0 0
        %2168 = vmatpush1.bf16.xpose.msra.mxu0 0
        %2169 = vmatprep.subr.bf16.mxu0 0
        %2170 = vmatpush1.bf16.xpose.msra.mxu0 0
        %2171 = vmatprep.subr.bf16.mxu0 0
        %2172 = vmatpush1.bf16.xpose.msra.mxu0 0
        %2173 = vmatprep.subr.bf16.mxu0 0
        %2174 = vmatpush1.bf16.xpose.msra.mxu0 0
        %2175 = vmatprep.subr.bf16.mxu0 0
        %2176 = vmatpush1.bf16.xpose.msra.mxu0 0
        %2177 = vmatprep.subr.bf16.mxu0 0
        %2178 = vmatpush1.bf16.xpose.msra.mxu0 0
        %2179 = vmatprep.subr.bf16.mxu0 0
        %2180 = vmatpush1.bf16.xpose.msra.mxu0 0
        %2181 = vmatprep.subr.bf16.mxu0 0
        %2182 = vmatpush1.bf16.xpose.msra.mxu0 0
        %2183 = vmatprep.subr.bf16.mxu0 0
        %2184 = vmatpush1.bf16.xpose.msra.mxu0 0
        %2185 = vmatprep.mubr.bf16.mxu0 0
        %2186 = vmatmul.mubr.bf16.gmra.mrb[0].mxu0 %v2148
        %v2187 = vpop.f32.mrb[0].mxu0
        %v2188 = vadd.f32 0.0, %v2187
        %v2189 = vpop.f32.mrb[0].mxu0
        %v2190 = vpop.f32.mrb[0].mxu0
        %v2191 = vpop.f32.mrb[0].mxu0
        %2192 = vdwg.mxu0
        %v2193 = vmul.f32 %v2188, 0.17677669
        %v2194 = vsel %vm2085, %v2193, -inf
        %2195 = vmax.xlane.f32.xlu0 %v2194
        %v2196 = vpop.xlane.xlu0 %2195
        %v2197 = vsub.f32 %v2193, %v2196
        %v2198 = vmul.f32 %v2197, 1.442695
        %v2199 = vpow.pop %v2198
        %v2200 = vsel %vm2085, %v2199, 0.0
        %2201 = vadd.xlane.f32.xlu0 %v2200
        %v2202 = vpop.xlane.xlu0 %2201
        %v2203 = vrcp.pop %v2202
        %v2204 = vmul.f32 %v2199, %v2203
        %v2205 = vpack.c.bf16 %v2204, %v2204
        %2207 = vrot.lane.b32.xlu0 %v2037, 96
        %v2208 = vpop.permute.xlu0 %2207
        %v2211 = vsel %vm2085, %v2205, 0
        %2213 = vmatprep.subr.bf16.mxu0 0
        %2214 = vmatpush1.bf16.msra.mxu0 %v2208
        %2215 = vmatprep.subr.bf16.mxu0 0
        %2216 = vmatpush1.bf16.msra.mxu0 0
        %2217 = vmatprep.subr.bf16.mxu0 0
        %2218 = vmatpush1.bf16.msra.mxu0 0
        %2219 = vmatprep.subr.bf16.mxu0 0
        %2220 = vmatpush1.bf16.msra.mxu0 0
        %2221 = vmatprep.subr.bf16.mxu0 0
        %2222 = vmatpush1.bf16.msra.mxu0 0
        %2223 = vmatprep.subr.bf16.mxu0 0
        %2224 = vmatpush1.bf16.msra.mxu0 0
        %2225 = vmatprep.subr.bf16.mxu0 0
        %2226 = vmatpush1.bf16.msra.mxu0 0
        %2227 = vmatprep.subr.bf16.mxu0 0
        %2228 = vmatpush1.bf16.msra.mxu0 0
        %2229 = vmatprep.subr.bf16.mxu0 0
        %2230 = vmatpush1.bf16.msra.mxu0 0
        %2231 = vmatprep.subr.bf16.mxu0 0
        %2232 = vmatpush1.bf16.msra.mxu0 0
        %2233 = vmatprep.subr.bf16.mxu0 0
        %2234 = vmatpush1.bf16.msra.mxu0 0
        %2235 = vmatprep.subr.bf16.mxu0 0
        %2236 = vmatpush1.bf16.msra.mxu0 0
        %2237 = vmatprep.subr.bf16.mxu0 0
        %2238 = vmatpush1.bf16.msra.mxu0 0
        %2239 = vmatprep.subr.bf16.mxu0 0
        %2240 = vmatpush1.bf16.msra.mxu0 0
        %2241 = vmatprep.subr.bf16.mxu0 0
        %2242 = vmatpush1.bf16.msra.mxu0 0
        %2243 = vmatprep.subr.bf16.mxu0 0
        %2244 = vmatpush1.bf16.msra.mxu0 0
        %2245 = vmatprep.mubr.bf16.mxu0 0
        %2246 = vmatmul.mubr.bf16.gmra.mrb[0].mxu0 %v2211
        %v2247 = vpop.f32.mrb[0].mxu0
        %v2248 = vadd.f32 0.0, %v2247
        %v2249 = vpop.f32.mrb[0].mxu0
        %v2250 = vpop.f32.mrb[0].mxu0
        %v2251 = vpop.f32.mrb[0].mxu0
        %2252 = vdwg.mxu0
        %2253 = vrot.lane.b32.xlu0 %v2035, 64
        %v2254 = vpop.permute.xlu0 %2253
        %2255 = vrot.lane.b32.xlu0 %v2036, 64
        %v2256 = vpop.permute.xlu0 %2255
        %v2258 = vsel %vm1161, %v2254, 0
        %v2261 = vsel %vm1161, %v2256, 0
        %2263 = vmatprep.subr.bf16.mxu0 0
        %2264 = vmatpush1.bf16.xpose.msra.mxu0 %v2261
        %2265 = vmatprep.subr.bf16.mxu0 0
        %2266 = vmatpush1.bf16.xpose.msra.mxu0 0
        %2267 = vmatprep.subr.bf16.mxu0 0
        %2268 = vmatpush1.bf16.xpose.msra.mxu0 0
        %2269 = vmatprep.subr.bf16.mxu0 0
        %2270 = vmatpush1.bf16.xpose.msra.mxu0 0
        %2271 = vmatprep.subr.bf16.mxu0 0
        %2272 = vmatpush1.bf16.xpose.msra.mxu0 0
        %2273 = vmatprep.subr.bf16.mxu0 0
        %2274 = vmatpush1.bf16.xpose.msra.mxu0 0
        %2275 = vmatprep.subr.bf16.mxu0 0
        %2276 = vmatpush1.bf16.xpose.msra.mxu0 0
        %2277 = vmatprep.subr.bf16.mxu0 0
        %2278 = vmatpush1.bf16.xpose.msra.mxu0 0
        %2279 = vmatprep.subr.bf16.mxu0 0
        %2280 = vmatpush1.bf16.xpose.msra.mxu0 0
        %2281 = vmatprep.subr.bf16.mxu0 0
        %2282 = vmatpush1.bf16.xpose.msra.mxu0 0
        %2283 = vmatprep.subr.bf16.mxu0 0
        %2284 = vmatpush1.bf16.xpose.msra.mxu0 0
        %2285 = vmatprep.subr.bf16.mxu0 0
        %2286 = vmatpush1.bf16.xpose.msra.mxu0 0
        %2287 = vmatprep.subr.bf16.mxu0 0
        %2288 = vmatpush1.bf16.xpose.msra.mxu0 0
        %2289 = vmatprep.subr.bf16.mxu0 0
        %2290 = vmatpush1.bf16.xpose.msra.mxu0 0
        %2291 = vmatprep.subr.bf16.mxu0 0
        %2292 = vmatpush1.bf16.xpose.msra.mxu0 0
        %2293 = vmatprep.subr.bf16.mxu0 0
        %2294 = vmatpush1.bf16.xpose.msra.mxu0 0
        %2295 = vmatprep.mubr.bf16.mxu0 0
        %2296 = vmatmul.mubr.bf16.gmra.mrb[0].mxu0 %v2258
        %v2297 = vpop.f32.mrb[0].mxu0
        %v2298 = vadd.f32 0.0, %v2297
        %v2299 = vpop.f32.mrb[0].mxu0
        %v2300 = vpop.f32.mrb[0].mxu0
        %v2301 = vpop.f32.mrb[0].mxu0
        %2302 = vdwg.mxu0
        %v2303 = vmul.f32 %v2298, 0.17677669
        %v2304 = vsel %vm2085, %v2303, -inf
        %2305 = vmax.xlane.f32.xlu0 %v2304
        %v2306 = vpop.xlane.xlu0 %2305
        %v2307 = vsub.f32 %v2303, %v2306
        %v2308 = vmul.f32 %v2307, 1.442695
        %v2309 = vpow.pop %v2308
        %v2310 = vsel %vm2085, %v2309, 0.0
        %2311 = vadd.xlane.f32.xlu0 %v2310
        %v2312 = vpop.xlane.xlu0 %2311
        %v2313 = vrcp.pop %v2312
        %v2314 = vmul.f32 %v2309, %v2313
        %v2315 = vpack.c.bf16 %v2314, %v2314
        %2316 = vrot.lane.b32.xlu0 %v2037, 64
        %v2317 = vpop.permute.xlu0 %2316
        %v2320 = vsel %vm2085, %v2315, 0
        %2322 = vmatprep.subr.bf16.mxu0 0
        %2323 = vmatpush1.bf16.msra.mxu0 %v2317
        %2324 = vmatprep.subr.bf16.mxu0 0
        %2325 = vmatpush1.bf16.msra.mxu0 0
        %2326 = vmatprep.subr.bf16.mxu0 0
        %2327 = vmatpush1.bf16.msra.mxu0 0
        %2328 = vmatprep.subr.bf16.mxu0 0
        %2329 = vmatpush1.bf16.msra.mxu0 0
        %2330 = vmatprep.subr.bf16.mxu0 0
        %2331 = vmatpush1.bf16.msra.mxu0 0
        %2332 = vmatprep.subr.bf16.mxu0 0
        %2333 = vmatpush1.bf16.msra.mxu0 0
        %2334 = vmatprep.subr.bf16.mxu0 0
        %2335 = vmatpush1.bf16.msra.mxu0 0
        %2336 = vmatprep.subr.bf16.mxu0 0
        %2337 = vmatpush1.bf16.msra.mxu0 0
        %2338 = vmatprep.subr.bf16.mxu0 0
        %2339 = vmatpush1.bf16.msra.mxu0 0
        %2340 = vmatprep.subr.bf16.mxu0 0
        %2341 = vmatpush1.bf16.msra.mxu0 0
        %2342 = vmatprep.subr.bf16.mxu0 0
        %2343 = vmatpush1.bf16.msra.mxu0 0
        %2344 = vmatprep.subr.bf16.mxu0 0
        %2345 = vmatpush1.bf16.msra.mxu0 0
        %2346 = vmatprep.subr.bf16.mxu0 0
        %2347 = vmatpush1.bf16.msra.mxu0 0
        %2348 = vmatprep.subr.bf16.mxu0 0
        %2349 = vmatpush1.bf16.msra.mxu0 0
        %2350 = vmatprep.subr.bf16.mxu0 0
        %2351 = vmatpush1.bf16.msra.mxu0 0
        %2352 = vmatprep.subr.bf16.mxu0 0
        %2353 = vmatpush1.bf16.msra.mxu0 0
        %2354 = vmatprep.mubr.bf16.mxu0 0
        %2355 = vmatmul.mubr.bf16.gmra.mrb[0].mxu0 %v2320
        %v2356 = vpop.f32.mrb[0].mxu0
        %v2357 = vadd.f32 0.0, %v2356
        %v2358 = vpop.f32.mrb[0].mxu0
        %v2359 = vpop.f32.mrb[0].mxu0
        %v2360 = vpop.f32.mrb[0].mxu0
        %2361 = vdwg.mxu0
        %2362 = vrot.lane.b32.xlu0 %v2035, 32
        %v2363 = vpop.permute.xlu0 %2362
        %2364 = vrot.lane.b32.xlu0 %v2036, 32
        %v2365 = vpop.permute.xlu0 %2364
        %v2367 = vsel %vm1161, %v2363, 0
        %v2370 = vsel %vm1161, %v2365, 0
        %2372 = vmatprep.subr.bf16.mxu0 0
        %2373 = vmatpush1.bf16.xpose.msra.mxu0 %v2370
        %2374 = vmatprep.subr.bf16.mxu0 0
        %2375 = vmatpush1.bf16.xpose.msra.mxu0 0
        %2376 = vmatprep.subr.bf16.mxu0 0
        %2377 = vmatpush1.bf16.xpose.msra.mxu0 0
        %2378 = vmatprep.subr.bf16.mxu0 0
        %2379 = vmatpush1.bf16.xpose.msra.mxu0 0
        %2380 = vmatprep.subr.bf16.mxu0 0
        %2381 = vmatpush1.bf16.xpose.msra.mxu0 0
        %2382 = vmatprep.subr.bf16.mxu0 0
        %2383 = vmatpush1.bf16.xpose.msra.mxu0 0
        %2384 = vmatprep.subr.bf16.mxu0 0
        %2385 = vmatpush1.bf16.xpose.msra.mxu0 0
        %2386 = vmatprep.subr.bf16.mxu0 0
        %2387 = vmatpush1.bf16.xpose.msra.mxu0 0
        %2388 = vmatprep.subr.bf16.mxu0 0
        %2389 = vmatpush1.bf16.xpose.msra.mxu0 0
        %2390 = vmatprep.subr.bf16.mxu0 0
        %2391 = vmatpush1.bf16.xpose.msra.mxu0 0
        %2392 = vmatprep.subr.bf16.mxu0 0
        %2393 = vmatpush1.bf16.xpose.msra.mxu0 0
        %2394 = vmatprep.subr.bf16.mxu0 0
        %2395 = vmatpush1.bf16.xpose.msra.mxu0 0
        %2396 = vmatprep.subr.bf16.mxu0 0
        %2397 = vmatpush1.bf16.xpose.msra.mxu0 0
        %2398 = vmatprep.subr.bf16.mxu0 0
        %2399 = vmatpush1.bf16.xpose.msra.mxu0 0
        %2400 = vmatprep.subr.bf16.mxu0 0
        %2401 = vmatpush1.bf16.xpose.msra.mxu0 0
        %2402 = vmatprep.subr.bf16.mxu0 0
        %2403 = vmatpush1.bf16.xpose.msra.mxu0 0
        %2404 = vmatprep.mubr.bf16.mxu0 0
        %2405 = vmatmul.mubr.bf16.gmra.mrb[0].mxu0 %v2367
        %v2406 = vpop.f32.mrb[0].mxu0
        %v2407 = vadd.f32 0.0, %v2406
        %v2408 = vpop.f32.mrb[0].mxu0
        %v2409 = vpop.f32.mrb[0].mxu0
        %v2410 = vpop.f32.mrb[0].mxu0
        %2411 = vdwg.mxu0
        %v2412 = vmul.f32 %v2407, 0.17677669
        %v2413 = vsel %vm2085, %v2412, -inf
        %2414 = vmax.xlane.f32.xlu0 %v2413
        %v2415 = vpop.xlane.xlu0 %2414
        %v2416 = vsub.f32 %v2412, %v2415
        %v2417 = vmul.f32 %v2416, 1.442695
        %v2418 = vpow.pop %v2417
        %v2419 = vsel %vm2085, %v2418, 0.0
        %2420 = vadd.xlane.f32.xlu0 %v2419
        %v2421 = vpop.xlane.xlu0 %2420
        %v2422 = vrcp.pop %v2421
        %v2423 = vmul.f32 %v2418, %v2422
        %v2424 = vpack.c.bf16 %v2423, %v2423
        %2425 = vrot.lane.b32.xlu0 %v2037, 32
        %v2426 = vpop.permute.xlu0 %2425
        %v2429 = vsel %vm2085, %v2424, 0
        %2431 = vmatprep.subr.bf16.mxu0 0
        %2432 = vmatpush1.bf16.msra.mxu0 %v2426
        %2433 = vmatprep.subr.bf16.mxu0 0
        %2434 = vmatpush1.bf16.msra.mxu0 0
        %2435 = vmatprep.subr.bf16.mxu0 0
        %2436 = vmatpush1.bf16.msra.mxu0 0
        %2437 = vmatprep.subr.bf16.mxu0 0
        %2438 = vmatpush1.bf16.msra.mxu0 0
        %2439 = vmatprep.subr.bf16.mxu0 0
        %2440 = vmatpush1.bf16.msra.mxu0 0
        %2441 = vmatprep.subr.bf16.mxu0 0
        %2442 = vmatpush1.bf16.msra.mxu0 0
        %2443 = vmatprep.subr.bf16.mxu0 0
        %2444 = vmatpush1.bf16.msra.mxu0 0
        %2445 = vmatprep.subr.bf16.mxu0 0
        %2446 = vmatpush1.bf16.msra.mxu0 0
        %2447 = vmatprep.subr.bf16.mxu0 0
        %2448 = vmatpush1.bf16.msra.mxu0 0
        %2449 = vmatprep.subr.bf16.mxu0 0
        %2450 = vmatpush1.bf16.msra.mxu0 0
        %2451 = vmatprep.subr.bf16.mxu0 0
        %2452 = vmatpush1.bf16.msra.mxu0 0
        %2453 = vmatprep.subr.bf16.mxu0 0
        %2454 = vmatpush1.bf16.msra.mxu0 0
        %2455 = vmatprep.subr.bf16.mxu0 0
        %2456 = vmatpush1.bf16.msra.mxu0 0
        %2457 = vmatprep.subr.bf16.mxu0 0
        %2458 = vmatpush1.bf16.msra.mxu0 0
        %2459 = vmatprep.subr.bf16.mxu0 0
        %2460 = vmatpush1.bf16.msra.mxu0 0
        %2461 = vmatprep.subr.bf16.mxu0 0
        %2462 = vmatpush1.bf16.msra.mxu0 0
        %2463 = vmatprep.mubr.bf16.mxu0 0
        %2464 = vmatmul.mubr.bf16.gmra.mrb[0].mxu0 %v2429
        %v2465 = vpop.f32.mrb[0].mxu0
        %v2466 = vadd.f32 0.0, %v2465
        %v2467 = vpop.f32.mrb[0].mxu0
        %v2468 = vpop.f32.mrb[0].mxu0
        %v2469 = vpop.f32.mrb[0].mxu0
        %2470 = vdwg.mxu0
        %2472 = vrot.lane.b32.xlu0 %v2248, 32
        %v2473 = vpop.permute.xlu0 %2472
        %2476 = vrot.lane.b32.xlu0 %v2357, 64
        %v2477 = vpop.permute.xlu0 %2476
        %2480 = vrot.lane.b32.xlu0 %v2466, 96
        %v2481 = vpop.permute.xlu0 %2480
        %v2483 = vsel %vm1161, %v2136, %v2473
        %v2484 = vsel %vm1618, %v2483, %v2477
        %v2485 = vsel %vm1620, %v2484, %v2481
        %v2486 = vld [vmem:[#allocation14] sm:$0xf]
        %v2487 = vld [vmem:[#allocation14 + $0x4] sm:$0xf]
        %v2488 = vld [vmem:[#allocation14 + $0x8] sm:$0xf]
        %v2489 = vld [vmem:[#allocation14 + $0xc] sm:$0xf]
        %v2490 = vld [vmem:[#allocation14 + $0x10] sm:$0xf]
        %v2491 = vld [vmem:[#allocation14 + $0x14] sm:$0xf]
        %v2492 = vld [vmem:[#allocation14 + $0x18] sm:$0xf]
        %v2493 = vld [vmem:[#allocation14 + $0x1c] sm:$0xf]
        %v2494 = vld [vmem:[#allocation14 + $0x20] sm:$0xf]
        %v2495 = vld [vmem:[#allocation14 + $0x24] sm:$0xf]
        %v2496 = vld [vmem:[#allocation14 + $0x28] sm:$0xf]
        %v2497 = vld [vmem:[#allocation14 + $0x2c] sm:$0xf]
        %v2498 = vld [vmem:[#allocation14 + $0x30] sm:$0xf]
        %v2499 = vld [vmem:[#allocation14 + $0x34] sm:$0xf]
        %v2500 = vld [vmem:[#allocation14 + $0x38] sm:$0xf]
        %v2501 = vld [vmem:[#allocation14 + $0x3c] sm:$0xf]
        %v2502 = vld [vmem:[#allocation16] sm:$0x1]
        %v2503 = vpack.c.bf16 %v2485, %v2485
        %v2505 = vlaneseq
        %v2506 = vshrl.u32 %v2505, 7
        %v2507 = vsub.s32 0, %v2506
        %v2508 = vrot.slane %v2502, %v2507
        %v2526 = vunpack.c.l.b16 %v2486
        %v2527 = vunpack.c.l.b16 %v2487
        %v2528 = vunpack.c.l.b16 %v2488
        %v2529 = vunpack.c.l.b16 %v2489
        %v2530 = vunpack.c.l.b16 %v2490
        %v2531 = vunpack.c.l.b16 %v2491
        %v2532 = vunpack.c.l.b16 %v2492
        %v2533 = vunpack.c.l.b16 %v2493
        %v2534 = vunpack.c.l.b16 %v2494
        %v2535 = vunpack.c.l.b16 %v2495
        %v2536 = vunpack.c.l.b16 %v2496
        %v2537 = vunpack.c.l.b16 %v2497
        %v2538 = vunpack.c.l.b16 %v2498
        %v2539 = vunpack.c.l.b16 %v2499
        %v2540 = vunpack.c.l.b16 %v2500
        %v2541 = vunpack.c.l.b16 %v2501
        %v2542 = vpack.c.b16 %v2527, %v2526
        %v2543 = vpack.c.b16 %v2529, %v2528
        %v2544 = vpack.c.b16 %v2531, %v2530
        %v2545 = vpack.c.b16 %v2533, %v2532
        %v2546 = vpack.c.b16 %v2535, %v2534
        %v2547 = vpack.c.b16 %v2537, %v2536
        %v2548 = vpack.c.b16 %v2539, %v2538
        %v2549 = vpack.c.b16 %v2541, %v2540
        %2558 = vmatprep.subr.bf16.mxu0 0
        %2559 = vmatpush1.bf16.msra.mxu0 %v2542
        %2560 = vmatprep.subr.bf16.mxu0 0
        %2561 = vmatpush1.bf16.msra.mxu0 %v2543
        %2562 = vmatprep.subr.bf16.mxu0 0
        %2563 = vmatpush1.bf16.msra.mxu0 %v2544
        %2564 = vmatprep.subr.bf16.mxu0 0
        %2565 = vmatpush1.bf16.msra.mxu0 %v2545
        %2566 = vmatprep.subr.bf16.mxu0 0
        %2567 = vmatpush1.bf16.msra.mxu0 %v2546
        %2568 = vmatprep.subr.bf16.mxu0 0
        %2569 = vmatpush1.bf16.msra.mxu0 %v2547
        %2570 = vmatprep.subr.bf16.mxu0 0
        %2571 = vmatpush1.bf16.msra.mxu0 %v2548
        %2572 = vmatprep.subr.bf16.mxu0 0
        %2573 = vmatpush1.bf16.msra.mxu0 %v2549
        %2574 = vmatprep.subr.bf16.mxu0 0
        %2575 = vmatpush1.bf16.msra.mxu0 0
        %2576 = vmatprep.subr.bf16.mxu0 0
        %2577 = vmatpush1.bf16.msra.mxu0 0
        %2578 = vmatprep.subr.bf16.mxu0 0
        %2579 = vmatpush1.bf16.msra.mxu0 0
        %2580 = vmatprep.subr.bf16.mxu0 0
        %2581 = vmatpush1.bf16.msra.mxu0 0
        %2582 = vmatprep.subr.bf16.mxu0 0
        %2583 = vmatpush1.bf16.msra.mxu0 0
        %2584 = vmatprep.subr.bf16.mxu0 0
        %2585 = vmatpush1.bf16.msra.mxu0 0
        %2586 = vmatprep.subr.bf16.mxu0 0
        %2587 = vmatpush1.bf16.msra.mxu0 0
        %2588 = vmatprep.subr.bf16.mxu0 0
        %2589 = vmatpush1.bf16.msra.mxu0 0
        %2590 = vmatprep.mubr.bf16.mxu0 0
        %2591 = vmatmul.mubr.bf16.gmra.mrb[0].mxu0 %v2503
        %v2592 = vpop.f32.mrb[0].mxu0
        %v2593 = vadd.f32 %v2508, %v2592
        %v2594 = vpop.f32.mrb[0].mxu0
        %v2595 = vpop.f32.mrb[0].mxu0
        %v2596 = vpop.f32.mrb[0].mxu0
        %2597 = vdwg.mxu0
        %v2598 = vadd.f32 %v1734, %v2593
        %s2599 = scalar_lea.vmem %s2, 2
        %v2600 = vld [vmem:[%s2599] sm:$0x1]
        %s2601 = scalar_lea.vmem %s3, 2
        %v2602 = vld [vmem:[%s2601] sm:$0x1]
        %2603 = vadd.xlane.f32.xlu0 %v2598
        %v2604 = vpop.xlane.xlu0 %2603
        %v2605 = vmul.f32 %v2604, %v867
        %v2606 = vsub.f32 %v2598, %v2605
        %v2607 = vmul.f32 %v2606, %v2606
        %2608 = vadd.xlane.f32.xlu0 %v2607
        %v2609 = vpop.xlane.xlu0 %2608
        %v2610 = vmul.f32 %v2609, %v873
        %v2611 = vrsqrt.pop %v2610
        %v2612 = vmul.f32 %v2610, %v2611
        %vm2613 = vcmp.eq.f32.partialorder %v2610, inf
        %v2614 = vsel %vm2613, %v2610, %v2612
        %vm2615 = vcmp.eq.f32.partialorder %v2610, 0.0
        %v2616 = vand.u32 %v2610, 2147483648
        %v2617 = vsel %vm2615, %v2616, %v2614
        %v2619 = vlaneseq
        %v2620 = vshrl.u32 %v2619, 7
        %v2621 = vsub.s32 0, %v2620
        %v2622 = vrot.slane %v2600, %v2621
        %v2624 = vmul.f32 %v2622, %v2606
        %v2625 = vadd.f32 %v2617, 1e-06
        %v2626 = vrcp.pop %v2625
        %v2627 = vmul.f32 %v2624, %v2626
        %v2629 = vlaneseq
        %v2630 = vshrl.u32 %v2629, 7
        %v2631 = vsub.s32 0, %v2630
        %v2632 = vrot.slane %v2602, %v2631
        %v2634 = vadd.f32 %v2627, %v2632
        %v2635 = vld [vmem:[#allocation17] sm:$0xff]
        %v2636 = vld [vmem:[#allocation17 + $0x8] sm:$0xff]
        %v2637 = vld [vmem:[#allocation17 + $0x10] sm:$0xff]
        %v2638 = vld [vmem:[#allocation17 + $0x18] sm:$0xff]
        %v2639 = vld [vmem:[#allocation17 + $0x20] sm:$0xff]
        %v2640 = vld [vmem:[#allocation17 + $0x28] sm:$0xff]
        %v2641 = vld [vmem:[#allocation17 + $0x30] sm:$0xff]
        %v2642 = vld [vmem:[#allocation17 + $0x38] sm:$0xff]
        %v2643 = vld [vmem:[#allocation17 + $0x40] sm:$0xff]
        %v2644 = vld [vmem:[#allocation17 + $0x48] sm:$0xff]
        %v2645 = vld [vmem:[#allocation17 + $0x50] sm:$0xff]
        %v2646 = vld [vmem:[#allocation17 + $0x58] sm:$0xff]
        %v2647 = vld [vmem:[#allocation17 + $0x60] sm:$0xff]
        %v2648 = vld [vmem:[#allocation17 + $0x68] sm:$0xff]
        %v2649 = vld [vmem:[#allocation17 + $0x70] sm:$0xff]
        %v2650 = vld [vmem:[#allocation17 + $0x78] sm:$0xff]
        %v2651 = vld [vmem:[#allocation19] sm:$0x3]
        %v2652 = vpack.c.bf16 %v2634, %v2634
        %v2654 = vlaneseq
        %v2655 = vshrl.u32 %v2654, 7
        %v2656 = vsub.s32 0, %v2655
        %v2657 = vrot.slane %v2651, %v2656
        %v2658 = vlaneseq
        %v2659 = vshrl.u32 %v2658, 7
        %v2660 = vsub.s32 1, %v2659
        %v2661 = vrot.slane %v2651, %v2660
        %v2680 = vunpack.c.l.b16 %v2635
        %v2681 = vunpack.c.h.b16 %v2635
        %v2682 = vunpack.c.l.b16 %v2636
        %v2683 = vunpack.c.h.b16 %v2636
        %v2684 = vunpack.c.l.b16 %v2637
        %v2685 = vunpack.c.h.b16 %v2637
        %v2686 = vunpack.c.l.b16 %v2638
        %v2687 = vunpack.c.h.b16 %v2638
        %v2688 = vunpack.c.l.b16 %v2639
        %v2689 = vunpack.c.h.b16 %v2639
        %v2690 = vunpack.c.l.b16 %v2640
        %v2691 = vunpack.c.h.b16 %v2640
        %v2692 = vunpack.c.l.b16 %v2641
        %v2693 = vunpack.c.h.b16 %v2641
        %v2694 = vunpack.c.l.b16 %v2642
        %v2695 = vunpack.c.h.b16 %v2642
        %v2696 = vunpack.c.l.b16 %v2643
        %v2697 = vunpack.c.h.b16 %v2643
        %v2698 = vunpack.c.l.b16 %v2644
        %v2699 = vunpack.c.h.b16 %v2644
        %v2700 = vunpack.c.l.b16 %v2645
        %v2701 = vunpack.c.h.b16 %v2645
        %v2702 = vunpack.c.l.b16 %v2646
        %v2703 = vunpack.c.h.b16 %v2646
        %v2704 = vunpack.c.l.b16 %v2647
        %v2705 = vunpack.c.h.b16 %v2647
        %v2706 = vunpack.c.l.b16 %v2648
        %v2707 = vunpack.c.h.b16 %v2648
        %v2708 = vunpack.c.l.b16 %v2649
        %v2709 = vunpack.c.h.b16 %v2649
        %v2710 = vunpack.c.l.b16 %v2650
        %v2711 = vunpack.c.h.b16 %v2650
        %v2712 = vpack.c.b16 %v2682, %v2680
        %v2713 = vpack.c.b16 %v2683, %v2681
        %v2714 = vpack.c.b16 %v2686, %v2684
        %v2715 = vpack.c.b16 %v2687, %v2685
        %v2716 = vpack.c.b16 %v2690, %v2688
        %v2717 = vpack.c.b16 %v2691, %v2689
        %v2718 = vpack.c.b16 %v2694, %v2692
        %v2719 = vpack.c.b16 %v2695, %v2693
        %v2720 = vpack.c.b16 %v2698, %v2696
        %v2721 = vpack.c.b16 %v2699, %v2697
        %v2722 = vpack.c.b16 %v2702, %v2700
        %v2723 = vpack.c.b16 %v2703, %v2701
        %v2724 = vpack.c.b16 %v2706, %v2704
        %v2725 = vpack.c.b16 %v2707, %v2705
        %v2726 = vpack.c.b16 %v2710, %v2708
        %v2727 = vpack.c.b16 %v2711, %v2709
        %2744 = vmatprep.subr.bf16.mxu0 %v2713
        %2745 = vmatpush1.bf16.msra.mxu0 %v2712
        %2746 = vmatprep.subr.bf16.mxu0 %v2715
        %2747 = vmatpush1.bf16.msra.mxu0 %v2714
        %2748 = vmatprep.subr.bf16.mxu0 %v2717
        %2749 = vmatpush1.bf16.msra.mxu0 %v2716
        %2750 = vmatprep.subr.bf16.mxu0 %v2719
        %2751 = vmatpush1.bf16.msra.mxu0 %v2718
        %2752 = vmatprep.subr.bf16.mxu0 %v2721
        %2753 = vmatpush1.bf16.msra.mxu0 %v2720
        %2754 = vmatprep.subr.bf16.mxu0 %v2723
        %2755 = vmatpush1.bf16.msra.mxu0 %v2722
        %2756 = vmatprep.subr.bf16.mxu0 %v2725
        %2757 = vmatpush1.bf16.msra.mxu0 %v2724
        %2758 = vmatprep.subr.bf16.mxu0 %v2727
        %2759 = vmatpush1.bf16.msra.mxu0 %v2726
        %2760 = vmatprep.subr.bf16.mxu0 0
        %2761 = vmatpush1.bf16.msra.mxu0 0
        %2762 = vmatprep.subr.bf16.mxu0 0
        %2763 = vmatpush1.bf16.msra.mxu0 0
        %2764 = vmatprep.subr.bf16.mxu0 0
        %2765 = vmatpush1.bf16.msra.mxu0 0
        %2766 = vmatprep.subr.bf16.mxu0 0
        %2767 = vmatpush1.bf16.msra.mxu0 0
        %2768 = vmatprep.subr.bf16.mxu0 0
        %2769 = vmatpush1.bf16.msra.mxu0 0
        %2770 = vmatprep.subr.bf16.mxu0 0
        %2771 = vmatpush1.bf16.msra.mxu0 0
        %2772 = vmatprep.subr.bf16.mxu0 0
        %2773 = vmatpush1.bf16.msra.mxu0 0
        %2774 = vmatprep.subr.bf16.mxu0 0
        %2775 = vmatpush1.bf16.msra.mxu0 0
        %2776 = vmatprep.mubr.bf16.mxu0 0
        %2777 = vmatmul.mubr.bf16.gmra.mrb[0].mxu0 %v2652
        %v2778 = vpop.f32.mrb[0].mxu0
        %v2779 = vadd.f32 %v2657, %v2778
        %v2780 = vpop.f32.mrb[0].mxu0
        %v2781 = vadd.f32 %v2661, %v2780
        %v2782 = vpop.f32.mrb[0].mxu0
        %v2783 = vpop.f32.mrb[0].mxu0
        %2784 = vdwg.mxu0
        %v2785 = vmax.f32 %v2779, 0.0
        %v2786 = vmax.f32 %v2781, 0.0
        %v2787 = vld [vmem:[#allocation20] sm:$0xf]
        %v2788 = vld [vmem:[#allocation20 + $0x4] sm:$0xf]
        %v2789 = vld [vmem:[#allocation20 + $0x8] sm:$0xf]
        %v2790 = vld [vmem:[#allocation20 + $0xc] sm:$0xf]
        %v2791 = vld [vmem:[#allocation20 + $0x10] sm:$0xf]
        %v2792 = vld [vmem:[#allocation20 + $0x14] sm:$0xf]
        %v2793 = vld [vmem:[#allocation20 + $0x18] sm:$0xf]
        %v2794 = vld [vmem:[#allocation20 + $0x1c] sm:$0xf]
        %v2795 = vld [vmem:[#allocation20 + $0x20] sm:$0xf]
        %v2796 = vld [vmem:[#allocation20 + $0x24] sm:$0xf]
        %v2797 = vld [vmem:[#allocation20 + $0x28] sm:$0xf]
        %v2798 = vld [vmem:[#allocation20 + $0x2c] sm:$0xf]
        %v2799 = vld [vmem:[#allocation20 + $0x30] sm:$0xf]
        %v2800 = vld [vmem:[#allocation20 + $0x34] sm:$0xf]
        %v2801 = vld [vmem:[#allocation20 + $0x38] sm:$0xf]
        %v2802 = vld [vmem:[#allocation20 + $0x3c] sm:$0xf]
        %v2803 = vld [vmem:[#allocation20 + $0x40] sm:$0xf]
        %v2804 = vld [vmem:[#allocation20 + $0x44] sm:$0xf]
        %v2805 = vld [vmem:[#allocation20 + $0x48] sm:$0xf]
        %v2806 = vld [vmem:[#allocation20 + $0x4c] sm:$0xf]
        %v2807 = vld [vmem:[#allocation20 + $0x50] sm:$0xf]
        %v2808 = vld [vmem:[#allocation20 + $0x54] sm:$0xf]
        %v2809 = vld [vmem:[#allocation20 + $0x58] sm:$0xf]
        %v2810 = vld [vmem:[#allocation20 + $0x5c] sm:$0xf]
        %v2811 = vld [vmem:[#allocation20 + $0x60] sm:$0xf]
        %v2812 = vld [vmem:[#allocation20 + $0x64] sm:$0xf]
        %v2813 = vld [vmem:[#allocation20 + $0x68] sm:$0xf]
        %v2814 = vld [vmem:[#allocation20 + $0x6c] sm:$0xf]
        %v2815 = vld [vmem:[#allocation20 + $0x70] sm:$0xf]
        %v2816 = vld [vmem:[#allocation20 + $0x74] sm:$0xf]
        %v2817 = vld [vmem:[#allocation20 + $0x78] sm:$0xf]
        %v2818 = vld [vmem:[#allocation20 + $0x7c] sm:$0xf]
        %v2819 = vld [vmem:[#allocation22] sm:$0x1]
        %v2820 = vpack.c.bf16 %v2785, %v2785
        %v2821 = vpack.c.bf16 %v2786, %v2786
        %v2823 = vlaneseq
        %v2824 = vshrl.u32 %v2823, 7
        %v2825 = vsub.s32 0, %v2824
        %v2826 = vrot.slane %v2819, %v2825
        %v2860 = vunpack.c.l.b16 %v2787
        %v2861 = vunpack.c.l.b16 %v2788
        %v2862 = vunpack.c.l.b16 %v2789
        %v2863 = vunpack.c.l.b16 %v2790
        %v2864 = vunpack.c.l.b16 %v2791
        %v2865 = vunpack.c.l.b16 %v2792
        %v2866 = vunpack.c.l.b16 %v2793
        %v2867 = vunpack.c.l.b16 %v2794
        %v2868 = vunpack.c.l.b16 %v2795
        %v2869 = vunpack.c.l.b16 %v2796
        %v2870 = vunpack.c.l.b16 %v2797
        %v2871 = vunpack.c.l.b16 %v2798
        %v2872 = vunpack.c.l.b16 %v2799
        %v2873 = vunpack.c.l.b16 %v2800
        %v2874 = vunpack.c.l.b16 %v2801
        %v2875 = vunpack.c.l.b16 %v2802
        %v2876 = vunpack.c.l.b16 %v2803
        %v2877 = vunpack.c.l.b16 %v2804
        %v2878 = vunpack.c.l.b16 %v2805
        %v2879 = vunpack.c.l.b16 %v2806
        %v2880 = vunpack.c.l.b16 %v2807
        %v2881 = vunpack.c.l.b16 %v2808
        %v2882 = vunpack.c.l.b16 %v2809
        %v2883 = vunpack.c.l.b16 %v2810
        %v2884 = vunpack.c.l.b16 %v2811
        %v2885 = vunpack.c.l.b16 %v2812
        %v2886 = vunpack.c.l.b16 %v2813
        %v2887 = vunpack.c.l.b16 %v2814
        %v2888 = vunpack.c.l.b16 %v2815
        %v2889 = vunpack.c.l.b16 %v2816
        %v2890 = vunpack.c.l.b16 %v2817
        %v2891 = vunpack.c.l.b16 %v2818
        %v2892 = vpack.c.b16 %v2861, %v2860
        %v2893 = vpack.c.b16 %v2863, %v2862
        %v2894 = vpack.c.b16 %v2865, %v2864
        %v2895 = vpack.c.b16 %v2867, %v2866
        %v2896 = vpack.c.b16 %v2869, %v2868
        %v2897 = vpack.c.b16 %v2871, %v2870
        %v2898 = vpack.c.b16 %v2873, %v2872
        %v2899 = vpack.c.b16 %v2875, %v2874
        %v2900 = vpack.c.b16 %v2877, %v2876
        %v2901 = vpack.c.b16 %v2879, %v2878
        %v2902 = vpack.c.b16 %v2881, %v2880
        %v2903 = vpack.c.b16 %v2883, %v2882
        %v2904 = vpack.c.b16 %v2885, %v2884
        %v2905 = vpack.c.b16 %v2887, %v2886
        %v2906 = vpack.c.b16 %v2889, %v2888
        %v2907 = vpack.c.b16 %v2891, %v2890
        %2924 = vmatprep.subr.bf16.mxu0 0
        %2925 = vmatpush1.bf16.msra.mxu0 %v2892
        %2926 = vmatprep.subr.bf16.mxu0 0
        %2927 = vmatpush1.bf16.msra.mxu0 %v2893
        %2928 = vmatprep.subr.bf16.mxu0 0
        %2929 = vmatpush1.bf16.msra.mxu0 %v2894
        %2930 = vmatprep.subr.bf16.mxu0 0
        %2931 = vmatpush1.bf16.msra.mxu0 %v2895
        %2932 = vmatprep.subr.bf16.mxu0 0
        %2933 = vmatpush1.bf16.msra.mxu0 %v2896
        %2934 = vmatprep.subr.bf16.mxu0 0
        %2935 = vmatpush1.bf16.msra.mxu0 %v2897
        %2936 = vmatprep.subr.bf16.mxu0 0
        %2937 = vmatpush1.bf16.msra.mxu0 %v2898
        %2938 = vmatprep.subr.bf16.mxu0 0
        %2939 = vmatpush1.bf16.msra.mxu0 %v2899
        %2940 = vmatprep.subr.bf16.mxu0 0
        %2941 = vmatpush1.bf16.msra.mxu0 %v2900
        %2942 = vmatprep.subr.bf16.mxu0 0
        %2943 = vmatpush1.bf16.msra.mxu0 %v2901
        %2944 = vmatprep.subr.bf16.mxu0 0
        %2945 = vmatpush1.bf16.msra.mxu0 %v2902
        %2946 = vmatprep.subr.bf16.mxu0 0
        %2947 = vmatpush1.bf16.msra.mxu0 %v2903
        %2948 = vmatprep.subr.bf16.mxu0 0
        %2949 = vmatpush1.bf16.msra.mxu0 %v2904
        %2950 = vmatprep.subr.bf16.mxu0 0
        %2951 = vmatpush1.bf16.msra.mxu0 %v2905
        %2952 = vmatprep.subr.bf16.mxu0 0
        %2953 = vmatpush1.bf16.msra.mxu0 %v2906
        %2954 = vmatprep.subr.bf16.mxu0 0
        %2955 = vmatpush1.bf16.msra.mxu0 %v2907
        %2956 = vmatprep.mubr.bf16.mxu0 %v2821
        %2957 = vmatmul.mubr.bf16.gmra.mrb[0].mxu0 %v2820
        %v2958 = vpop.f32.mrb[0].mxu0
        %v2959 = vadd.f32 %v2826, %v2958
        %v2960 = vpop.f32.mrb[0].mxu0
        %v2961 = vpop.f32.mrb[0].mxu0
        %v2962 = vpop.f32.mrb[0].mxu0
        %2963 = vdwg.mxu0
        %v2964 = vadd.f32 %v2598, %v2959
        %s2965 = scalar_lea.vmem %s2, 3
        %v2966 = vld [vmem:[%s2965] sm:$0x1]
        %s2967 = scalar_lea.vmem %s3, 3
        %v2968 = vld [vmem:[%s2967] sm:$0x1]
        %2969 = vadd.xlane.f32.xlu0 %v2964
        %v2970 = vpop.xlane.xlu0 %2969
        %v2971 = vmul.f32 %v2970, %v867
        %v2972 = vsub.f32 %v2964, %v2971
        %v2973 = vmul.f32 %v2972, %v2972
        %2974 = vadd.xlane.f32.xlu0 %v2973
        %v2975 = vpop.xlane.xlu0 %2974
        %v2976 = vmul.f32 %v2975, %v873
        %v2977 = vrsqrt.pop %v2976
        %v2978 = vmul.f32 %v2976, %v2977
        %vm2979 = vcmp.eq.f32.partialorder %v2976, inf
        %v2980 = vsel %vm2979, %v2976, %v2978
        %vm2981 = vcmp.eq.f32.partialorder %v2976, 0.0
        %v2982 = vand.u32 %v2976, 2147483648
        %v2983 = vsel %vm2981, %v2982, %v2980
        %v2985 = vlaneseq
        %v2986 = vshrl.u32 %v2985, 7
        %v2987 = vsub.s32 0, %v2986
        %v2988 = vrot.slane %v2966, %v2987
        %v2990 = vmul.f32 %v2988, %v2972
        %v2991 = vadd.f32 %v2983, 1e-06
        %v2992 = vrcp.pop %v2991
        %v2993 = vmul.f32 %v2990, %v2992
        %v2995 = vlaneseq
        %v2996 = vshrl.u32 %v2995, 7
        %v2997 = vsub.s32 0, %v2996
        %v2998 = vrot.slane %v2968, %v2997
        %v3000 = vadd.f32 %v2993, %v2998
        %s3001 = scalar_lea.vmem [#allocation2], 192
        %v3002 = vld [vmem:[%s3001] sm:$0xff]
        %v3003 = vld [vmem:[%s3001 + $0x8] sm:$0xf]
        %v3004 = vld [vmem:[%s3001 + $0xc] sm:$0xff]
        %v3005 = vld [vmem:[%s3001 + $0x14] sm:$0xf]
        %v3006 = vld [vmem:[%s3001 + $0x18] sm:$0xff]
        %v3007 = vld [vmem:[%s3001 + $0x20] sm:$0xf]
        %v3008 = vld [vmem:[%s3001 + $0x24] sm:$0xff]
        %v3009 = vld [vmem:[%s3001 + $0x2c] sm:$0xf]
        %v3010 = vld [vmem:[%s3001 + $0x30] sm:$0xff]
        %v3011 = vld [vmem:[%s3001 + $0x38] sm:$0xf]
        %v3012 = vld [vmem:[%s3001 + $0x3c] sm:$0xff]
        %v3013 = vld [vmem:[%s3001 + $0x44] sm:$0xf]
        %v3014 = vld [vmem:[%s3001 + $0x48] sm:$0xff]
        %v3015 = vld [vmem:[%s3001 + $0x50] sm:$0xf]
        %v3016 = vld [vmem:[%s3001 + $0x54] sm:$0xff]
        %v3017 = vld [vmem:[%s3001 + $0x5c] sm:$0xf]
        %v3018 = vld [vmem:[%s3001 + $0x60] sm:$0xff]
        %v3019 = vld [vmem:[%s3001 + $0x68] sm:$0xf]
        %v3020 = vld [vmem:[%s3001 + $0x6c] sm:$0xff]
        %v3021 = vld [vmem:[%s3001 + $0x74] sm:$0xf]
        %v3022 = vld [vmem:[%s3001 + $0x78] sm:$0xff]
        %v3023 = vld [vmem:[%s3001 + $0x80] sm:$0xf]
        %v3024 = vld [vmem:[%s3001 + $0x84] sm:$0xff]
        %v3025 = vld [vmem:[%s3001 + $0x8c] sm:$0xf]
        %v3026 = vld [vmem:[%s3001 + $0x90] sm:$0xff]
        %v3027 = vld [vmem:[%s3001 + $0x98] sm:$0xf]
        %v3028 = vld [vmem:[%s3001 + $0x9c] sm:$0xff]
        %v3029 = vld [vmem:[%s3001 + $0xa4] sm:$0xf]
        %v3030 = vld [vmem:[%s3001 + $0xa8] sm:$0xff]
        %v3031 = vld [vmem:[%s3001 + $0xb0] sm:$0xf]
        %v3032 = vld [vmem:[%s3001 + $0xb4] sm:$0xff]
        %v3033 = vld [vmem:[%s3001 + $0xbc] sm:$0xf]
        %s3034 = scalar_lea.vmem [#allocation5], 3
        %v3035 = vld [vmem:[%s3034] sm:$0x7]
        %v3036 = vpack.c.bf16 %v3000, %v3000
        %v3038 = vlaneseq
        %v3039 = vshrl.u32 %v3038, 7
        %v3040 = vsub.s32 0, %v3039
        %v3041 = vrot.slane %v3035, %v3040
        %v3042 = vlaneseq
        %v3043 = vshrl.u32 %v3042, 7
        %v3044 = vsub.s32 1, %v3043
        %v3045 = vrot.slane %v3035, %v3044
        %v3046 = vlaneseq
        %v3047 = vshrl.u32 %v3046, 7
        %v3048 = vsub.s32 2, %v3047
        %v3049 = vrot.slane %v3035, %v3048
        %v3085 = vunpack.c.l.b16 %v3002
        %v3086 = vunpack.c.h.b16 %v3002
        %v3087 = vunpack.c.l.b16 %v3003
        %v3088 = vunpack.c.l.b16 %v3004
        %v3089 = vunpack.c.h.b16 %v3004
        %v3090 = vunpack.c.l.b16 %v3005
        %v3091 = vunpack.c.l.b16 %v3006
        %v3092 = vunpack.c.h.b16 %v3006
        %v3093 = vunpack.c.l.b16 %v3007
        %v3094 = vunpack.c.l.b16 %v3008
        %v3095 = vunpack.c.h.b16 %v3008
        %v3096 = vunpack.c.l.b16 %v3009
        %v3097 = vunpack.c.l.b16 %v3010
        %v3098 = vunpack.c.h.b16 %v3010
        %v3099 = vunpack.c.l.b16 %v3011
        %v3100 = vunpack.c.l.b16 %v3012
        %v3101 = vunpack.c.h.b16 %v3012
        %v3102 = vunpack.c.l.b16 %v3013
        %v3103 = vunpack.c.l.b16 %v3014
        %v3104 = vunpack.c.h.b16 %v3014
        %v3105 = vunpack.c.l.b16 %v3015
        %v3106 = vunpack.c.l.b16 %v3016
        %v3107 = vunpack.c.h.b16 %v3016
        %v3108 = vunpack.c.l.b16 %v3017
        %v3109 = vunpack.c.l.b16 %v3018
        %v3110 = vunpack.c.h.b16 %v3018
        %v3111 = vunpack.c.l.b16 %v3019
        %v3112 = vunpack.c.l.b16 %v3020
        %v3113 = vunpack.c.h.b16 %v3020
        %v3114 = vunpack.c.l.b16 %v3021
        %v3115 = vunpack.c.l.b16 %v3022
        %v3116 = vunpack.c.h.b16 %v3022
        %v3117 = vunpack.c.l.b16 %v3023
        %v3118 = vunpack.c.l.b16 %v3024
        %v3119 = vunpack.c.h.b16 %v3024
        %v3120 = vunpack.c.l.b16 %v3025
        %v3121 = vunpack.c.l.b16 %v3026
        %v3122 = vunpack.c.h.b16 %v3026
        %v3123 = vunpack.c.l.b16 %v3027
        %v3124 = vunpack.c.l.b16 %v3028
        %v3125 = vunpack.c.h.b16 %v3028
        %v3126 = vunpack.c.l.b16 %v3029
        %v3127 = vunpack.c.l.b16 %v3030
        %v3128 = vunpack.c.h.b16 %v3030
        %v3129 = vunpack.c.l.b16 %v3031
        %v3130 = vunpack.c.l.b16 %v3032
        %v3131 = vunpack.c.h.b16 %v3032
        %v3132 = vunpack.c.l.b16 %v3033
        %v3133 = vpack.c.b16 %v3088, %v3085
        %v3134 = vpack.c.b16 %v3089, %v3086
        %v3135 = vpack.c.b16 %v3090, %v3087
        %v3136 = vpack.c.b16 %v3094, %v3091
        %v3137 = vpack.c.b16 %v3095, %v3092
        %v3138 = vpack.c.b16 %v3096, %v3093
        %v3139 = vpack.c.b16 %v3100, %v3097
        %v3140 = vpack.c.b16 %v3101, %v3098
        %v3141 = vpack.c.b16 %v3102, %v3099
        %v3142 = vpack.c.b16 %v3106, %v3103
        %v3143 = vpack.c.b16 %v3107, %v3104
        %v3144 = vpack.c.b16 %v3108, %v3105
        %v3145 = vpack.c.b16 %v3112, %v3109
        %v3146 = vpack.c.b16 %v3113, %v3110
        %v3147 = vpack.c.b16 %v3114, %v3111
        %v3148 = vpack.c.b16 %v3118, %v3115
        %v3149 = vpack.c.b16 %v3119, %v3116
        %v3150 = vpack.c.b16 %v3120, %v3117
        %v3151 = vpack.c.b16 %v3124, %v3121
        %v3152 = vpack.c.b16 %v3125, %v3122
        %v3153 = vpack.c.b16 %v3126, %v3123
        %v3154 = vpack.c.b16 %v3130, %v3127
        %v3155 = vpack.c.b16 %v3131, %v3128
        %v3156 = vpack.c.b16 %v3132, %v3129
        %3181 = vmatprep.subr.bf16.mxu0 %v3134
        %3182 = vmatpush1.bf16.msra.mxu0 %v3133
        %3183 = vmatprep.subr.bf16.mxu0 %v3137
        %3184 = vmatpush1.bf16.msra.mxu0 %v3136
        %3185 = vmatprep.subr.bf16.mxu0 %v3140
        %3186 = vmatpush1.bf16.msra.mxu0 %v3139
        %3187 = vmatprep.subr.bf16.mxu0 %v3143
        %3188 = vmatpush1.bf16.msra.mxu0 %v3142
        %3189 = vmatprep.subr.bf16.mxu0 %v3146
        %3190 = vmatpush1.bf16.msra.mxu0 %v3145
        %3191 = vmatprep.subr.bf16.mxu0 %v3149
        %3192 = vmatpush1.bf16.msra.mxu0 %v3148
        %3193 = vmatprep.subr.bf16.mxu0 %v3152
        %3194 = vmatpush1.bf16.msra.mxu0 %v3151
        %3195 = vmatprep.subr.bf16.mxu0 %v3155
        %3196 = vmatpush1.bf16.msra.mxu0 %v3154
        %3197 = vmatprep.subr.bf16.mxu0 0
        %3198 = vmatpush1.bf16.msra.mxu0 0
        %3199 = vmatprep.subr.bf16.mxu0 0
        %3200 = vmatpush1.bf16.msra.mxu0 0
        %3201 = vmatprep.subr.bf16.mxu0 0
        %3202 = vmatpush1.bf16.msra.mxu0 0
        %3203 = vmatprep.subr.bf16.mxu0 0
        %3204 = vmatpush1.bf16.msra.mxu0 0
        %3205 = vmatprep.subr.bf16.mxu0 0
        %3206 = vmatpush1.bf16.msra.mxu0 0
        %3207 = vmatprep.subr.bf16.mxu0 0
        %3208 = vmatpush1.bf16.msra.mxu0 0
        %3209 = vmatprep.subr.bf16.mxu0 0
        %3210 = vmatpush1.bf16.msra.mxu0 0
        %3211 = vmatprep.subr.bf16.mxu0 0
        %3212 = vmatpush1.bf16.msra.mxu0 0
        %3213 = vmatprep.mubr.bf16.mxu0 0
        %3214 = vmatmul.mubr.bf16.gmra.mrb[0].mxu0 %v3036
        %v3215 = vpop.f32.mrb[0].mxu0
        %v3216 = vadd.f32 %v3041, %v3215
        %v3217 = vpop.f32.mrb[0].mxu0
        %v3218 = vadd.f32 %v3045, %v3217
        %v3219 = vpop.f32.mrb[0].mxu0
        %v3220 = vpop.f32.mrb[0].mxu0
        %3221 = vdwg.mxu0
        %3222 = vmatprep.subr.bf16.mxu0 0
        %3223 = vmatpush1.bf16.msra.mxu0 %v3135
        %3224 = vmatprep.subr.bf16.mxu0 0
        %3225 = vmatpush1.bf16.msra.mxu0 %v3138
        %3226 = vmatprep.subr.bf16.mxu0 0
        %3227 = vmatpush1.bf16.msra.mxu0 %v3141
        %3228 = vmatprep.subr.bf16.mxu0 0
        %3229 = vmatpush1.bf16.msra.mxu0 %v3144
        %3230 = vmatprep.subr.bf16.mxu0 0
        %3231 = vmatpush1.bf16.msra.mxu0 %v3147
        %3232 = vmatprep.subr.bf16.mxu0 0
        %3233 = vmatpush1.bf16.msra.mxu0 %v3150
        %3234 = vmatprep.subr.bf16.mxu0 0
        %3235 = vmatpush1.bf16.msra.mxu0 %v3153
        %3236 = vmatprep.subr.bf16.mxu0 0
        %3237 = vmatpush1.bf16.msra.mxu0 %v3156
        %3238 = vmatprep.subr.bf16.mxu0 0
        %3239 = vmatpush1.bf16.msra.mxu0 0
        %3240 = vmatprep.subr.bf16.mxu0 0
        %3241 = vmatpush1.bf16.msra.mxu0 0
        %3242 = vmatprep.subr.bf16.mxu0 0
        %3243 = vmatpush1.bf16.msra.mxu0 0
        %3244 = vmatprep.subr.bf16.mxu0 0
        %3245 = vmatpush1.bf16.msra.mxu0 0
        %3246 = vmatprep.subr.bf16.mxu0 0
        %3247 = vmatpush1.bf16.msra.mxu0 0
        %3248 = vmatprep.subr.bf16.mxu0 0
        %3249 = vmatpush1.bf16.msra.mxu0 0
        %3250 = vmatprep.subr.bf16.mxu0 0
        %3251 = vmatpush1.bf16.msra.mxu0 0
        %3252 = vmatprep.subr.bf16.mxu0 0
        %3253 = vmatpush1.bf16.msra.mxu0 0
        %3254 = vmatprep.mubr.bf16.mxu0 0
        %3255 = vmatmul.mubr.bf16.gmra.mrb[0].mxu0 %v3036
        %v3256 = vpop.f32.mrb[0].mxu0
        %v3257 = vadd.f32 %v3049, %v3256
        %v3258 = vpop.f32.mrb[0].mxu0
        %v3259 = vpop.f32.mrb[0].mxu0
        %v3260 = vpop.f32.mrb[0].mxu0
        %3261 = vdwg.mxu0
        %v3262 = vpack.c.bf16 %v3216, %v3216
        %v3263 = vpack.c.bf16 %v3218, %v3218
        %v3264 = vpack.c.bf16 %v3257, %v3257
        %v3266 = vsel %vm1161, %v3262, 0
        %v3269 = vsel %vm1161, %v3263, 0
        %3271 = vmatprep.subr.bf16.mxu0 0
        %3272 = vmatpush1.bf16.xpose.msra.mxu0 %v3269
        %3273 = vmatprep.subr.bf16.mxu0 0
        %3274 = vmatpush1.bf16.xpose.msra.mxu0 0
        %3275 = vmatprep.subr.bf16.mxu0 0
        %3276 = vmatpush1.bf16.xpose.msra.mxu0 0
        %3277 = vmatprep.subr.bf16.mxu0 0
        %3278 = vmatpush1.bf16.xpose.msra.mxu0 0
        %3279 = vmatprep.subr.bf16.mxu0 0
        %3280 = vmatpush1.bf16.xpose.msra.mxu0 0
        %3281 = vmatprep.subr.bf16.mxu0 0
        %3282 = vmatpush1.bf16.xpose.msra.mxu0 0
        %3283 = vmatprep.subr.bf16.mxu0 0
        %3284 = vmatpush1.bf16.xpose.msra.mxu0 0
        %3285 = vmatprep.subr.bf16.mxu0 0
        %3286 = vmatpush1.bf16.xpose.msra.mxu0 0
        %3287 = vmatprep.subr.bf16.mxu0 0
        %3288 = vmatpush1.bf16.xpose.msra.mxu0 0
        %3289 = vmatprep.subr.bf16.mxu0 0
        %3290 = vmatpush1.bf16.xpose.msra.mxu0 0
        %3291 = vmatprep.subr.bf16.mxu0 0
        %3292 = vmatpush1.bf16.xpose.msra.mxu0 0
        %3293 = vmatprep.subr.bf16.mxu0 0
        %3294 = vmatpush1.bf16.xpose.msra.mxu0 0
        %3295 = vmatprep.subr.bf16.mxu0 0
        %3296 = vmatpush1.bf16.xpose.msra.mxu0 0
        %3297 = vmatprep.subr.bf16.mxu0 0
        %3298 = vmatpush1.bf16.xpose.msra.mxu0 0
        %3299 = vmatprep.subr.bf16.mxu0 0
        %3300 = vmatpush1.bf16.xpose.msra.mxu0 0
        %3301 = vmatprep.subr.bf16.mxu0 0
        %3302 = vmatpush1.bf16.xpose.msra.mxu0 0
        %3303 = vmatprep.mubr.bf16.mxu0 0
        %3304 = vmatmul.mubr.bf16.gmra.mrb[0].mxu0 %v3266
        %v3305 = vpop.f32.mrb[0].mxu0
        %v3306 = vadd.f32 0.0, %v3305
        %v3307 = vpop.f32.mrb[0].mxu0
        %v3308 = vpop.f32.mrb[0].mxu0
        %v3309 = vpop.f32.mrb[0].mxu0
        %3310 = vdwg.mxu0
        %v3311 = vmul.f32 %v3306, 0.17677669
        %v3312 = vsel %vm1209, %v3311, -inf
        %3313 = vmax.xlane.f32.xlu0 %v3312
        %v3314 = vpop.xlane.xlu0 %3313
        %v3315 = vsub.f32 %v3311, %v3314
        %v3316 = vmul.f32 %v3315, 1.442695
        %v3317 = vpow.pop %v3316
        %v3318 = vsel %vm1209, %v3317, 0.0
        %3319 = vadd.xlane.f32.xlu0 %v3318
        %v3320 = vpop.xlane.xlu0 %3319
        %v3321 = vrcp.pop %v3320
        %v3322 = vmul.f32 %v3317, %v3321
        %v3323 = vpack.c.bf16 %v3322, %v3322
        %v3325 = vsel %vm1209, %v3323, 0
        %v3328 = vsel %vm1225, %v3264, 0
        %3330 = vmatprep.subr.bf16.mxu0 0
        %3331 = vmatpush1.bf16.msra.mxu0 %v3328
        %3332 = vmatprep.subr.bf16.mxu0 0
        %3333 = vmatpush1.bf16.msra.mxu0 0
        %3334 = vmatprep.subr.bf16.mxu0 0
        %3335 = vmatpush1.bf16.msra.mxu0 0
        %3336 = vmatprep.subr.bf16.mxu0 0
        %3337 = vmatpush1.bf16.msra.mxu0 0
        %3338 = vmatprep.subr.bf16.mxu0 0
        %3339 = vmatpush1.bf16.msra.mxu0 0
        %3340 = vmatprep.subr.bf16.mxu0 0
        %3341 = vmatpush1.bf16.msra.mxu0 0
        %3342 = vmatprep.subr.bf16.mxu0 0
        %3343 = vmatpush1.bf16.msra.mxu0 0
        %3344 = vmatprep.subr.bf16.mxu0 0
        %3345 = vmatpush1.bf16.msra.mxu0 0
        %3346 = vmatprep.subr.bf16.mxu0 0
        %3347 = vmatpush1.bf16.msra.mxu0 0
        %3348 = vmatprep.subr.bf16.mxu0 0
        %3349 = vmatpush1.bf16.msra.mxu0 0
        %3350 = vmatprep.subr.bf16.mxu0 0
        %3351 = vmatpush1.bf16.msra.mxu0 0
        %3352 = vmatprep.subr.bf16.mxu0 0
        %3353 = vmatpush1.bf16.msra.mxu0 0
        %3354 = vmatprep.subr.bf16.mxu0 0
        %3355 = vmatpush1.bf16.msra.mxu0 0
        %3356 = vmatprep.subr.bf16.mxu0 0
        %3357 = vmatpush1.bf16.msra.mxu0 0
        %3358 = vmatprep.subr.bf16.mxu0 0
        %3359 = vmatpush1.bf16.msra.mxu0 0
        %3360 = vmatprep.subr.bf16.mxu0 0
        %3361 = vmatpush1.bf16.msra.mxu0 0
        %3362 = vmatprep.mubr.bf16.mxu0 0
        %3363 = vmatmul.mubr.bf16.gmra.mrb[0].mxu0 %v3325
        %v3364 = vpop.f32.mrb[0].mxu0
        %v3365 = vadd.f32 0.0, %v3364
        %v3366 = vpop.f32.mrb[0].mxu0
        %v3367 = vpop.f32.mrb[0].mxu0
        %v3368 = vpop.f32.mrb[0].mxu0
        %3369 = vdwg.mxu0
        %3371 = vrot.lane.b32.xlu0 %v3262, 96
        %v3372 = vpop.permute.xlu0 %3371
        %3374 = vrot.lane.b32.xlu0 %v3263, 96
        %v3375 = vpop.permute.xlu0 %3374
        %v3377 = vsel %vm1161, %v3372, 0
        %v3380 = vsel %vm1161, %v3375, 0
        %3382 = vmatprep.subr.bf16.mxu0 0
        %3383 = vmatpush1.bf16.xpose.msra.mxu0 %v3380
        %3384 = vmatprep.subr.bf16.mxu0 0
        %3385 = vmatpush1.bf16.xpose.msra.mxu0 0
        %3386 = vmatprep.subr.bf16.mxu0 0
        %3387 = vmatpush1.bf16.xpose.msra.mxu0 0
        %3388 = vmatprep.subr.bf16.mxu0 0
        %3389 = vmatpush1.bf16.xpose.msra.mxu0 0
        %3390 = vmatprep.subr.bf16.mxu0 0
        %3391 = vmatpush1.bf16.xpose.msra.mxu0 0
        %3392 = vmatprep.subr.bf16.mxu0 0
        %3393 = vmatpush1.bf16.xpose.msra.mxu0 0
        %3394 = vmatprep.subr.bf16.mxu0 0
        %3395 = vmatpush1.bf16.xpose.msra.mxu0 0
        %3396 = vmatprep.subr.bf16.mxu0 0
        %3397 = vmatpush1.bf16.xpose.msra.mxu0 0
        %3398 = vmatprep.subr.bf16.mxu0 0
        %3399 = vmatpush1.bf16.xpose.msra.mxu0 0
        %3400 = vmatprep.subr.bf16.mxu0 0
        %3401 = vmatpush1.bf16.xpose.msra.mxu0 0
        %3402 = vmatprep.subr.bf16.mxu0 0
        %3403 = vmatpush1.bf16.xpose.msra.mxu0 0
        %3404 = vmatprep.subr.bf16.mxu0 0
        %3405 = vmatpush1.bf16.xpose.msra.mxu0 0
        %3406 = vmatprep.subr.bf16.mxu0 0
        %3407 = vmatpush1.bf16.xpose.msra.mxu0 0
        %3408 = vmatprep.subr.bf16.mxu0 0
        %3409 = vmatpush1.bf16.xpose.msra.mxu0 0
        %3410 = vmatprep.subr.bf16.mxu0 0
        %3411 = vmatpush1.bf16.xpose.msra.mxu0 0
        %3412 = vmatprep.subr.bf16.mxu0 0
        %3413 = vmatpush1.bf16.xpose.msra.mxu0 0
        %3414 = vmatprep.mubr.bf16.mxu0 0
        %3415 = vmatmul.mubr.bf16.gmra.mrb[0].mxu0 %v3377
        %v3416 = vpop.f32.mrb[0].mxu0
        %v3417 = vadd.f32 0.0, %v3416
        %v3418 = vpop.f32.mrb[0].mxu0
        %v3419 = vpop.f32.mrb[0].mxu0
        %v3420 = vpop.f32.mrb[0].mxu0
        %3421 = vdwg.mxu0
        %v3422 = vmul.f32 %v3417, 0.17677669
        %v3423 = vsel %vm1209, %v3422, -inf
        %3424 = vmax.xlane.f32.xlu0 %v3423
        %v3425 = vpop.xlane.xlu0 %3424
        %v3426 = vsub.f32 %v3422, %v3425
        %v3427 = vmul.f32 %v3426, 1.442695
        %v3428 = vpow.pop %v3427
        %v3429 = vsel %vm1209, %v3428, 0.0
        %3430 = vadd.xlane.f32.xlu0 %v3429
        %v3431 = vpop.xlane.xlu0 %3430
        %v3432 = vrcp.pop %v3431
        %v3433 = vmul.f32 %v3428, %v3432
        %v3434 = vpack.c.bf16 %v3433, %v3433
        %3436 = vrot.lane.b32.xlu0 %v3264, 96
        %v3437 = vpop.permute.xlu0 %3436
        %v3439 = vsel %vm1209, %v3434, 0
        %v3442 = vsel %vm1225, %v3437, 0
        %3444 = vmatprep.subr.bf16.mxu0 0
        %3445 = vmatpush1.bf16.msra.mxu0 %v3442
        %3446 = vmatprep.subr.bf16.mxu0 0
        %3447 = vmatpush1.bf16.msra.mxu0 0
        %3448 = vmatprep.subr.bf16.mxu0 0
        %3449 = vmatpush1.bf16.msra.mxu0 0
        %3450 = vmatprep.subr.bf16.mxu0 0
        %3451 = vmatpush1.bf16.msra.mxu0 0
        %3452 = vmatprep.subr.bf16.mxu0 0
        %3453 = vmatpush1.bf16.msra.mxu0 0
        %3454 = vmatprep.subr.bf16.mxu0 0
        %3455 = vmatpush1.bf16.msra.mxu0 0
        %3456 = vmatprep.subr.bf16.mxu0 0
        %3457 = vmatpush1.bf16.msra.mxu0 0
        %3458 = vmatprep.subr.bf16.mxu0 0
        %3459 = vmatpush1.bf16.msra.mxu0 0
        %3460 = vmatprep.subr.bf16.mxu0 0
        %3461 = vmatpush1.bf16.msra.mxu0 0
        %3462 = vmatprep.subr.bf16.mxu0 0
        %3463 = vmatpush1.bf16.msra.mxu0 0
        %3464 = vmatprep.subr.bf16.mxu0 0
        %3465 = vmatpush1.bf16.msra.mxu0 0
        %3466 = vmatprep.subr.bf16.mxu0 0
        %3467 = vmatpush1.bf16.msra.mxu0 0
        %3468 = vmatprep.subr.bf16.mxu0 0
        %3469 = vmatpush1.bf16.msra.mxu0 0
        %3470 = vmatprep.subr.bf16.mxu0 0
        %3471 = vmatpush1.bf16.msra.mxu0 0
        %3472 = vmatprep.subr.bf16.mxu0 0
        %3473 = vmatpush1.bf16.msra.mxu0 0
        %3474 = vmatprep.subr.bf16.mxu0 0
        %3475 = vmatpush1.bf16.msra.mxu0 0
        %3476 = vmatprep.mubr.bf16.mxu0 0
        %3477 = vmatmul.mubr.bf16.gmra.mrb[0].mxu0 %v3439
        %v3478 = vpop.f32.mrb[0].mxu0
        %v3479 = vadd.f32 0.0, %v3478
        %v3480 = vpop.f32.mrb[0].mxu0
        %v3481 = vpop.f32.mrb[0].mxu0
        %v3482 = vpop.f32.mrb[0].mxu0
        %3483 = vdwg.mxu0
        %3484 = vrot.lane.b32.xlu0 %v3262, 64
        %v3485 = vpop.permute.xlu0 %3484
        %3486 = vrot.lane.b32.xlu0 %v3263, 64
        %v3487 = vpop.permute.xlu0 %3486
        %v3489 = vsel %vm1161, %v3485, 0
        %v3492 = vsel %vm1161, %v3487, 0
        %3494 = vmatprep.subr.bf16.mxu0 0
        %3495 = vmatpush1.bf16.xpose.msra.mxu0 %v3492
        %3496 = vmatprep.subr.bf16.mxu0 0
        %3497 = vmatpush1.bf16.xpose.msra.mxu0 0
        %3498 = vmatprep.subr.bf16.mxu0 0
        %3499 = vmatpush1.bf16.xpose.msra.mxu0 0
        %3500 = vmatprep.subr.bf16.mxu0 0
        %3501 = vmatpush1.bf16.xpose.msra.mxu0 0
        %3502 = vmatprep.subr.bf16.mxu0 0
        %3503 = vmatpush1.bf16.xpose.msra.mxu0 0
        %3504 = vmatprep.subr.bf16.mxu0 0
        %3505 = vmatpush1.bf16.xpose.msra.mxu0 0
        %3506 = vmatprep.subr.bf16.mxu0 0
        %3507 = vmatpush1.bf16.xpose.msra.mxu0 0
        %3508 = vmatprep.subr.bf16.mxu0 0
        %3509 = vmatpush1.bf16.xpose.msra.mxu0 0
        %3510 = vmatprep.subr.bf16.mxu0 0
        %3511 = vmatpush1.bf16.xpose.msra.mxu0 0
        %3512 = vmatprep.subr.bf16.mxu0 0
        %3513 = vmatpush1.bf16.xpose.msra.mxu0 0
        %3514 = vmatprep.subr.bf16.mxu0 0
        %3515 = vmatpush1.bf16.xpose.msra.mxu0 0
        %3516 = vmatprep.subr.bf16.mxu0 0
        %3517 = vmatpush1.bf16.xpose.msra.mxu0 0
        %3518 = vmatprep.subr.bf16.mxu0 0
        %3519 = vmatpush1.bf16.xpose.msra.mxu0 0
        %3520 = vmatprep.subr.bf16.mxu0 0
        %3521 = vmatpush1.bf16.xpose.msra.mxu0 0
        %3522 = vmatprep.subr.bf16.mxu0 0
        %3523 = vmatpush1.bf16.xpose.msra.mxu0 0
        %3524 = vmatprep.subr.bf16.mxu0 0
        %3525 = vmatpush1.bf16.xpose.msra.mxu0 0
        %3526 = vmatprep.mubr.bf16.mxu0 0
        %3527 = vmatmul.mubr.bf16.gmra.mrb[0].mxu0 %v3489
        %v3528 = vpop.f32.mrb[0].mxu0
        %v3529 = vadd.f32 0.0, %v3528
        %v3530 = vpop.f32.mrb[0].mxu0
        %v3531 = vpop.f32.mrb[0].mxu0
        %v3532 = vpop.f32.mrb[0].mxu0
        %3533 = vdwg.mxu0
        %v3534 = vmul.f32 %v3529, 0.17677669
        %v3535 = vsel %vm1209, %v3534, -inf
        %3536 = vmax.xlane.f32.xlu0 %v3535
        %v3537 = vpop.xlane.xlu0 %3536
        %v3538 = vsub.f32 %v3534, %v3537
        %v3539 = vmul.f32 %v3538, 1.442695
        %v3540 = vpow.pop %v3539
        %v3541 = vsel %vm1209, %v3540, 0.0
        %3542 = vadd.xlane.f32.xlu0 %v3541
        %v3543 = vpop.xlane.xlu0 %3542
        %v3544 = vrcp.pop %v3543
        %v3545 = vmul.f32 %v3540, %v3544
        %v3546 = vpack.c.bf16 %v3545, %v3545
        %3547 = vrot.lane.b32.xlu0 %v3264, 64
        %v3548 = vpop.permute.xlu0 %3547
        %v3550 = vsel %vm1209, %v3546, 0
        %v3553 = vsel %vm1225, %v3548, 0
        %3555 = vmatprep.subr.bf16.mxu0 0
        %3556 = vmatpush1.bf16.msra.mxu0 %v3553
        %3557 = vmatprep.subr.bf16.mxu0 0
        %3558 = vmatpush1.bf16.msra.mxu0 0
        %3559 = vmatprep.subr.bf16.mxu0 0
        %3560 = vmatpush1.bf16.msra.mxu0 0
        %3561 = vmatprep.subr.bf16.mxu0 0
        %3562 = vmatpush1.bf16.msra.mxu0 0
        %3563 = vmatprep.subr.bf16.mxu0 0
        %3564 = vmatpush1.bf16.msra.mxu0 0
        %3565 = vmatprep.subr.bf16.mxu0 0
        %3566 = vmatpush1.bf16.msra.mxu0 0
        %3567 = vmatprep.subr.bf16.mxu0 0
        %3568 = vmatpush1.bf16.msra.mxu0 0
        %3569 = vmatprep.subr.bf16.mxu0 0
        %3570 = vmatpush1.bf16.msra.mxu0 0
        %3571 = vmatprep.subr.bf16.mxu0 0
        %3572 = vmatpush1.bf16.msra.mxu0 0
        %3573 = vmatprep.subr.bf16.mxu0 0
        %3574 = vmatpush1.bf16.msra.mxu0 0
        %3575 = vmatprep.subr.bf16.mxu0 0
        %3576 = vmatpush1.bf16.msra.mxu0 0
        %3577 = vmatprep.subr.bf16.mxu0 0
        %3578 = vmatpush1.bf16.msra.mxu0 0
        %3579 = vmatprep.subr.bf16.mxu0 0
        %3580 = vmatpush1.bf16.msra.mxu0 0
        %3581 = vmatprep.subr.bf16.mxu0 0
        %3582 = vmatpush1.bf16.msra.mxu0 0
        %3583 = vmatprep.subr.bf16.mxu0 0
        %3584 = vmatpush1.bf16.msra.mxu0 0
        %3585 = vmatprep.subr.bf16.mxu0 0
        %3586 = vmatpush1.bf16.msra.mxu0 0
        %3587 = vmatprep.mubr.bf16.mxu0 0
        %3588 = vmatmul.mubr.bf16.gmra.mrb[0].mxu0 %v3550
        %v3589 = vpop.f32.mrb[0].mxu0
        %v3590 = vadd.f32 0.0, %v3589
        %v3591 = vpop.f32.mrb[0].mxu0
        %v3592 = vpop.f32.mrb[0].mxu0
        %v3593 = vpop.f32.mrb[0].mxu0
        %3594 = vdwg.mxu0
        %3595 = vrot.lane.b32.xlu0 %v3262, 32
        %v3596 = vpop.permute.xlu0 %3595
        %3597 = vrot.lane.b32.xlu0 %v3263, 32
        %v3598 = vpop.permute.xlu0 %3597
        %v3600 = vsel %vm1161, %v3596, 0
        %v3603 = vsel %vm1161, %v3598, 0
        %3605 = vmatprep.subr.bf16.mxu0 0
        %3606 = vmatpush1.bf16.xpose.msra.mxu0 %v3603
        %3607 = vmatprep.subr.bf16.mxu0 0
        %3608 = vmatpush1.bf16.xpose.msra.mxu0 0
        %3609 = vmatprep.subr.bf16.mxu0 0
        %3610 = vmatpush1.bf16.xpose.msra.mxu0 0
        %3611 = vmatprep.subr.bf16.mxu0 0
        %3612 = vmatpush1.bf16.xpose.msra.mxu0 0
        %3613 = vmatprep.subr.bf16.mxu0 0
        %3614 = vmatpush1.bf16.xpose.msra.mxu0 0
        %3615 = vmatprep.subr.bf16.mxu0 0
        %3616 = vmatpush1.bf16.xpose.msra.mxu0 0
        %3617 = vmatprep.subr.bf16.mxu0 0
        %3618 = vmatpush1.bf16.xpose.msra.mxu0 0
        %3619 = vmatprep.subr.bf16.mxu0 0
        %3620 = vmatpush1.bf16.xpose.msra.mxu0 0
        %3621 = vmatprep.subr.bf16.mxu0 0
        %3622 = vmatpush1.bf16.xpose.msra.mxu0 0
        %3623 = vmatprep.subr.bf16.mxu0 0
        %3624 = vmatpush1.bf16.xpose.msra.mxu0 0
        %3625 = vmatprep.subr.bf16.mxu0 0
        %3626 = vmatpush1.bf16.xpose.msra.mxu0 0
        %3627 = vmatprep.subr.bf16.mxu0 0
        %3628 = vmatpush1.bf16.xpose.msra.mxu0 0
        %3629 = vmatprep.subr.bf16.mxu0 0
        %3630 = vmatpush1.bf16.xpose.msra.mxu0 0
        %3631 = vmatprep.subr.bf16.mxu0 0
        %3632 = vmatpush1.bf16.xpose.msra.mxu0 0
        %3633 = vmatprep.subr.bf16.mxu0 0
        %3634 = vmatpush1.bf16.xpose.msra.mxu0 0
        %3635 = vmatprep.subr.bf16.mxu0 0
        %3636 = vmatpush1.bf16.xpose.msra.mxu0 0
        %3637 = vmatprep.mubr.bf16.mxu0 0
        %3638 = vmatmul.mubr.bf16.gmra.mrb[0].mxu0 %v3600
        %v3639 = vpop.f32.mrb[0].mxu0
        %v3640 = vadd.f32 0.0, %v3639
        %v3641 = vpop.f32.mrb[0].mxu0
        %v3642 = vpop.f32.mrb[0].mxu0
        %v3643 = vpop.f32.mrb[0].mxu0
        %3644 = vdwg.mxu0
        %v3645 = vmul.f32 %v3640, 0.17677669
        %v3646 = vsel %vm1209, %v3645, -inf
        %3647 = vmax.xlane.f32.xlu0 %v3646
        %v3648 = vpop.xlane.xlu0 %3647
        %v3649 = vsub.f32 %v3645, %v3648
        %v3650 = vmul.f32 %v3649, 1.442695
        %v3651 = vpow.pop %v3650
        %v3652 = vsel %vm1209, %v3651, 0.0
        %3653 = vadd.xlane.f32.xlu0 %v3652
        %v3654 = vpop.xlane.xlu0 %3653
        %v3655 = vrcp.pop %v3654
        %v3656 = vmul.f32 %v3651, %v3655
        %v3657 = vpack.c.bf16 %v3656, %v3656
        %3658 = vrot.lane.b32.xlu0 %v3264, 32
        %v3659 = vpop.permute.xlu0 %3658
        %v3661 = vsel %vm1209, %v3657, 0
        %v3664 = vsel %vm1225, %v3659, 0
        %3666 = vmatprep.subr.bf16.mxu0 0
        %3667 = vmatpush1.bf16.msra.mxu0 %v3664
        %3668 = vmatprep.subr.bf16.mxu0 0
        %3669 = vmatpush1.bf16.msra.mxu0 0
        %3670 = vmatprep.subr.bf16.mxu0 0
        %3671 = vmatpush1.bf16.msra.mxu0 0
        %3672 = vmatprep.subr.bf16.mxu0 0
        %3673 = vmatpush1.bf16.msra.mxu0 0
        %3674 = vmatprep.subr.bf16.mxu0 0
        %3675 = vmatpush1.bf16.msra.mxu0 0
        %3676 = vmatprep.subr.bf16.mxu0 0
        %3677 = vmatpush1.bf16.msra.mxu0 0
        %3678 = vmatprep.subr.bf16.mxu0 0
        %3679 = vmatpush1.bf16.msra.mxu0 0
        %3680 = vmatprep.subr.bf16.mxu0 0
        %3681 = vmatpush1.bf16.msra.mxu0 0
        %3682 = vmatprep.subr.bf16.mxu0 0
        %3683 = vmatpush1.bf16.msra.mxu0 0
        %3684 = vmatprep.subr.bf16.mxu0 0
        %3685 = vmatpush1.bf16.msra.mxu0 0
        %3686 = vmatprep.subr.bf16.mxu0 0
        %3687 = vmatpush1.bf16.msra.mxu0 0
        %3688 = vmatprep.subr.bf16.mxu0 0
        %3689 = vmatpush1.bf16.msra.mxu0 0
        %3690 = vmatprep.subr.bf16.mxu0 0
        %3691 = vmatpush1.bf16.msra.mxu0 0
        %3692 = vmatprep.subr.bf16.mxu0 0
        %3693 = vmatpush1.bf16.msra.mxu0 0
        %3694 = vmatprep.subr.bf16.mxu0 0
        %3695 = vmatpush1.bf16.msra.mxu0 0
        %3696 = vmatprep.subr.bf16.mxu0 0
        %3697 = vmatpush1.bf16.msra.mxu0 0
        %3698 = vmatprep.mubr.bf16.mxu0 0
        %3699 = vmatmul.mubr.bf16.gmra.mrb[0].mxu0 %v3661
        %v3700 = vpop.f32.mrb[0].mxu0
        %v3701 = vadd.f32 0.0, %v3700
        %v3702 = vpop.f32.mrb[0].mxu0
        %v3703 = vpop.f32.mrb[0].mxu0
        %v3704 = vpop.f32.mrb[0].mxu0
        %3705 = vdwg.mxu0
        %3707 = vrot.lane.b32.xlu0 %v3479, 32
        %v3708 = vpop.permute.xlu0 %3707
        %3711 = vrot.lane.b32.xlu0 %v3590, 64
        %v3712 = vpop.permute.xlu0 %3711
        %3715 = vrot.lane.b32.xlu0 %v3701, 96
        %v3716 = vpop.permute.xlu0 %3715
        %v3718 = vsel %vm1161, %v3365, %v3708
        %v3719 = vsel %vm1618, %v3718, %v3712
        %v3720 = vsel %vm1620, %v3719, %v3716
        %s3721 = scalar_lea.vmem [#allocation7], 64
        %v3722 = vld [vmem:[%s3721] sm:$0xf]
        %v3723 = vld [vmem:[%s3721 + $0x4] sm:$0xf]
        %v3724 = vld [vmem:[%s3721 + $0x8] sm:$0xf]
        %v3725 = vld [vmem:[%s3721 + $0xc] sm:$0xf]
        %v3726 = vld [vmem:[%s3721 + $0x10] sm:$0xf]
        %v3727 = vld [vmem:[%s3721 + $0x14] sm:$0xf]
        %v3728 = vld [vmem:[%s3721 + $0x18] sm:$0xf]
        %v3729 = vld [vmem:[%s3721 + $0x1c] sm:$0xf]
        %v3730 = vld [vmem:[%s3721 + $0x20] sm:$0xf]
        %v3731 = vld [vmem:[%s3721 + $0x24] sm:$0xf]
        %v3732 = vld [vmem:[%s3721 + $0x28] sm:$0xf]
        %v3733 = vld [vmem:[%s3721 + $0x2c] sm:$0xf]
        %v3734 = vld [vmem:[%s3721 + $0x30] sm:$0xf]
        %v3735 = vld [vmem:[%s3721 + $0x34] sm:$0xf]
        %v3736 = vld [vmem:[%s3721 + $0x38] sm:$0xf]
        %v3737 = vld [vmem:[%s3721 + $0x3c] sm:$0xf]
        %s3738 = scalar_lea.vmem %s7, 1
        %v3739 = vld [vmem:[%s3738] sm:$0x1]
        %v3740 = vpack.c.bf16 %v3720, %v3720
        %v3742 = vlaneseq
        %v3743 = vshrl.u32 %v3742, 7
        %v3744 = vsub.s32 0, %v3743
        %v3745 = vrot.slane %v3739, %v3744
        %v3763 = vunpack.c.l.b16 %v3722
        %v3764 = vunpack.c.l.b16 %v3723
        %v3765 = vunpack.c.l.b16 %v3724
        %v3766 = vunpack.c.l.b16 %v3725
        %v3767 = vunpack.c.l.b16 %v3726
        %v3768 = vunpack.c.l.b16 %v3727
        %v3769 = vunpack.c.l.b16 %v3728
        %v3770 = vunpack.c.l.b16 %v3729
        %v3771 = vunpack.c.l.b16 %v3730
        %v3772 = vunpack.c.l.b16 %v3731
        %v3773 = vunpack.c.l.b16 %v3732
        %v3774 = vunpack.c.l.b16 %v3733
        %v3775 = vunpack.c.l.b16 %v3734
        %v3776 = vunpack.c.l.b16 %v3735
        %v3777 = vunpack.c.l.b16 %v3736
        %v3778 = vunpack.c.l.b16 %v3737
        %v3779 = vpack.c.b16 %v3764, %v3763
        %v3780 = vpack.c.b16 %v3766, %v3765
        %v3781 = vpack.c.b16 %v3768, %v3767
        %v3782 = vpack.c.b16 %v3770, %v3769
        %v3783 = vpack.c.b16 %v3772, %v3771
        %v3784 = vpack.c.b16 %v3774, %v3773
        %v3785 = vpack.c.b16 %v3776, %v3775
        %v3786 = vpack.c.b16 %v3778, %v3777
        %3795 = vmatprep.subr.bf16.mxu0 0
        %3796 = vmatpush1.bf16.msra.mxu0 %v3779
        %3797 = vmatprep.subr.bf16.mxu0 0
        %3798 = vmatpush1.bf16.msra.mxu0 %v3780
        %3799 = vmatprep.subr.bf16.mxu0 0
        %3800 = vmatpush1.bf16.msra.mxu0 %v3781
        %3801 = vmatprep.subr.bf16.mxu0 0
        %3802 = vmatpush1.bf16.msra.mxu0 %v3782
        %3803 = vmatprep.subr.bf16.mxu0 0
        %3804 = vmatpush1.bf16.msra.mxu0 %v3783
        %3805 = vmatprep.subr.bf16.mxu0 0
        %3806 = vmatpush1.bf16.msra.mxu0 %v3784
        %3807 = vmatprep.subr.bf16.mxu0 0
        %3808 = vmatpush1.bf16.msra.mxu0 %v3785
        %3809 = vmatprep.subr.bf16.mxu0 0
        %3810 = vmatpush1.bf16.msra.mxu0 %v3786
        %3811 = vmatprep.subr.bf16.mxu0 0
        %3812 = vmatpush1.bf16.msra.mxu0 0
        %3813 = vmatprep.subr.bf16.mxu0 0
        %3814 = vmatpush1.bf16.msra.mxu0 0
        %3815 = vmatprep.subr.bf16.mxu0 0
        %3816 = vmatpush1.bf16.msra.mxu0 0
        %3817 = vmatprep.subr.bf16.mxu0 0
        %3818 = vmatpush1.bf16.msra.mxu0 0
        %3819 = vmatprep.subr.bf16.mxu0 0
        %3820 = vmatpush1.bf16.msra.mxu0 0
        %3821 = vmatprep.subr.bf16.mxu0 0
        %3822 = vmatpush1.bf16.msra.mxu0 0
        %3823 = vmatprep.subr.bf16.mxu0 0
        %3824 = vmatpush1.bf16.msra.mxu0 0
        %3825 = vmatprep.subr.bf16.mxu0 0
        %3826 = vmatpush1.bf16.msra.mxu0 0
        %3827 = vmatprep.mubr.bf16.mxu0 0
        %3828 = vmatmul.mubr.bf16.gmra.mrb[0].mxu0 %v3740
        %v3829 = vpop.f32.mrb[0].mxu0
        %v3830 = vadd.f32 %v3745, %v3829
        %v3831 = vpop.f32.mrb[0].mxu0
        %v3832 = vpop.f32.mrb[0].mxu0
        %v3833 = vpop.f32.mrb[0].mxu0
        %3834 = vdwg.mxu0
        %v3835 = vadd.f32 %v2964, %v3830
        %s3836 = scalar_lea.vmem %s2, 4
        %v3837 = vld [vmem:[%s3836] sm:$0x1]
        %s3838 = scalar_lea.vmem %s3, 4
        %v3839 = vld [vmem:[%s3838] sm:$0x1]
        %3840 = vadd.xlane.f32.xlu0 %v3835
        %v3841 = vpop.xlane.xlu0 %3840
        %v3842 = vmul.f32 %v3841, %v867
        %v3843 = vsub.f32 %v3835, %v3842
        %v3844 = vmul.f32 %v3843, %v3843
        %3845 = vadd.xlane.f32.xlu0 %v3844
        %v3846 = vpop.xlane.xlu0 %3845
        %v3847 = vmul.f32 %v3846, %v873
        %v3848 = vrsqrt.pop %v3847
        %v3849 = vmul.f32 %v3847, %v3848
        %vm3850 = vcmp.eq.f32.partialorder %v3847, inf
        %v3851 = vsel %vm3850, %v3847, %v3849
        %vm3852 = vcmp.eq.f32.partialorder %v3847, 0.0
        %v3853 = vand.u32 %v3847, 2147483648
        %v3854 = vsel %vm3852, %v3853, %v3851
        %v3856 = vlaneseq
        %v3857 = vshrl.u32 %v3856, 7
        %v3858 = vsub.s32 0, %v3857
        %v3859 = vrot.slane %v3837, %v3858
        %v3861 = vmul.f32 %v3859, %v3843
        %v3862 = vadd.f32 %v3854, 1e-06
        %v3863 = vrcp.pop %v3862
        %v3864 = vmul.f32 %v3861, %v3863
        %v3866 = vlaneseq
        %v3867 = vshrl.u32 %v3866, 7
        %v3868 = vsub.s32 0, %v3867
        %v3869 = vrot.slane %v3839, %v3868
        %v3871 = vadd.f32 %v3864, %v3869
        %s3872 = scalar_lea.vmem [#allocation8], 64
        %v3873 = vld [vmem:[%s3872] sm:$0xf]
        %v3874 = vld [vmem:[%s3872 + $0x4] sm:$0xf]
        %v3875 = vld [vmem:[%s3872 + $0x8] sm:$0xf]
        %v3876 = vld [vmem:[%s3872 + $0xc] sm:$0xf]
        %v3877 = vld [vmem:[%s3872 + $0x10] sm:$0xf]
        %v3878 = vld [vmem:[%s3872 + $0x14] sm:$0xf]
        %v3879 = vld [vmem:[%s3872 + $0x18] sm:$0xf]
        %v3880 = vld [vmem:[%s3872 + $0x1c] sm:$0xf]
        %v3881 = vld [vmem:[%s3872 + $0x20] sm:$0xf]
        %v3882 = vld [vmem:[%s3872 + $0x24] sm:$0xf]
        %v3883 = vld [vmem:[%s3872 + $0x28] sm:$0xf]
        %v3884 = vld [vmem:[%s3872 + $0x2c] sm:$0xf]
        %v3885 = vld [vmem:[%s3872 + $0x30] sm:$0xf]
        %v3886 = vld [vmem:[%s3872 + $0x34] sm:$0xf]
        %v3887 = vld [vmem:[%s3872 + $0x38] sm:$0xf]
        %v3888 = vld [vmem:[%s3872 + $0x3c] sm:$0xf]
        %s3889 = scalar_lea.vmem [#allocation10], 1
        %v3890 = vld [vmem:[%s3889] sm:$0x1]
        %v3891 = vpack.c.bf16 %v3871, %v3871
        %v3893 = vlaneseq
        %v3894 = vshrl.u32 %v3893, 7
        %v3895 = vsub.s32 0, %v3894
        %v3896 = vrot.slane %v3890, %v3895
        %v3914 = vunpack.c.l.b16 %v3873
        %v3915 = vunpack.c.l.b16 %v3874
        %v3916 = vunpack.c.l.b16 %v3875
        %v3917 = vunpack.c.l.b16 %v3876
        %v3918 = vunpack.c.l.b16 %v3877
        %v3919 = vunpack.c.l.b16 %v3878
        %v3920 = vunpack.c.l.b16 %v3879
        %v3921 = vunpack.c.l.b16 %v3880
        %v3922 = vunpack.c.l.b16 %v3881
        %v3923 = vunpack.c.l.b16 %v3882
        %v3924 = vunpack.c.l.b16 %v3883
        %v3925 = vunpack.c.l.b16 %v3884
        %v3926 = vunpack.c.l.b16 %v3885
        %v3927 = vunpack.c.l.b16 %v3886
        %v3928 = vunpack.c.l.b16 %v3887
        %v3929 = vunpack.c.l.b16 %v3888
        %v3930 = vpack.c.b16 %v3915, %v3914
        %v3931 = vpack.c.b16 %v3917, %v3916
        %v3932 = vpack.c.b16 %v3919, %v3918
        %v3933 = vpack.c.b16 %v3921, %v3920
        %v3934 = vpack.c.b16 %v3923, %v3922
        %v3935 = vpack.c.b16 %v3925, %v3924
        %v3936 = vpack.c.b16 %v3927, %v3926
        %v3937 = vpack.c.b16 %v3929, %v3928
        %3946 = vmatprep.subr.bf16.mxu0 0
        %3947 = vmatpush1.bf16.msra.mxu0 %v3930
        %3948 = vmatprep.subr.bf16.mxu0 0
        %3949 = vmatpush1.bf16.msra.mxu0 %v3931
        %3950 = vmatprep.subr.bf16.mxu0 0
        %3951 = vmatpush1.bf16.msra.mxu0 %v3932
        %3952 = vmatprep.subr.bf16.mxu0 0
        %3953 = vmatpush1.bf16.msra.mxu0 %v3933
        %3954 = vmatprep.subr.bf16.mxu0 0
        %3955 = vmatpush1.bf16.msra.mxu0 %v3934
        %3956 = vmatprep.subr.bf16.mxu0 0
        %3957 = vmatpush1.bf16.msra.mxu0 %v3935
        %3958 = vmatprep.subr.bf16.mxu0 0
        %3959 = vmatpush1.bf16.msra.mxu0 %v3936
        %3960 = vmatprep.subr.bf16.mxu0 0
        %3961 = vmatpush1.bf16.msra.mxu0 %v3937
        %3962 = vmatprep.subr.bf16.mxu0 0
        %3963 = vmatpush1.bf16.msra.mxu0 0
        %3964 = vmatprep.subr.bf16.mxu0 0
        %3965 = vmatpush1.bf16.msra.mxu0 0
        %3966 = vmatprep.subr.bf16.mxu0 0
        %3967 = vmatpush1.bf16.msra.mxu0 0
        %3968 = vmatprep.subr.bf16.mxu0 0
        %3969 = vmatpush1.bf16.msra.mxu0 0
        %3970 = vmatprep.subr.bf16.mxu0 0
        %3971 = vmatpush1.bf16.msra.mxu0 0
        %3972 = vmatprep.subr.bf16.mxu0 0
        %3973 = vmatpush1.bf16.msra.mxu0 0
        %3974 = vmatprep.subr.bf16.mxu0 0
        %3975 = vmatpush1.bf16.msra.mxu0 0
        %3976 = vmatprep.subr.bf16.mxu0 0
        %3977 = vmatpush1.bf16.msra.mxu0 0
        %3978 = vmatprep.mubr.bf16.mxu0 0
        %3979 = vmatmul.mubr.bf16.gmra.mrb[0].mxu0 %v3891
        %v3980 = vpop.f32.mrb[0].mxu0
        %v3981 = vadd.f32 %v3896, %v3980
        %v3982 = vpop.f32.mrb[0].mxu0
        %v3983 = vpop.f32.mrb[0].mxu0
        %v3984 = vpop.f32.mrb[0].mxu0
        %3985 = vdwg.mxu0
        %s3986 = scalar_lea.vmem [#allocation11], 128
        %v3987 = vld [vmem:[%s3986] sm:$0xff]
        %v3988 = vld [vmem:[%s3986 + $0x8] sm:$0xff]
        %v3989 = vld [vmem:[%s3986 + $0x10] sm:$0xff]
        %v3990 = vld [vmem:[%s3986 + $0x18] sm:$0xff]
        %v3991 = vld [vmem:[%s3986 + $0x20] sm:$0xff]
        %v3992 = vld [vmem:[%s3986 + $0x28] sm:$0xff]
        %v3993 = vld [vmem:[%s3986 + $0x30] sm:$0xff]
        %v3994 = vld [vmem:[%s3986 + $0x38] sm:$0xff]
        %v3995 = vld [vmem:[%s3986 + $0x40] sm:$0xff]
        %v3996 = vld [vmem:[%s3986 + $0x48] sm:$0xff]
        %v3997 = vld [vmem:[%s3986 + $0x50] sm:$0xff]
        %v3998 = vld [vmem:[%s3986 + $0x58] sm:$0xff]
        %v3999 = vld [vmem:[%s3986 + $0x60] sm:$0xff]
        %v4000 = vld [vmem:[%s3986 + $0x68] sm:$0xff]
        %v4001 = vld [vmem:[%s3986 + $0x70] sm:$0xff]
        %v4002 = vld [vmem:[%s3986 + $0x78] sm:$0xff]
        %s4003 = scalar_lea.vmem [#allocation13], 2
        %v4004 = vld [vmem:[%s4003] sm:$0x3]
        %v4006 = vlaneseq
        %v4007 = vshrl.u32 %v4006, 7
        %v4008 = vsub.s32 0, %v4007
        %v4009 = vrot.slane %v4004, %v4008
        %v4010 = vlaneseq
        %v4011 = vshrl.u32 %v4010, 7
        %v4012 = vsub.s32 1, %v4011
        %v4013 = vrot.slane %v4004, %v4012
        %v4032 = vunpack.c.l.b16 %v3987
        %v4033 = vunpack.c.h.b16 %v3987
        %v4034 = vunpack.c.l.b16 %v3988
        %v4035 = vunpack.c.h.b16 %v3988
        %v4036 = vunpack.c.l.b16 %v3989
        %v4037 = vunpack.c.h.b16 %v3989
        %v4038 = vunpack.c.l.b16 %v3990
        %v4039 = vunpack.c.h.b16 %v3990
        %v4040 = vunpack.c.l.b16 %v3991
        %v4041 = vunpack.c.h.b16 %v3991
        %v4042 = vunpack.c.l.b16 %v3992
        %v4043 = vunpack.c.h.b16 %v3992
        %v4044 = vunpack.c.l.b16 %v3993
        %v4045 = vunpack.c.h.b16 %v3993
        %v4046 = vunpack.c.l.b16 %v3994
        %v4047 = vunpack.c.h.b16 %v3994
        %v4048 = vunpack.c.l.b16 %v3995
        %v4049 = vunpack.c.h.b16 %v3995
        %v4050 = vunpack.c.l.b16 %v3996
        %v4051 = vunpack.c.h.b16 %v3996
        %v4052 = vunpack.c.l.b16 %v3997
        %v4053 = vunpack.c.h.b16 %v3997
        %v4054 = vunpack.c.l.b16 %v3998
        %v4055 = vunpack.c.h.b16 %v3998
        %v4056 = vunpack.c.l.b16 %v3999
        %v4057 = vunpack.c.h.b16 %v3999
        %v4058 = vunpack.c.l.b16 %v4000
        %v4059 = vunpack.c.h.b16 %v4000
        %v4060 = vunpack.c.l.b16 %v4001
        %v4061 = vunpack.c.h.b16 %v4001
        %v4062 = vunpack.c.l.b16 %v4002
        %v4063 = vunpack.c.h.b16 %v4002
        %v4064 = vpack.c.b16 %v4034, %v4032
        %v4065 = vpack.c.b16 %v4035, %v4033
        %v4066 = vpack.c.b16 %v4038, %v4036
        %v4067 = vpack.c.b16 %v4039, %v4037
        %v4068 = vpack.c.b16 %v4042, %v4040
        %v4069 = vpack.c.b16 %v4043, %v4041
        %v4070 = vpack.c.b16 %v4046, %v4044
        %v4071 = vpack.c.b16 %v4047, %v4045
        %v4072 = vpack.c.b16 %v4050, %v4048
        %v4073 = vpack.c.b16 %v4051, %v4049
        %v4074 = vpack.c.b16 %v4054, %v4052
        %v4075 = vpack.c.b16 %v4055, %v4053
        %v4076 = vpack.c.b16 %v4058, %v4056
        %v4077 = vpack.c.b16 %v4059, %v4057
        %v4078 = vpack.c.b16 %v4062, %v4060
        %v4079 = vpack.c.b16 %v4063, %v4061
        %4096 = vmatprep.subr.bf16.mxu0 %v4065
        %4097 = vmatpush1.bf16.msra.mxu0 %v4064
        %4098 = vmatprep.subr.bf16.mxu0 %v4067
        %4099 = vmatpush1.bf16.msra.mxu0 %v4066
        %4100 = vmatprep.subr.bf16.mxu0 %v4069
        %4101 = vmatpush1.bf16.msra.mxu0 %v4068
        %4102 = vmatprep.subr.bf16.mxu0 %v4071
        %4103 = vmatpush1.bf16.msra.mxu0 %v4070
        %4104 = vmatprep.subr.bf16.mxu0 %v4073
        %4105 = vmatpush1.bf16.msra.mxu0 %v4072
        %4106 = vmatprep.subr.bf16.mxu0 %v4075
        %4107 = vmatpush1.bf16.msra.mxu0 %v4074
        %4108 = vmatprep.subr.bf16.mxu0 %v4077
        %4109 = vmatpush1.bf16.msra.mxu0 %v4076
        %4110 = vmatprep.subr.bf16.mxu0 %v4079
        %4111 = vmatpush1.bf16.msra.mxu0 %v4078
        %4112 = vmatprep.subr.bf16.mxu0 0
        %4113 = vmatpush1.bf16.msra.mxu0 0
        %4114 = vmatprep.subr.bf16.mxu0 0
        %4115 = vmatpush1.bf16.msra.mxu0 0
        %4116 = vmatprep.subr.bf16.mxu0 0
        %4117 = vmatpush1.bf16.msra.mxu0 0
        %4118 = vmatprep.subr.bf16.mxu0 0
        %4119 = vmatpush1.bf16.msra.mxu0 0
        %4120 = vmatprep.subr.bf16.mxu0 0
        %4121 = vmatpush1.bf16.msra.mxu0 0
        %4122 = vmatprep.subr.bf16.mxu0 0
        %4123 = vmatpush1.bf16.msra.mxu0 0
        %4124 = vmatprep.subr.bf16.mxu0 0
        %4125 = vmatpush1.bf16.msra.mxu0 0
        %4126 = vmatprep.subr.bf16.mxu0 0
        %4127 = vmatpush1.bf16.msra.mxu0 0
        %4128 = vmatprep.mubr.bf16.mxu0 0
        %4129 = vmatmul.mubr.bf16.gmra.mrb[0].mxu0 %v1900
        %v4130 = vpop.f32.mrb[0].mxu0
        %v4131 = vadd.f32 %v4009, %v4130
        %v4132 = vpop.f32.mrb[0].mxu0
        %v4133 = vadd.f32 %v4013, %v4132
        %v4134 = vpop.f32.mrb[0].mxu0
        %v4135 = vadd.f32 %v4009, %v4134
        %v4136 = vpop.f32.mrb[0].mxu0
        %v4137 = vadd.f32 %v4013, %v4136
        %4138 = vdwg.mxu0
        %v4139 = vpack.c.bf16 %v3981, %v3981
        %v4140 = vpack.c.bf16 %v4135, %v4131
        %v4141 = vpack.c.bf16 %v4137, %v4133
        %v4143 = vsel %vm1161, %v4139, 0
        %v4146 = vsel %vm1161, %v4140, 0
        %4148 = vmatprep.subr.bf16.mxu0 0
        %4149 = vmatpush1.bf16.xpose.msra.mxu0 %v4146
        %4150 = vmatprep.subr.bf16.mxu0 0
        %4151 = vmatpush1.bf16.xpose.msra.mxu0 0
        %4152 = vmatprep.subr.bf16.mxu0 0
        %4153 = vmatpush1.bf16.xpose.msra.mxu0 0
        %4154 = vmatprep.subr.bf16.mxu0 0
        %4155 = vmatpush1.bf16.xpose.msra.mxu0 0
        %4156 = vmatprep.subr.bf16.mxu0 0
        %4157 = vmatpush1.bf16.xpose.msra.mxu0 0
        %4158 = vmatprep.subr.bf16.mxu0 0
        %4159 = vmatpush1.bf16.xpose.msra.mxu0 0
        %4160 = vmatprep.subr.bf16.mxu0 0
        %4161 = vmatpush1.bf16.xpose.msra.mxu0 0
        %4162 = vmatprep.subr.bf16.mxu0 0
        %4163 = vmatpush1.bf16.xpose.msra.mxu0 0
        %4164 = vmatprep.subr.bf16.mxu0 0
        %4165 = vmatpush1.bf16.xpose.msra.mxu0 0
        %4166 = vmatprep.subr.bf16.mxu0 0
        %4167 = vmatpush1.bf16.xpose.msra.mxu0 0
        %4168 = vmatprep.subr.bf16.mxu0 0
        %4169 = vmatpush1.bf16.xpose.msra.mxu0 0
        %4170 = vmatprep.subr.bf16.mxu0 0
        %4171 = vmatpush1.bf16.xpose.msra.mxu0 0
        %4172 = vmatprep.subr.bf16.mxu0 0
        %4173 = vmatpush1.bf16.xpose.msra.mxu0 0
        %4174 = vmatprep.subr.bf16.mxu0 0
        %4175 = vmatpush1.bf16.xpose.msra.mxu0 0
        %4176 = vmatprep.subr.bf16.mxu0 0
        %4177 = vmatpush1.bf16.xpose.msra.mxu0 0
        %4178 = vmatprep.subr.bf16.mxu0 0
        %4179 = vmatpush1.bf16.xpose.msra.mxu0 0
        %4180 = vmatprep.mubr.bf16.mxu0 0
        %4181 = vmatmul.mubr.bf16.gmra.mrb[0].mxu0 %v4143
        %v4182 = vpop.f32.mrb[0].mxu0
        %v4183 = vadd.f32 0.0, %v4182
        %v4184 = vpop.f32.mrb[0].mxu0
        %v4185 = vpop.f32.mrb[0].mxu0
        %v4186 = vpop.f32.mrb[0].mxu0
        %4187 = vdwg.mxu0
        %v4188 = vmul.f32 %v4183, 0.17677669
        %v4189 = vsel %vm2085, %v4188, -inf
        %4190 = vmax.xlane.f32.xlu0 %v4189
        %v4191 = vpop.xlane.xlu0 %4190
        %v4192 = vsub.f32 %v4188, %v4191
        %v4193 = vmul.f32 %v4192, 1.442695
        %v4194 = vpow.pop %v4193
        %v4195 = vsel %vm2085, %v4194, 0.0
        %4196 = vadd.xlane.f32.xlu0 %v4195
        %v4197 = vpop.xlane.xlu0 %4196
        %v4198 = vrcp.pop %v4197
        %v4199 = vmul.f32 %v4194, %v4198
        %v4200 = vpack.c.bf16 %v4199, %v4199
        %v4202 = vsel %vm2085, %v4200, 0
        %4204 = vmatprep.subr.bf16.mxu0 0
        %4205 = vmatpush1.bf16.msra.mxu0 %v4141
        %4206 = vmatprep.subr.bf16.mxu0 0
        %4207 = vmatpush1.bf16.msra.mxu0 0
        %4208 = vmatprep.subr.bf16.mxu0 0
        %4209 = vmatpush1.bf16.msra.mxu0 0
        %4210 = vmatprep.subr.bf16.mxu0 0
        %4211 = vmatpush1.bf16.msra.mxu0 0
        %4212 = vmatprep.subr.bf16.mxu0 0
        %4213 = vmatpush1.bf16.msra.mxu0 0
        %4214 = vmatprep.subr.bf16.mxu0 0
        %4215 = vmatpush1.bf16.msra.mxu0 0
        %4216 = vmatprep.subr.bf16.mxu0 0
        %4217 = vmatpush1.bf16.msra.mxu0 0
        %4218 = vmatprep.subr.bf16.mxu0 0
        %4219 = vmatpush1.bf16.msra.mxu0 0
        %4220 = vmatprep.subr.bf16.mxu0 0
        %4221 = vmatpush1.bf16.msra.mxu0 0
        %4222 = vmatprep.subr.bf16.mxu0 0
        %4223 = vmatpush1.bf16.msra.mxu0 0
        %4224 = vmatprep.subr.bf16.mxu0 0
        %4225 = vmatpush1.bf16.msra.mxu0 0
        %4226 = vmatprep.subr.bf16.mxu0 0
        %4227 = vmatpush1.bf16.msra.mxu0 0
        %4228 = vmatprep.subr.bf16.mxu0 0
        %4229 = vmatpush1.bf16.msra.mxu0 0
        %4230 = vmatprep.subr.bf16.mxu0 0
        %4231 = vmatpush1.bf16.msra.mxu0 0
        %4232 = vmatprep.subr.bf16.mxu0 0
        %4233 = vmatpush1.bf16.msra.mxu0 0
        %4234 = vmatprep.subr.bf16.mxu0 0
        %4235 = vmatpush1.bf16.msra.mxu0 0
        %4236 = vmatprep.mubr.bf16.mxu0 0
        %4237 = vmatmul.mubr.bf16.gmra.mrb[0].mxu0 %v4202
        %v4238 = vpop.f32.mrb[0].mxu0
        %v4239 = vadd.f32 0.0, %v4238
        %v4240 = vpop.f32.mrb[0].mxu0
        %v4241 = vpop.f32.mrb[0].mxu0
        %v4242 = vpop.f32.mrb[0].mxu0
        %4243 = vdwg.mxu0
        %4245 = vrot.lane.b32.xlu0 %v4139, 96
        %v4246 = vpop.permute.xlu0 %4245
        %4248 = vrot.lane.b32.xlu0 %v4140, 96
        %v4249 = vpop.permute.xlu0 %4248
        %v4251 = vsel %vm1161, %v4246, 0
        %v4254 = vsel %vm1161, %v4249, 0
        %4256 = vmatprep.subr.bf16.mxu0 0
        %4257 = vmatpush1.bf16.xpose.msra.mxu0 %v4254
        %4258 = vmatprep.subr.bf16.mxu0 0
        %4259 = vmatpush1.bf16.xpose.msra.mxu0 0
        %4260 = vmatprep.subr.bf16.mxu0 0
        %4261 = vmatpush1.bf16.xpose.msra.mxu0 0
        %4262 = vmatprep.subr.bf16.mxu0 0
        %4263 = vmatpush1.bf16.xpose.msra.mxu0 0
        %4264 = vmatprep.subr.bf16.mxu0 0
        %4265 = vmatpush1.bf16.xpose.msra.mxu0 0
        %4266 = vmatprep.subr.bf16.mxu0 0
        %4267 = vmatpush1.bf16.xpose.msra.mxu0 0
        %4268 = vmatprep.subr.bf16.mxu0 0
        %4269 = vmatpush1.bf16.xpose.msra.mxu0 0
        %4270 = vmatprep.subr.bf16.mxu0 0
        %4271 = vmatpush1.bf16.xpose.msra.mxu0 0
        %4272 = vmatprep.subr.bf16.mxu0 0
        %4273 = vmatpush1.bf16.xpose.msra.mxu0 0
        %4274 = vmatprep.subr.bf16.mxu0 0
        %4275 = vmatpush1.bf16.xpose.msra.mxu0 0
        %4276 = vmatprep.subr.bf16.mxu0 0
        %4277 = vmatpush1.bf16.xpose.msra.mxu0 0
        %4278 = vmatprep.subr.bf16.mxu0 0
        %4279 = vmatpush1.bf16.xpose.msra.mxu0 0
        %4280 = vmatprep.subr.bf16.mxu0 0
        %4281 = vmatpush1.bf16.xpose.msra.mxu0 0
        %4282 = vmatprep.subr.bf16.mxu0 0
        %4283 = vmatpush1.bf16.xpose.msra.mxu0 0
        %4284 = vmatprep.subr.bf16.mxu0 0
        %4285 = vmatpush1.bf16.xpose.msra.mxu0 0
        %4286 = vmatprep.subr.bf16.mxu0 0
        %4287 = vmatpush1.bf16.xpose.msra.mxu0 0
        %4288 = vmatprep.mubr.bf16.mxu0 0
        %4289 = vmatmul.mubr.bf16.gmra.mrb[0].mxu0 %v4251
        %v4290 = vpop.f32.mrb[0].mxu0
        %v4291 = vadd.f32 0.0, %v4290
        %v4292 = vpop.f32.mrb[0].mxu0
        %v4293 = vpop.f32.mrb[0].mxu0
        %v4294 = vpop.f32.mrb[0].mxu0
        %4295 = vdwg.mxu0
        %v4296 = vmul.f32 %v4291, 0.17677669
        %v4297 = vsel %vm2085, %v4296, -inf
        %4298 = vmax.xlane.f32.xlu0 %v4297
        %v4299 = vpop.xlane.xlu0 %4298
        %v4300 = vsub.f32 %v4296, %v4299
        %v4301 = vmul.f32 %v4300, 1.442695
        %v4302 = vpow.pop %v4301
        %v4303 = vsel %vm2085, %v4302, 0.0
        %4304 = vadd.xlane.f32.xlu0 %v4303
        %v4305 = vpop.xlane.xlu0 %4304
        %v4306 = vrcp.pop %v4305
        %v4307 = vmul.f32 %v4302, %v4306
        %v4308 = vpack.c.bf16 %v4307, %v4307
        %4310 = vrot.lane.b32.xlu0 %v4141, 96
        %v4311 = vpop.permute.xlu0 %4310
        %v4314 = vsel %vm2085, %v4308, 0
        %4316 = vmatprep.subr.bf16.mxu0 0
        %4317 = vmatpush1.bf16.msra.mxu0 %v4311
        %4318 = vmatprep.subr.bf16.mxu0 0
        %4319 = vmatpush1.bf16.msra.mxu0 0
        %4320 = vmatprep.subr.bf16.mxu0 0
        %4321 = vmatpush1.bf16.msra.mxu0 0
        %4322 = vmatprep.subr.bf16.mxu0 0
        %4323 = vmatpush1.bf16.msra.mxu0 0
        %4324 = vmatprep.subr.bf16.mxu0 0
        %4325 = vmatpush1.bf16.msra.mxu0 0
        %4326 = vmatprep.subr.bf16.mxu0 0
        %4327 = vmatpush1.bf16.msra.mxu0 0
        %4328 = vmatprep.subr.bf16.mxu0 0
        %4329 = vmatpush1.bf16.msra.mxu0 0
        %4330 = vmatprep.subr.bf16.mxu0 0
        %4331 = vmatpush1.bf16.msra.mxu0 0
        %4332 = vmatprep.subr.bf16.mxu0 0
        %4333 = vmatpush1.bf16.msra.mxu0 0
        %4334 = vmatprep.subr.bf16.mxu0 0
        %4335 = vmatpush1.bf16.msra.mxu0 0
        %4336 = vmatprep.subr.bf16.mxu0 0
        %4337 = vmatpush1.bf16.msra.mxu0 0
        %4338 = vmatprep.subr.bf16.mxu0 0
        %4339 = vmatpush1.bf16.msra.mxu0 0
        %4340 = vmatprep.subr.bf16.mxu0 0
        %4341 = vmatpush1.bf16.msra.mxu0 0
        %4342 = vmatprep.subr.bf16.mxu0 0
        %4343 = vmatpush1.bf16.msra.mxu0 0
        %4344 = vmatprep.subr.bf16.mxu0 0
        %4345 = vmatpush1.bf16.msra.mxu0 0
        %4346 = vmatprep.subr.bf16.mxu0 0
        %4347 = vmatpush1.bf16.msra.mxu0 0
        %4348 = vmatprep.mubr.bf16.mxu0 0
        %4349 = vmatmul.mubr.bf16.gmra.mrb[0].mxu0 %v4314
        %v4350 = vpop.f32.mrb[0].mxu0
        %v4351 = vadd.f32 0.0, %v4350
        %v4352 = vpop.f32.mrb[0].mxu0
        %v4353 = vpop.f32.mrb[0].mxu0
        %v4354 = vpop.f32.mrb[0].mxu0
        %4355 = vdwg.mxu0
        %4356 = vrot.lane.b32.xlu0 %v4139, 64
        %v4357 = vpop.permute.xlu0 %4356
        %4358 = vrot.lane.b32.xlu0 %v4140, 64
        %v4359 = vpop.permute.xlu0 %4358
        %v4361 = vsel %vm1161, %v4357, 0
        %v4364 = vsel %vm1161, %v4359, 0
        %4366 = vmatprep.subr.bf16.mxu0 0
        %4367 = vmatpush1.bf16.xpose.msra.mxu0 %v4364
        %4368 = vmatprep.subr.bf16.mxu0 0
        %4369 = vmatpush1.bf16.xpose.msra.mxu0 0
        %4370 = vmatprep.subr.bf16.mxu0 0
        %4371 = vmatpush1.bf16.xpose.msra.mxu0 0
        %4372 = vmatprep.subr.bf16.mxu0 0
        %4373 = vmatpush1.bf16.xpose.msra.mxu0 0
        %4374 = vmatprep.subr.bf16.mxu0 0
        %4375 = vmatpush1.bf16.xpose.msra.mxu0 0
        %4376 = vmatprep.subr.bf16.mxu0 0
        %4377 = vmatpush1.bf16.xpose.msra.mxu0 0
        %4378 = vmatprep.subr.bf16.mxu0 0
        %4379 = vmatpush1.bf16.xpose.msra.mxu0 0
        %4380 = vmatprep.subr.bf16.mxu0 0
        %4381 = vmatpush1.bf16.xpose.msra.mxu0 0
        %4382 = vmatprep.subr.bf16.mxu0 0
        %4383 = vmatpush1.bf16.xpose.msra.mxu0 0
        %4384 = vmatprep.subr.bf16.mxu0 0
        %4385 = vmatpush1.bf16.xpose.msra.mxu0 0
        %4386 = vmatprep.subr.bf16.mxu0 0
        %4387 = vmatpush1.bf16.xpose.msra.mxu0 0
        %4388 = vmatprep.subr.bf16.mxu0 0
        %4389 = vmatpush1.bf16.xpose.msra.mxu0 0
        %4390 = vmatprep.subr.bf16.mxu0 0
        %4391 = vmatpush1.bf16.xpose.msra.mxu0 0
        %4392 = vmatprep.subr.bf16.mxu0 0
        %4393 = vmatpush1.bf16.xpose.msra.mxu0 0
        %4394 = vmatprep.subr.bf16.mxu0 0
        %4395 = vmatpush1.bf16.xpose.msra.mxu0 0
        %4396 = vmatprep.subr.bf16.mxu0 0
        %4397 = vmatpush1.bf16.xpose.msra.mxu0 0
        %4398 = vmatprep.mubr.bf16.mxu0 0
        %4399 = vmatmul.mubr.bf16.gmra.mrb[0].mxu0 %v4361
        %v4400 = vpop.f32.mrb[0].mxu0
        %v4401 = vadd.f32 0.0, %v4400
        %v4402 = vpop.f32.mrb[0].mxu0
        %v4403 = vpop.f32.mrb[0].mxu0
        %v4404 = vpop.f32.mrb[0].mxu0
        %4405 = vdwg.mxu0
        %v4406 = vmul.f32 %v4401, 0.17677669
        %v4407 = vsel %vm2085, %v4406, -inf
        %4408 = vmax.xlane.f32.xlu0 %v4407
        %v4409 = vpop.xlane.xlu0 %4408
        %v4410 = vsub.f32 %v4406, %v4409
        %v4411 = vmul.f32 %v4410, 1.442695
        %v4412 = vpow.pop %v4411
        %v4413 = vsel %vm2085, %v4412, 0.0
        %4414 = vadd.xlane.f32.xlu0 %v4413
        %v4415 = vpop.xlane.xlu0 %4414
        %v4416 = vrcp.pop %v4415
        %v4417 = vmul.f32 %v4412, %v4416
        %v4418 = vpack.c.bf16 %v4417, %v4417
        %4419 = vrot.lane.b32.xlu0 %v4141, 64
        %v4420 = vpop.permute.xlu0 %4419
        %v4423 = vsel %vm2085, %v4418, 0
        %4425 = vmatprep.subr.bf16.mxu0 0
        %4426 = vmatpush1.bf16.msra.mxu0 %v4420
        %4427 = vmatprep.subr.bf16.mxu0 0
        %4428 = vmatpush1.bf16.msra.mxu0 0
        %4429 = vmatprep.subr.bf16.mxu0 0
        %4430 = vmatpush1.bf16.msra.mxu0 0
        %4431 = vmatprep.subr.bf16.mxu0 0
        %4432 = vmatpush1.bf16.msra.mxu0 0
        %4433 = vmatprep.subr.bf16.mxu0 0
        %4434 = vmatpush1.bf16.msra.mxu0 0
        %4435 = vmatprep.subr.bf16.mxu0 0
        %4436 = vmatpush1.bf16.msra.mxu0 0
        %4437 = vmatprep.subr.bf16.mxu0 0
        %4438 = vmatpush1.bf16.msra.mxu0 0
        %4439 = vmatprep.subr.bf16.mxu0 0
        %4440 = vmatpush1.bf16.msra.mxu0 0
        %4441 = vmatprep.subr.bf16.mxu0 0
        %4442 = vmatpush1.bf16.msra.mxu0 0
        %4443 = vmatprep.subr.bf16.mxu0 0
        %4444 = vmatpush1.bf16.msra.mxu0 0
        %4445 = vmatprep.subr.bf16.mxu0 0
        %4446 = vmatpush1.bf16.msra.mxu0 0
        %4447 = vmatprep.subr.bf16.mxu0 0
        %4448 = vmatpush1.bf16.msra.mxu0 0
        %4449 = vmatprep.subr.bf16.mxu0 0
        %4450 = vmatpush1.bf16.msra.mxu0 0
        %4451 = vmatprep.subr.bf16.mxu0 0
        %4452 = vmatpush1.bf16.msra.mxu0 0
        %4453 = vmatprep.subr.bf16.mxu0 0
        %4454 = vmatpush1.bf16.msra.mxu0 0
        %4455 = vmatprep.subr.bf16.mxu0 0
        %4456 = vmatpush1.bf16.msra.mxu0 0
        %4457 = vmatprep.mubr.bf16.mxu0 0
        %4458 = vmatmul.mubr.bf16.gmra.mrb[0].mxu0 %v4423
        %v4459 = vpop.f32.mrb[0].mxu0
        %v4460 = vadd.f32 0.0, %v4459
        %v4461 = vpop.f32.mrb[0].mxu0
        %v4462 = vpop.f32.mrb[0].mxu0
        %v4463 = vpop.f32.mrb[0].mxu0
        %4464 = vdwg.mxu0
        %4465 = vrot.lane.b32.xlu0 %v4139, 32
        %v4466 = vpop.permute.xlu0 %4465
        %4467 = vrot.lane.b32.xlu0 %v4140, 32
        %v4468 = vpop.permute.xlu0 %4467
        %v4470 = vsel %vm1161, %v4466, 0
        %v4473 = vsel %vm1161, %v4468, 0
        %4475 = vmatprep.subr.bf16.mxu0 0
        %4476 = vmatpush1.bf16.xpose.msra.mxu0 %v4473
        %4477 = vmatprep.subr.bf16.mxu0 0
        %4478 = vmatpush1.bf16.xpose.msra.mxu0 0
        %4479 = vmatprep.subr.bf16.mxu0 0
        %4480 = vmatpush1.bf16.xpose.msra.mxu0 0
        %4481 = vmatprep.subr.bf16.mxu0 0
        %4482 = vmatpush1.bf16.xpose.msra.mxu0 0
        %4483 = vmatprep.subr.bf16.mxu0 0
        %4484 = vmatpush1.bf16.xpose.msra.mxu0 0
        %4485 = vmatprep.subr.bf16.mxu0 0
        %4486 = vmatpush1.bf16.xpose.msra.mxu0 0
        %4487 = vmatprep.subr.bf16.mxu0 0
        %4488 = vmatpush1.bf16.xpose.msra.mxu0 0
        %4489 = vmatprep.subr.bf16.mxu0 0
        %4490 = vmatpush1.bf16.xpose.msra.mxu0 0
        %4491 = vmatprep.subr.bf16.mxu0 0
        %4492 = vmatpush1.bf16.xpose.msra.mxu0 0
        %4493 = vmatprep.subr.bf16.mxu0 0
        %4494 = vmatpush1.bf16.xpose.msra.mxu0 0
        %4495 = vmatprep.subr.bf16.mxu0 0
        %4496 = vmatpush1.bf16.xpose.msra.mxu0 0
        %4497 = vmatprep.subr.bf16.mxu0 0
        %4498 = vmatpush1.bf16.xpose.msra.mxu0 0
        %4499 = vmatprep.subr.bf16.mxu0 0
        %4500 = vmatpush1.bf16.xpose.msra.mxu0 0
        %4501 = vmatprep.subr.bf16.mxu0 0
        %4502 = vmatpush1.bf16.xpose.msra.mxu0 0
        %4503 = vmatprep.subr.bf16.mxu0 0
        %4504 = vmatpush1.bf16.xpose.msra.mxu0 0
        %4505 = vmatprep.subr.bf16.mxu0 0
        %4506 = vmatpush1.bf16.xpose.msra.mxu0 0
        %4507 = vmatprep.mubr.bf16.mxu0 0
        %4508 = vmatmul.mubr.bf16.gmra.mrb[0].mxu0 %v4470
        %v4509 = vpop.f32.mrb[0].mxu0
        %v4510 = vadd.f32 0.0, %v4509
        %v4511 = vpop.f32.mrb[0].mxu0
        %v4512 = vpop.f32.mrb[0].mxu0
        %v4513 = vpop.f32.mrb[0].mxu0
        %4514 = vdwg.mxu0
        %v4515 = vmul.f32 %v4510, 0.17677669
        %v4516 = vsel %vm2085, %v4515, -inf
        %4517 = vmax.xlane.f32.xlu0 %v4516
        %v4518 = vpop.xlane.xlu0 %4517
        %v4519 = vsub.f32 %v4515, %v4518
        %v4520 = vmul.f32 %v4519, 1.442695
        %v4521 = vpow.pop %v4520
        %v4522 = vsel %vm2085, %v4521, 0.0
        %4523 = vadd.xlane.f32.xlu0 %v4522
        %v4524 = vpop.xlane.xlu0 %4523
        %v4525 = vrcp.pop %v4524
        %v4526 = vmul.f32 %v4521, %v4525
        %v4527 = vpack.c.bf16 %v4526, %v4526
        %4528 = vrot.lane.b32.xlu0 %v4141, 32
        %v4529 = vpop.permute.xlu0 %4528
        %v4532 = vsel %vm2085, %v4527, 0
        %4534 = vmatprep.subr.bf16.mxu0 0
        %4535 = vmatpush1.bf16.msra.mxu0 %v4529
        %4536 = vmatprep.subr.bf16.mxu0 0
        %4537 = vmatpush1.bf16.msra.mxu0 0
        %4538 = vmatprep.subr.bf16.mxu0 0
        %4539 = vmatpush1.bf16.msra.mxu0 0
        %4540 = vmatprep.subr.bf16.mxu0 0
        %4541 = vmatpush1.bf16.msra.mxu0 0
        %4542 = vmatprep.subr.bf16.mxu0 0
        %4543 = vmatpush1.bf16.msra.mxu0 0
        %4544 = vmatprep.subr.bf16.mxu0 0
        %4545 = vmatpush1.bf16.msra.mxu0 0
        %4546 = vmatprep.subr.bf16.mxu0 0
        %4547 = vmatpush1.bf16.msra.mxu0 0
        %4548 = vmatprep.subr.bf16.mxu0 0
        %4549 = vmatpush1.bf16.msra.mxu0 0
        %4550 = vmatprep.subr.bf16.mxu0 0
        %4551 = vmatpush1.bf16.msra.mxu0 0
        %4552 = vmatprep.subr.bf16.mxu0 0
        %4553 = vmatpush1.bf16.msra.mxu0 0
        %4554 = vmatprep.subr.bf16.mxu0 0
        %4555 = vmatpush1.bf16.msra.mxu0 0
        %4556 = vmatprep.subr.bf16.mxu0 0
        %4557 = vmatpush1.bf16.msra.mxu0 0
        %4558 = vmatprep.subr.bf16.mxu0 0
        %4559 = vmatpush1.bf16.msra.mxu0 0
        %4560 = vmatprep.subr.bf16.mxu0 0
        %4561 = vmatpush1.bf16.msra.mxu0 0
        %4562 = vmatprep.subr.bf16.mxu0 0
        %4563 = vmatpush1.bf16.msra.mxu0 0
        %4564 = vmatprep.subr.bf16.mxu0 0
        %4565 = vmatpush1.bf16.msra.mxu0 0
        %4566 = vmatprep.mubr.bf16.mxu0 0
        %4567 = vmatmul.mubr.bf16.gmra.mrb[0].mxu0 %v4532
        %v4568 = vpop.f32.mrb[0].mxu0
        %v4569 = vadd.f32 0.0, %v4568
        %v4570 = vpop.f32.mrb[0].mxu0
        %v4571 = vpop.f32.mrb[0].mxu0
        %v4572 = vpop.f32.mrb[0].mxu0
        %4573 = vdwg.mxu0
        %4575 = vrot.lane.b32.xlu0 %v4351, 32
        %v4576 = vpop.permute.xlu0 %4575
        %4579 = vrot.lane.b32.xlu0 %v4460, 64
        %v4580 = vpop.permute.xlu0 %4579
        %4583 = vrot.lane.b32.xlu0 %v4569, 96
        %v4584 = vpop.permute.xlu0 %4583
        %v4586 = vsel %vm1161, %v4239, %v4576
        %v4587 = vsel %vm1618, %v4586, %v4580
        %v4588 = vsel %vm1620, %v4587, %v4584
        %s4589 = scalar_lea.vmem [#allocation14], 64
        %v4590 = vld [vmem:[%s4589] sm:$0xf]
        %v4591 = vld [vmem:[%s4589 + $0x4] sm:$0xf]
        %v4592 = vld [vmem:[%s4589 + $0x8] sm:$0xf]
        %v4593 = vld [vmem:[%s4589 + $0xc] sm:$0xf]
        %v4594 = vld [vmem:[%s4589 + $0x10] sm:$0xf]
        %v4595 = vld [vmem:[%s4589 + $0x14] sm:$0xf]
        %v4596 = vld [vmem:[%s4589 + $0x18] sm:$0xf]
        %v4597 = vld [vmem:[%s4589 + $0x1c] sm:$0xf]
        %v4598 = vld [vmem:[%s4589 + $0x20] sm:$0xf]
        %v4599 = vld [vmem:[%s4589 + $0x24] sm:$0xf]
        %v4600 = vld [vmem:[%s4589 + $0x28] sm:$0xf]
        %v4601 = vld [vmem:[%s4589 + $0x2c] sm:$0xf]
        %v4602 = vld [vmem:[%s4589 + $0x30] sm:$0xf]
        %v4603 = vld [vmem:[%s4589 + $0x34] sm:$0xf]
        %v4604 = vld [vmem:[%s4589 + $0x38] sm:$0xf]
        %v4605 = vld [vmem:[%s4589 + $0x3c] sm:$0xf]
        %s4606 = scalar_lea.vmem [#allocation16], 1
        %v4607 = vld [vmem:[%s4606] sm:$0x1]
        %v4608 = vpack.c.bf16 %v4588, %v4588
        %v4610 = vlaneseq
        %v4611 = vshrl.u32 %v4610, 7
        %v4612 = vsub.s32 0, %v4611
        %v4613 = vrot.slane %v4607, %v4612
        %v4631 = vunpack.c.l.b16 %v4590
        %v4632 = vunpack.c.l.b16 %v4591
        %v4633 = vunpack.c.l.b16 %v4592
        %v4634 = vunpack.c.l.b16 %v4593
        %v4635 = vunpack.c.l.b16 %v4594
        %v4636 = vunpack.c.l.b16 %v4595
        %v4637 = vunpack.c.l.b16 %v4596
        %v4638 = vunpack.c.l.b16 %v4597
        %v4639 = vunpack.c.l.b16 %v4598
        %v4640 = vunpack.c.l.b16 %v4599
        %v4641 = vunpack.c.l.b16 %v4600
        %v4642 = vunpack.c.l.b16 %v4601
        %v4643 = vunpack.c.l.b16 %v4602
        %v4644 = vunpack.c.l.b16 %v4603
        %v4645 = vunpack.c.l.b16 %v4604
        %v4646 = vunpack.c.l.b16 %v4605
        %v4647 = vpack.c.b16 %v4632, %v4631
        %v4648 = vpack.c.b16 %v4634, %v4633
        %v4649 = vpack.c.b16 %v4636, %v4635
        %v4650 = vpack.c.b16 %v4638, %v4637
        %v4651 = vpack.c.b16 %v4640, %v4639
        %v4652 = vpack.c.b16 %v4642, %v4641
        %v4653 = vpack.c.b16 %v4644, %v4643
        %v4654 = vpack.c.b16 %v4646, %v4645
        %4663 = vmatprep.subr.bf16.mxu0 0
        %4664 = vmatpush1.bf16.msra.mxu0 %v4647
        %4665 = vmatprep.subr.bf16.mxu0 0
        %4666 = vmatpush1.bf16.msra.mxu0 %v4648
        %4667 = vmatprep.subr.bf16.mxu0 0
        %4668 = vmatpush1.bf16.msra.mxu0 %v4649
        %4669 = vmatprep.subr.bf16.mxu0 0
        %4670 = vmatpush1.bf16.msra.mxu0 %v4650
        %4671 = vmatprep.subr.bf16.mxu0 0
        %4672 = vmatpush1.bf16.msra.mxu0 %v4651
        %4673 = vmatprep.subr.bf16.mxu0 0
        %4674 = vmatpush1.bf16.msra.mxu0 %v4652
        %4675 = vmatprep.subr.bf16.mxu0 0
        %4676 = vmatpush1.bf16.msra.mxu0 %v4653
        %4677 = vmatprep.subr.bf16.mxu0 0
        %4678 = vmatpush1.bf16.msra.mxu0 %v4654
        %4679 = vmatprep.subr.bf16.mxu0 0
        %4680 = vmatpush1.bf16.msra.mxu0 0
        %4681 = vmatprep.subr.bf16.mxu0 0
        %4682 = vmatpush1.bf16.msra.mxu0 0
        %4683 = vmatprep.subr.bf16.mxu0 0
        %4684 = vmatpush1.bf16.msra.mxu0 0
        %4685 = vmatprep.subr.bf16.mxu0 0
        %4686 = vmatpush1.bf16.msra.mxu0 0
        %4687 = vmatprep.subr.bf16.mxu0 0
        %4688 = vmatpush1.bf16.msra.mxu0 0
        %4689 = vmatprep.subr.bf16.mxu0 0
        %4690 = vmatpush1.bf16.msra.mxu0 0
        %4691 = vmatprep.subr.bf16.mxu0 0
        %4692 = vmatpush1.bf16.msra.mxu0 0
        %4693 = vmatprep.subr.bf16.mxu0 0
        %4694 = vmatpush1.bf16.msra.mxu0 0
        %4695 = vmatprep.mubr.bf16.mxu0 0
        %4696 = vmatmul.mubr.bf16.gmra.mrb[0].mxu0 %v4608
        %v4697 = vpop.f32.mrb[0].mxu0
        %v4698 = vadd.f32 %v4613, %v4697
        %v4699 = vpop.f32.mrb[0].mxu0
        %v4700 = vpop.f32.mrb[0].mxu0
        %v4701 = vpop.f32.mrb[0].mxu0
        %4702 = vdwg.mxu0
        %v4703 = vadd.f32 %v3835, %v4698
        %s4704 = scalar_lea.vmem %s2, 5
        %v4705 = vld [vmem:[%s4704] sm:$0x1]
        %s4706 = scalar_lea.vmem %s3, 5
        %v4707 = vld [vmem:[%s4706] sm:$0x1]
        %4708 = vadd.xlane.f32.xlu0 %v4703
        %v4709 = vpop.xlane.xlu0 %4708
        %v4710 = vmul.f32 %v4709, %v867
        %v4711 = vsub.f32 %v4703, %v4710
        %v4712 = vmul.f32 %v4711, %v4711
        %4713 = vadd.xlane.f32.xlu0 %v4712
        %v4714 = vpop.xlane.xlu0 %4713
        %v4715 = vmul.f32 %v4714, %v873
        %v4716 = vrsqrt.pop %v4715
        %v4717 = vmul.f32 %v4715, %v4716
        %vm4718 = vcmp.eq.f32.partialorder %v4715, inf
        %v4719 = vsel %vm4718, %v4715, %v4717
        %vm4720 = vcmp.eq.f32.partialorder %v4715, 0.0
        %v4721 = vand.u32 %v4715, 2147483648
        %v4722 = vsel %vm4720, %v4721, %v4719
        %v4724 = vlaneseq
        %v4725 = vshrl.u32 %v4724, 7
        %v4726 = vsub.s32 0, %v4725
        %v4727 = vrot.slane %v4705, %v4726
        %v4729 = vmul.f32 %v4727, %v4711
        %v4730 = vadd.f32 %v4722, 1e-06
        %v4731 = vrcp.pop %v4730
        %v4732 = vmul.f32 %v4729, %v4731
        %v4734 = vlaneseq
        %v4735 = vshrl.u32 %v4734, 7
        %v4736 = vsub.s32 0, %v4735
        %v4737 = vrot.slane %v4707, %v4736
        %v4739 = vadd.f32 %v4732, %v4737
        %s4740 = scalar_lea.vmem [#allocation17], 128
        %v4741 = vld [vmem:[%s4740] sm:$0xff]
        %v4742 = vld [vmem:[%s4740 + $0x8] sm:$0xff]
        %v4743 = vld [vmem:[%s4740 + $0x10] sm:$0xff]
        %v4744 = vld [vmem:[%s4740 + $0x18] sm:$0xff]
        %v4745 = vld [vmem:[%s4740 + $0x20] sm:$0xff]
        %v4746 = vld [vmem:[%s4740 + $0x28] sm:$0xff]
        %v4747 = vld [vmem:[%s4740 + $0x30] sm:$0xff]
        %v4748 = vld [vmem:[%s4740 + $0x38] sm:$0xff]
        %v4749 = vld [vmem:[%s4740 + $0x40] sm:$0xff]
        %v4750 = vld [vmem:[%s4740 + $0x48] sm:$0xff]
        %v4751 = vld [vmem:[%s4740 + $0x50] sm:$0xff]
        %v4752 = vld [vmem:[%s4740 + $0x58] sm:$0xff]
        %v4753 = vld [vmem:[%s4740 + $0x60] sm:$0xff]
        %v4754 = vld [vmem:[%s4740 + $0x68] sm:$0xff]
        %v4755 = vld [vmem:[%s4740 + $0x70] sm:$0xff]
        %v4756 = vld [vmem:[%s4740 + $0x78] sm:$0xff]
        %s4757 = scalar_lea.vmem [#allocation19], 2
        %v4758 = vld [vmem:[%s4757] sm:$0x3]
        %v4759 = vpack.c.bf16 %v4739, %v4739
        %v4761 = vlaneseq
        %v4762 = vshrl.u32 %v4761, 7
        %v4763 = vsub.s32 0, %v4762
        %v4764 = vrot.slane %v4758, %v4763
        %v4765 = vlaneseq
        %v4766 = vshrl.u32 %v4765, 7
        %v4767 = vsub.s32 1, %v4766
        %v4768 = vrot.slane %v4758, %v4767
        %v4787 = vunpack.c.l.b16 %v4741
        %v4788 = vunpack.c.h.b16 %v4741
        %v4789 = vunpack.c.l.b16 %v4742
        %v4790 = vunpack.c.h.b16 %v4742
        %v4791 = vunpack.c.l.b16 %v4743
        %v4792 = vunpack.c.h.b16 %v4743
        %v4793 = vunpack.c.l.b16 %v4744
        %v4794 = vunpack.c.h.b16 %v4744
        %v4795 = vunpack.c.l.b16 %v4745
        %v4796 = vunpack.c.h.b16 %v4745
        %v4797 = vunpack.c.l.b16 %v4746
        %v4798 = vunpack.c.h.b16 %v4746
        %v4799 = vunpack.c.l.b16 %v4747
        %v4800 = vunpack.c.h.b16 %v4747
        %v4801 = vunpack.c.l.b16 %v4748
        %v4802 = vunpack.c.h.b16 %v4748
        %v4803 = vunpack.c.l.b16 %v4749
        %v4804 = vunpack.c.h.b16 %v4749
        %v4805 = vunpack.c.l.b16 %v4750
        %v4806 = vunpack.c.h.b16 %v4750
        %v4807 = vunpack.c.l.b16 %v4751
        %v4808 = vunpack.c.h.b16 %v4751
        %v4809 = vunpack.c.l.b16 %v4752
        %v4810 = vunpack.c.h.b16 %v4752
        %v4811 = vunpack.c.l.b16 %v4753
        %v4812 = vunpack.c.h.b16 %v4753
        %v4813 = vunpack.c.l.b16 %v4754
        %v4814 = vunpack.c.h.b16 %v4754
        %v4815 = vunpack.c.l.b16 %v4755
        %v4816 = vunpack.c.h.b16 %v4755
        %v4817 = vunpack.c.l.b16 %v4756
        %v4818 = vunpack.c.h.b16 %v4756
        %v4819 = vpack.c.b16 %v4789, %v4787
        %v4820 = vpack.c.b16 %v4790, %v4788
        %v4821 = vpack.c.b16 %v4793, %v4791
        %v4822 = vpack.c.b16 %v4794, %v4792
        %v4823 = vpack.c.b16 %v4797, %v4795
        %v4824 = vpack.c.b16 %v4798, %v4796
        %v4825 = vpack.c.b16 %v4801, %v4799
        %v4826 = vpack.c.b16 %v4802, %v4800
        %v4827 = vpack.c.b16 %v4805, %v4803
        %v4828 = vpack.c.b16 %v4806, %v4804
        %v4829 = vpack.c.b16 %v4809, %v4807
        %v4830 = vpack.c.b16 %v4810, %v4808
        %v4831 = vpack.c.b16 %v4813, %v4811
        %v4832 = vpack.c.b16 %v4814, %v4812
        %v4833 = vpack.c.b16 %v4817, %v4815
        %v4834 = vpack.c.b16 %v4818, %v4816
        %4851 = vmatprep.subr.bf16.mxu0 %v4820
        %4852 = vmatpush1.bf16.msra.mxu0 %v4819
        %4853 = vmatprep.subr.bf16.mxu0 %v4822
        %4854 = vmatpush1.bf16.msra.mxu0 %v4821
        %4855 = vmatprep.subr.bf16.mxu0 %v4824
        %4856 = vmatpush1.bf16.msra.mxu0 %v4823
        %4857 = vmatprep.subr.bf16.mxu0 %v4826
        %4858 = vmatpush1.bf16.msra.mxu0 %v4825
        %4859 = vmatprep.subr.bf16.mxu0 %v4828
        %4860 = vmatpush1.bf16.msra.mxu0 %v4827
        %4861 = vmatprep.subr.bf16.mxu0 %v4830
        %4862 = vmatpush1.bf16.msra.mxu0 %v4829
        %4863 = vmatprep.subr.bf16.mxu0 %v4832
        %4864 = vmatpush1.bf16.msra.mxu0 %v4831
        %4865 = vmatprep.subr.bf16.mxu0 %v4834
        %4866 = vmatpush1.bf16.msra.mxu0 %v4833
        %4867 = vmatprep.subr.bf16.mxu0 0
        %4868 = vmatpush1.bf16.msra.mxu0 0
        %4869 = vmatprep.subr.bf16.mxu0 0
        %4870 = vmatpush1.bf16.msra.mxu0 0
        %4871 = vmatprep.subr.bf16.mxu0 0
        %4872 = vmatpush1.bf16.msra.mxu0 0
        %4873 = vmatprep.subr.bf16.mxu0 0
        %4874 = vmatpush1.bf16.msra.mxu0 0
        %4875 = vmatprep.subr.bf16.mxu0 0
        %4876 = vmatpush1.bf16.msra.mxu0 0
        %4877 = vmatprep.subr.bf16.mxu0 0
        %4878 = vmatpush1.bf16.msra.mxu0 0
        %4879 = vmatprep.subr.bf16.mxu0 0
        %4880 = vmatpush1.bf16.msra.mxu0 0
        %4881 = vmatprep.subr.bf16.mxu0 0
        %4882 = vmatpush1.bf16.msra.mxu0 0
        %4883 = vmatprep.mubr.bf16.mxu0 0
        %4884 = vmatmul.mubr.bf16.gmra.mrb[0].mxu0 %v4759
        %v4885 = vpop.f32.mrb[0].mxu0
        %v4886 = vadd.f32 %v4764, %v4885
        %v4887 = vpop.f32.mrb[0].mxu0
        %v4888 = vadd.f32 %v4768, %v4887
        %v4889 = vpop.f32.mrb[0].mxu0
        %v4890 = vpop.f32.mrb[0].mxu0
        %4891 = vdwg.mxu0
        %v4892 = vmax.f32 %v4886, 0.0
        %v4893 = vmax.f32 %v4888, 0.0
        %s4894 = scalar_lea.vmem [#allocation20], 128
        %v4895 = vld [vmem:[%s4894] sm:$0xf]
        %v4896 = vld [vmem:[%s4894 + $0x4] sm:$0xf]
        %v4897 = vld [vmem:[%s4894 + $0x8] sm:$0xf]
        %v4898 = vld [vmem:[%s4894 + $0xc] sm:$0xf]
        %v4899 = vld [vmem:[%s4894 + $0x10] sm:$0xf]
        %v4900 = vld [vmem:[%s4894 + $0x14] sm:$0xf]
        %v4901 = vld [vmem:[%s4894 + $0x18] sm:$0xf]
        %v4902 = vld [vmem:[%s4894 + $0x1c] sm:$0xf]
        %v4903 = vld [vmem:[%s4894 + $0x20] sm:$0xf]
        %v4904 = vld [vmem:[%s4894 + $0x24] sm:$0xf]
        %v4905 = vld [vmem:[%s4894 + $0x28] sm:$0xf]
        %v4906 = vld [vmem:[%s4894 + $0x2c] sm:$0xf]
        %v4907 = vld [vmem:[%s4894 + $0x30] sm:$0xf]
        %v4908 = vld [vmem:[%s4894 + $0x34] sm:$0xf]
        %v4909 = vld [vmem:[%s4894 + $0x38] sm:$0xf]
        %v4910 = vld [vmem:[%s4894 + $0x3c] sm:$0xf]
        %v4911 = vld [vmem:[%s4894 + $0x40] sm:$0xf]
        %v4912 = vld [vmem:[%s4894 + $0x44] sm:$0xf]
        %v4913 = vld [vmem:[%s4894 + $0x48] sm:$0xf]
        %v4914 = vld [vmem:[%s4894 + $0x4c] sm:$0xf]
        %v4915 = vld [vmem:[%s4894 + $0x50] sm:$0xf]
        %v4916 = vld [vmem:[%s4894 + $0x54] sm:$0xf]
        %v4917 = vld [vmem:[%s4894 + $0x58] sm:$0xf]
        %v4918 = vld [vmem:[%s4894 + $0x5c] sm:$0xf]
        %v4919 = vld [vmem:[%s4894 + $0x60] sm:$0xf]
        %v4920 = vld [vmem:[%s4894 + $0x64] sm:$0xf]
        %v4921 = vld [vmem:[%s4894 + $0x68] sm:$0xf]
        %v4922 = vld [vmem:[%s4894 + $0x6c] sm:$0xf]
        %v4923 = vld [vmem:[%s4894 + $0x70] sm:$0xf]
        %v4924 = vld [vmem:[%s4894 + $0x74] sm:$0xf]
        %v4925 = vld [vmem:[%s4894 + $0x78] sm:$0xf]
        %v4926 = vld [vmem:[%s4894 + $0x7c] sm:$0xf]
        %s4927 = scalar_lea.vmem [#allocation22], 1
        %v4928 = vld [vmem:[%s4927] sm:$0x1]
        %v4929 = vpack.c.bf16 %v4892, %v4892
        %v4930 = vpack.c.bf16 %v4893, %v4893
        %v4932 = vlaneseq
        %v4933 = vshrl.u32 %v4932, 7
        %v4934 = vsub.s32 0, %v4933
        %v4935 = vrot.slane %v4928, %v4934
        %v4969 = vunpack.c.l.b16 %v4895
        %v4970 = vunpack.c.l.b16 %v4896
        %v4971 = vunpack.c.l.b16 %v4897
        %v4972 = vunpack.c.l.b16 %v4898
        %v4973 = vunpack.c.l.b16 %v4899
        %v4974 = vunpack.c.l.b16 %v4900
        %v4975 = vunpack.c.l.b16 %v4901
        %v4976 = vunpack.c.l.b16 %v4902
        %v4977 = vunpack.c.l.b16 %v4903
        %v4978 = vunpack.c.l.b16 %v4904
        %v4979 = vunpack.c.l.b16 %v4905
        %v4980 = vunpack.c.l.b16 %v4906
        %v4981 = vunpack.c.l.b16 %v4907
        %v4982 = vunpack.c.l.b16 %v4908
        %v4983 = vunpack.c.l.b16 %v4909
        %v4984 = vunpack.c.l.b16 %v4910
        %v4985 = vunpack.c.l.b16 %v4911
        %v4986 = vunpack.c.l.b16 %v4912
        %v4987 = vunpack.c.l.b16 %v4913
        %v4988 = vunpack.c.l.b16 %v4914
        %v4989 = vunpack.c.l.b16 %v4915
        %v4990 = vunpack.c.l.b16 %v4916
        %v4991 = vunpack.c.l.b16 %v4917
        %v4992 = vunpack.c.l.b16 %v4918
        %v4993 = vunpack.c.l.b16 %v4919
        %v4994 = vunpack.c.l.b16 %v4920
        %v4995 = vunpack.c.l.b16 %v4921
        %v4996 = vunpack.c.l.b16 %v4922
        %v4997 = vunpack.c.l.b16 %v4923
        %v4998 = vunpack.c.l.b16 %v4924
        %v4999 = vunpack.c.l.b16 %v4925
        %v5000 = vunpack.c.l.b16 %v4926
        %v5001 = vpack.c.b16 %v4970, %v4969
        %v5002 = vpack.c.b16 %v4972, %v4971
        %v5003 = vpack.c.b16 %v4974, %v4973
        %v5004 = vpack.c.b16 %v4976, %v4975
        %v5005 = vpack.c.b16 %v4978, %v4977
        %v5006 = vpack.c.b16 %v4980, %v4979
        %v5007 = vpack.c.b16 %v4982, %v4981
        %v5008 = vpack.c.b16 %v4984, %v4983
        %v5009 = vpack.c.b16 %v4986, %v4985
        %v5010 = vpack.c.b16 %v4988, %v4987
        %v5011 = vpack.c.b16 %v4990, %v4989
        %v5012 = vpack.c.b16 %v4992, %v4991
        %v5013 = vpack.c.b16 %v4994, %v4993
        %v5014 = vpack.c.b16 %v4996, %v4995
        %v5015 = vpack.c.b16 %v4998, %v4997
        %v5016 = vpack.c.b16 %v5000, %v4999
        %5033 = vmatprep.subr.bf16.mxu0 0
        %5034 = vmatpush1.bf16.msra.mxu0 %v5001
        %5035 = vmatprep.subr.bf16.mxu0 0
        %5036 = vmatpush1.bf16.msra.mxu0 %v5002
        %5037 = vmatprep.subr.bf16.mxu0 0
        %5038 = vmatpush1.bf16.msra.mxu0 %v5003
        %5039 = vmatprep.subr.bf16.mxu0 0
        %5040 = vmatpush1.bf16.msra.mxu0 %v5004
        %5041 = vmatprep.subr.bf16.mxu0 0
        %5042 = vmatpush1.bf16.msra.mxu0 %v5005
        %5043 = vmatprep.subr.bf16.mxu0 0
        %5044 = vmatpush1.bf16.msra.mxu0 %v5006
        %5045 = vmatprep.subr.bf16.mxu0 0
        %5046 = vmatpush1.bf16.msra.mxu0 %v5007
        %5047 = vmatprep.subr.bf16.mxu0 0
        %5048 = vmatpush1.bf16.msra.mxu0 %v5008
        %5049 = vmatprep.subr.bf16.mxu0 0
        %5050 = vmatpush1.bf16.msra.mxu0 %v5009
        %5051 = vmatprep.subr.bf16.mxu0 0
        %5052 = vmatpush1.bf16.msra.mxu0 %v5010
        %5053 = vmatprep.subr.bf16.mxu0 0
        %5054 = vmatpush1.bf16.msra.mxu0 %v5011
        %5055 = vmatprep.subr.bf16.mxu0 0
        %5056 = vmatpush1.bf16.msra.mxu0 %v5012
        %5057 = vmatprep.subr.bf16.mxu0 0
        %5058 = vmatpush1.bf16.msra.mxu0 %v5013
        %5059 = vmatprep.subr.bf16.mxu0 0
        %5060 = vmatpush1.bf16.msra.mxu0 %v5014
        %5061 = vmatprep.subr.bf16.mxu0 0
        %5062 = vmatpush1.bf16.msra.mxu0 %v5015
        %5063 = vmatprep.subr.bf16.mxu0 0
        %5064 = vmatpush1.bf16.msra.mxu0 %v5016
        %5065 = vmatprep.mubr.bf16.mxu0 %v4930
        %5066 = vmatmul.mubr.bf16.gmra.mrb[0].mxu0 %v4929
        %v5067 = vpop.f32.mrb[0].mxu0
        %v5068 = vadd.f32 %v4935, %v5067
        %v5069 = vpop.f32.mrb[0].mxu0
        %v5070 = vpop.f32.mrb[0].mxu0
        %v5071 = vpop.f32.mrb[0].mxu0
        %5072 = vdwg.mxu0
        %v5073 = vadd.f32 %v4703, %v5068
        %v5074 = vld [vmem:[#allocation23] sm:$0x1]
        %v5075 = vld [vmem:[#allocation25] sm:$0x1]
        %5076 = vadd.xlane.f32.xlu0 %v5073
        %v5077 = vpop.xlane.xlu0 %5076
        %v5078 = vmul.f32 %v5077, %v867
        %v5079 = vsub.f32 %v5073, %v5078
        %v5080 = vmul.f32 %v5079, %v5079
        %5081 = vadd.xlane.f32.xlu0 %v5080
        %v5082 = vpop.xlane.xlu0 %5081
        %v5083 = vmul.f32 %v5082, %v873
        %v5084 = vrsqrt.pop %v5083
        %v5085 = vmul.f32 %v5083, %v5084
        %vm5086 = vcmp.eq.f32.partialorder %v5083, inf
        %v5087 = vsel %vm5086, %v5083, %v5085
        %vm5088 = vcmp.eq.f32.partialorder %v5083, 0.0
        %v5089 = vand.u32 %v5083, 2147483648
        %v5090 = vsel %vm5088, %v5089, %v5087
        %v5092 = vlaneseq
        %v5093 = vshrl.u32 %v5092, 7
        %v5094 = vsub.s32 0, %v5093
        %v5095 = vrot.slane %v5074, %v5094
        %v5097 = vmul.f32 %v5095, %v5079
        %v5098 = vadd.f32 %v5090, 1e-06
        %v5099 = vrcp.pop %v5098
        %v5100 = vmul.f32 %v5097, %v5099
        %v5102 = vlaneseq
        %v5103 = vshrl.u32 %v5102, 7
        %v5104 = vsub.s32 0, %v5103
        %v5105 = vrot.slane %v5075, %v5104
        %v5107 = vadd.f32 %v5100, %v5105
        %5108 = vst [vmem:[%s849] sm:$0xff] %v5107
        %s5109 = sand.u32 %s480, 1
        %s5110 = scalar_lea.sflag [#allocation4], %s5109
        %s5111 = sand.u32 %s480, 1
        %s5112 = smul.addr %s5111, 8
        %s5113 = scalar_lea.vmem [#allocation26], %s5112
        // Predicated region
        $region161: #{attention_submodel_forward.1} parent=99 // pred_check
          %p5114 = pneg %p490
        $region162: #{attention_submodel_forward.1} parent=99 // pred_check_branch
          %5116 = sbr.rel (%p5114) target = $region164
        $region163: #{attention_submodel_forward.1} parent=99 // pred_region
          %s5118 = ssub.s32 128, 128
          %5119 = vsyncadd %s5110, %s5118
          %s5120 = smul.addr %s42, 128
          %s5121 = scalar_lea.hbm %s20, %s5120
          %s5123 = sshll.u32 %s5113, 4
          %s5124 = int_to_ptr.vmem [resolvable:$true] %s5123
          %5126 = dma.vmem_to_hbm [thread:$0]  %s5124, 128, %s5121, %s5110
        $region164: #{attention_submodel_forward.1} parent=99 // pred_fallthru
          _
      $region100: #{attention_submodel_forward.1} parent=5 // pred_fallthru
        _
      %p5127 = scmp.le.s32.totalorder 2, %s37
      // Predicated region
      $region165: #{attention_submodel_forward.1} parent=5 // pred_check
        %p5128 = pneg %p5127
      $region166: #{attention_submodel_forward.1} parent=5 // pred_check_branch
        %5130 = sbr.rel (%p5128) target = $region168
      $region167: #{attention_submodel_forward.1} parent=5 // pred_region
        %s5131 = ssub.s32 %s37, 2
        // Predicated region
        $region169: #{attention_submodel_forward.1} parent=167 // pred_check
          %p5132 = pneg %p496
        $region170: #{attention_submodel_forward.1} parent=167 // pred_check_branch
          %5134 = sbr.rel (%p5132) target = $region172
        $region171: #{attention_submodel_forward.1} parent=167 // pred_region
          %s5135 = sand.u32 %s481, 1
          %s5136 = scalar_lea.sflag [#allocation4], %s5135
          %s5137 = sand.u32 %s481, 1
          %s5138 = smul.addr %s5137, 8
          %s5139 = scalar_lea.vmem [#allocation26], %s5138
          %5140 = dma.done %s5136, 128
        $region172: #{attention_submodel_forward.1} parent=167 // pred_fallthru
          _
      $region168: #{attention_submodel_forward.1} parent=5 // pred_fallthru
        _
    $region6: #{attention_submodel_forward.1} parent=1 // loop_footer
      %s41 = sadd.s32 1, %s37
    $region7: #{attention_submodel_forward.1} parent=1 // loop_footer_branch
      %36 = sbr.rel target = $region3
    $region8: #{attention_submodel_forward.1} parent=1 // loop_exit
      _
    %5141 = vsyncpa [#allocation3], 1
    %s5142 = scalar_lea.sflag [#allocation3], 1
    %5143 = vsyncpa %s5142, 1
    %5144 = vsyncpa [#allocation6], 1
    %5145 = vsyncpa [#allocation9], 1
    %5146 = vsyncpa [#allocation12], 1
    %5147 = vsyncpa [#allocation15], 1
    %5148 = vsyncpa [#allocation18], 1
    %5149 = vsyncpa [#allocation21], 1
    %5150 = vsyncpa [#allocation24], 1
    %5151 = vsyncpa [#allocation4], 1
    %s5152 = scalar_lea.sflag [#allocation4], 1
    %5153 = vsyncpa %s5152, 1

</llo_original>
